<compile_context>
chip_gen: v6e
topology: v6e:2x2x1
jax: 0.10.0
libtpu: 0.0.40
codegen_flags: <defaults>
</compile_context>

<pallas_src>
import math
import jax
import jax.numpy as jnp
from jax.experimental import pallas as pl
from jax.experimental.pallas import tpu as pltpu

D = 105 * 80          # 8400 input features (flattened Pong frame)
HIDDEN = 50
N_ACTIONS = 6         # Pong-v3 action space size
LANE = 128            # lane-dense width for W2 / output
NEG_PAD = -1e30       # bias for padded action columns -> exp underflows to 0.0


def _round_up(n, m):
    return ((n + m - 1) // m) * m


def _pick_tb_max():
    """Batch-tile upper bound, sized to this generation's VMEM."""
    try:
        vmem_bytes = pltpu.get_tpu_info().vmem_capacity_bytes
    except Exception:
        vmem_bytes = 64 << 20          # assume the smallest (v7x per-TC)
    return 512 if vmem_bytes >= (96 << 20) else 256


def policy_kernel(x_ref, w1_ref, b1_ref, w2_ref, b2_ref, out_ref):
    # x tile arrives as f32; cast to bf16 here (VPU work hidden under the next
    # tile's DMA) so the HBM stream is a single 4 B/elem read, no extra pass.
    x = x_ref[...].astype(jnp.bfloat16)                        # (tb, D)
    h = jnp.dot(x, w1_ref[...],
                preferred_element_type=jnp.float32)            # (tb, 50) f32
    h = jnp.maximum(h + b1_ref[...], 0.0)                      # bias + ReLU

    # Second matmul is tiny: keep it in f32.  W2/b2 are lane-padded to 128;
    # padded columns have zero weights and a -1e30 bias.
    s = jnp.dot(h, w2_ref[...],
                preferred_element_type=jnp.float32) + b2_ref[...]   # (tb, 128)

    # Numerically stable, exactly normalized softmax.  Padded columns
    # underflow to exactly 0, so softmax over 128 lanes == softmax over the
    # 6 real actions.
    s = s - jnp.max(s, axis=-1, keepdims=True)
    e = jnp.exp(s)
    out_ref[...] = e / jnp.sum(e, axis=-1, keepdims=True)


def policy_forward(x, w1_bf, b1, w2_p, b2_p, *, tb_max=None):
    B = x.shape[0]
    if tb_max is None:
        tb_max = _pick_tb_max()

    # >= 2 tiles once B is large enough so the "parallel" batch axis can be
    # split across v7x's two TensorCores; padding waste capped at <8 rows/tile.
    min_tiles = 2 if B >= 16 else 1
    ntiles = max(pl.cdiv(B, tb_max), min_tiles)
    tb = _round_up(pl.cdiv(B, ntiles), 8)
    Bp = ntiles * tb
    if Bp != B:
        x = jnp.pad(x, ((0, Bp - B), (0, 0)))

    # VMEM: 2x f32 x tiles (double-buffered) + resident weights + headroom.
    vmem_limit = int(max(2 * tb * D * 4 + (12 << 20), 32 << 20))

    out = pl.pallas_call(
        policy_kernel,
        out_shape=jax.ShapeDtypeStruct((Bp, LANE), jnp.float32),
        grid=(ntiles,),
        in_specs=[
            pl.BlockSpec((tb, D), lambda i: (i, 0)),            # x: streamed
            pl.BlockSpec((D, HIDDEN), lambda i: (0, 0)),        # W1 (bf16): resident
            pl.BlockSpec((1, HIDDEN), lambda i: (0, 0)),        # b1: resident
            pl.BlockSpec((HIDDEN, LANE), lambda i: (0, 0)),     # W2 padded: resident
            pl.BlockSpec((1, LANE), lambda i: (0, 0)),          # b2 padded: resident
        ],
        out_specs=pl.BlockSpec((tb, LANE), lambda i: (i, 0)),
        compiler_params=pltpu.CompilerParams(
            dimension_semantics=("parallel",),
            vmem_limit_bytes=vmem_limit,
        ),
    )(x, w1_bf, b1, w2_p, b2_p)

    return out[:B, :N_ACTIONS]


def prepare_params(w1, b1, w2, b2):
    """One-time (outside the hot path) conversion to the kernel's layout.

    W1 -> bf16 (streamed once per call, halves its HBM bytes).
    W2/b2 -> f32 padded to 128 lanes: zero weights and a -1e30 bias in the
    padded action columns so their softmax output is exactly 0.
    """
    w1_bf = w1.astype(jnp.bfloat16)
    w2_p = jnp.zeros((HIDDEN, LANE), jnp.float32).at[:, :N_ACTIONS].set(w2)
    b2_p = jnp.full((1, LANE), NEG_PAD, jnp.float32).at[:, :N_ACTIONS].set(b2)
    return w1_bf, b1.astype(jnp.float32), w2_p, b2_p


def init_params(key):
    """Deterministic init matching the PyTorch module's shapes.

    xavier_normal for weights (std = sqrt(2 / (fan_in + fan_out))),
    PyTorch-default uniform(-1/sqrt(fan_in), 1/sqrt(fan_in)) for biases.
    Weights stored as (in, out) = transpose of nn.Linear.weight.
    """
    k1, k2, k3, k4 = jax.random.split(key, 4)
    std1 = math.sqrt(2.0 / (D + HIDDEN))
    std2 = math.sqrt(2.0 / (HIDDEN + N_ACTIONS))
    w1 = jax.random.normal(k1, (D, HIDDEN), dtype=jnp.float32) * std1
    w2 = jax.random.normal(k2, (HIDDEN, N_ACTIONS), dtype=jnp.float32) * std2
    bnd1 = 1.0 / math.sqrt(D)
    bnd2 = 1.0 / math.sqrt(HIDDEN)
    b1 = jax.random.uniform(k3, (1, HIDDEN), dtype=jnp.float32,
                            minval=-bnd1, maxval=bnd1)
    b2 = jax.random.uniform(k4, (1, N_ACTIONS), dtype=jnp.float32,
                            minval=-bnd2, maxval=bnd2)
    return w1, b1, w2, b2


def policy_ref(x, w1, b1, w2, b2):
    h = jnp.maximum(x @ w1 + b1, 0.0)
    s = h @ w2 + b2
    return jax.nn.softmax(s, axis=-1)


if __name__ == "__main__":
    key = jax.random.PRNGKey(0)
    kx, kp = jax.random.split(key)

    B = 2  # small batch
    x = jax.random.normal(kx, (B, D), dtype=jnp.float32)
    w1, b1, w2, b2 = init_params(kp)

    # One-time weight conversion (outside the per-call hot path).
    params = prepare_params(w1, b1, w2, b2)

    out = policy_forward(x, *params)
    out = jax.block_until_ready(out)

    ref = policy_ref(x, w1, b1, w2, b2)
    assert out.shape == (B, N_ACTIONS)
    # Exact softmax normalization -> rows sum to 1 to f32 rounding.
    assert jnp.allclose(jnp.sum(out, axis=-1), 1.0, atol=1e-5)
    # bf16 x / bf16 W1 over K=8400 vs. pure-f32 reference -> loose tolerance.
    assert jnp.allclose(out, ref, atol=2e-2)

    print("KERNEL_OK")
</pallas_src>

<mosaic_0001>
module attributes {stable_mosaic.version = 11 : i64} {
  func.func @policy_kernel(%arg0: i32, %arg1: memref<8x8400xf32, #tpu.memory_space<vmem>>, %arg2: memref<8400x50xbf16, #tpu.memory_space<vmem>>, %arg3: memref<1x50xf32, #tpu.memory_space<vmem>>, %arg4: memref<50x128xf32, #tpu.memory_space<vmem>>, %arg5: memref<1x128xf32, #tpu.memory_space<vmem>>, %arg6: memref<8x128xf32, #tpu.memory_space<vmem>>) attributes {dimension_semantics = [#tpu.dimension_semantics<parallel>], iteration_bounds = array<i64: 1>, scalar_prefetch = 0 : i64, scratch_operands = 0 : i64, tpu.core_type = #tpu.core_type<tc>, window_params = [{transform_indices = @transform_0, window_bounds = array<i64: 8, 8400>}, {pipeline_mode = #tpu.pipeline_mode<synchronous>, transform_indices = @transform_1, window_bounds = array<i64: 8400, 50>}, {pipeline_mode = #tpu.pipeline_mode<synchronous>, transform_indices = @transform_2, window_bounds = array<i64: 1, 50>}, {pipeline_mode = #tpu.pipeline_mode<synchronous>, transform_indices = @transform_3, window_bounds = array<i64: 50, 128>}, {pipeline_mode = #tpu.pipeline_mode<synchronous>, transform_indices = @transform_4, window_bounds = array<i64: 1, 128>}, {transform_indices = @transform_5, window_bounds = array<i64: 8, 128>}]} {
    %c0 = arith.constant 0 : index
    %c0_0 = arith.constant 0 : index
    %0 = vector.load %arg1[%c0, %c0_0] : memref<8x8400xf32, #tpu.memory_space<vmem>>, vector<8x8400xf32>
    %1 = arith.truncf %0 : vector<8x8400xf32> to vector<8x8400xbf16>
    %c0_1 = arith.constant 0 : index
    %c0_2 = arith.constant 0 : index
    %2 = vector.load %arg2[%c0_1, %c0_2] : memref<8400x50xbf16, #tpu.memory_space<vmem>>, vector<8400x50xbf16>
    %cst = arith.constant dense<0.000000e+00> : vector<8x50xf32>
    %3 = tpu.matmul %1, %2, %cst {dimension_numbers = #tpu.dot_dimension_numbers<[1], [0], [0], [1], [0, 0, 1, 1], [], []>} : vector<8x8400xbf16>, vector<8400x50xbf16>, vector<8x50xf32> -> vector<8x50xf32>
    %c0_3 = arith.constant 0 : index
    %c0_4 = arith.constant 0 : index
    %4 = vector.load %arg3[%c0_3, %c0_4] : memref<1x50xf32, #tpu.memory_space<vmem>>, vector<1x50xf32>
    %5 = vector.broadcast %4 : vector<1x50xf32> to vector<8x50xf32>
    %6 = arith.addf %3, %5 : vector<8x50xf32>
    %cst_5 = arith.constant 0.000000e+00 : f32
    %7 = vector.broadcast %cst_5 : f32 to vector<8x50xf32>
    %8 = arith.maximumf %6, %7 : vector<8x50xf32>
    %c0_6 = arith.constant 0 : index
    %c0_7 = arith.constant 0 : index
    %9 = vector.load %arg4[%c0_6, %c0_7] : memref<50x128xf32, #tpu.memory_space<vmem>>, vector<50x128xf32>
    %cst_8 = arith.constant dense<0.000000e+00> : vector<8x128xf32>
    %10 = tpu.matmul %8, %9, %cst_8 {dimension_numbers = #tpu.dot_dimension_numbers<[1], [0], [0], [1], [0, 0, 1, 1], [], []>} : vector<8x50xf32>, vector<50x128xf32>, vector<8x128xf32> -> vector<8x128xf32>
    %c0_9 = arith.constant 0 : index
    %c0_10 = arith.constant 0 : index
    %11 = vector.load %arg5[%c0_9, %c0_10] : memref<1x128xf32, #tpu.memory_space<vmem>>, vector<1x128xf32>
    %12 = vector.broadcast %11 : vector<1x128xf32> to vector<8x128xf32>
    %13 = arith.addf %10, %12 : vector<8x128xf32>
    %cst_11 = arith.constant dense<0xFF800000> : vector<8xf32>
    %14 = vector.multi_reduction <maximumf>, %13, %cst_11 [1] : vector<8x128xf32> to vector<8xf32>
    %15 = vector.shape_cast %14 : vector<8xf32> to vector<8x1xf32>
    %16 = vector.broadcast %15 : vector<8x1xf32> to vector<8x128xf32>
    %17 = arith.subf %13, %16 : vector<8x128xf32>
    %18 = math.exp %17 : vector<8x128xf32>
    %cst_12 = arith.constant dense<0.000000e+00> : vector<8xf32>
    %19 = vector.multi_reduction <add>, %18, %cst_12 [1] : vector<8x128xf32> to vector<8xf32>
    %20 = vector.shape_cast %19 : vector<8xf32> to vector<8x1xf32>
    %21 = vector.broadcast %20 : vector<8x1xf32> to vector<8x128xf32>
    %22 = arith.divf %18, %21 : vector<8x128xf32>
    %c0_13 = arith.constant 0 : index
    %c0_14 = arith.constant 0 : index
    %23 = vector.load %arg6[%c0_13, %c0_14] : memref<8x128xf32, #tpu.memory_space<vmem>>, vector<8x128xf32>
    tpu.vector_store %arg6[%c0_13, %c0_14], %22 {strides = array<i32>} : memref<8x128xf32, #tpu.memory_space<vmem>>, vector<8x128xf32>,
    return
  }
  func.func @transform_0(%arg0: i32) -> (i32, i32) {
    %c0_i32 = arith.constant 0 : i32
    %c0_i32_0 = arith.constant 0 : i32
    return %arg0, %c0_i32 : i32, i32
  }
  func.func @transform_1(%arg0: i32) -> (i32, i32) {
    %c0_i32 = arith.constant 0 : i32
    %c0_i32_0 = arith.constant 0 : i32
    %c0_i32_1 = arith.constant 0 : i32
    return %c0_i32, %c0_i32_0 : i32, i32
  }
  func.func @transform_2(%arg0: i32) -> (i32, i32) {
    %c0_i32 = arith.constant 0 : i32
    %c0_i32_0 = arith.constant 0 : i32
    %c0_i32_1 = arith.constant 0 : i32
    return %c0_i32, %c0_i32_0 : i32, i32
  }
  func.func @transform_3(%arg0: i32) -> (i32, i32) {
    %c0_i32 = arith.constant 0 : i32
    %c0_i32_0 = arith.constant 0 : i32
    %c0_i32_1 = arith.constant 0 : i32
    return %c0_i32, %c0_i32_0 : i32, i32
  }
  func.func @transform_4(%arg0: i32) -> (i32, i32) {
    %c0_i32 = arith.constant 0 : i32
    %c0_i32_0 = arith.constant 0 : i32
    %c0_i32_1 = arith.constant 0 : i32
    return %c0_i32, %c0_i32_0 : i32, i32
  }
  func.func @transform_5(%arg0: i32) -> (i32, i32) {
    %c0_i32 = arith.constant 0 : i32
    %c0_i32_0 = arith.constant 0 : i32
    return %arg0, %c0_i32 : i32, i32
  }
}

</mosaic_0001>

<llo_original>
// kernel: tpu_custom_call.1
$region0: #{tpu_custom_call.1}
  #allocation0 [shape = 'u32[]', space=smem, size = 0x4, offset = 0x4, fixed_abs, tag = 'smem constant byte address 0x4 - core index']
  #allocation1 [shape = 'u32[144,128]{1,0:T(1,128)}', space=vmem, size = 0x12000, scoped, tag = 'internal scratch']
  %s0 = inlined_call_operand.vmem [shape: f32[8,8400], index: 0, kind: input, shape index: {}]
  %s1 = inlined_call_operand.vmem [shape: bf16[8400,50], index: 1, kind: input, shape index: {}]
  %s2 = inlined_call_operand.vmem [shape: f32[1,50], index: 2, kind: input, shape index: {}]
  %s3 = inlined_call_operand.vmem [shape: f32[50,128], index: 3, kind: input, shape index: {}]
  %s4 = inlined_call_operand.vmem [shape: f32[1,128], index: 4, kind: input, shape index: {}]
  %s5 = inlined_call_operand.hbm [shape: f32[8,128], index: 5, kind: output, shape index: {}]
  %s6 = sld [smem:[#allocation0]]
  $region30: #{tpu_custom_call.1} parent=0
    _
  %s8 = ssub.s32 1, %s6
  %s9 = scalar_select 0, %s8, %s6
  $region1: #{tpu_custom_call.1} parent=0
    #allocation2 [shape = 'u8[4096]{0}', space=vmem, size = 0x1000, scoped, tag = 'output window, operand 0, single buffered']
    #allocation3 [shape = 's32[1]{0}', space=sflag, size = 0x4, scoped, tag = 'scoped memory for tpu_custom_call.1']
    %10 = vsyncpa [#allocation3], 0
    // Predicated region
    $region2: #{tpu_custom_call.1} parent=1 // pred_check
      _
    $region3: #{tpu_custom_call.1} parent=1 // pred_check_branch
      %12 = sbr.rel (0) target = $region5
    $region4: #{tpu_custom_call.1} parent=1 // pred_region
      _
    $region5: #{tpu_custom_call.1} parent=1 // pred_fallthru
      _
    // Predicated region
    $region6: #{tpu_custom_call.1} parent=1 // pred_check
      _
    $region7: #{tpu_custom_call.1} parent=1 // pred_check_branch
      %14 = sbr.rel (0) target = $region9
    $region8: #{tpu_custom_call.1} parent=1 // pred_region
      _
    $region9: #{tpu_custom_call.1} parent=1 // pred_fallthru
      _
    // Predicated region
    $region10: #{tpu_custom_call.1} parent=1 // pred_check
      _
    $region11: #{tpu_custom_call.1} parent=1 // pred_check_branch
      %16 = sbr.rel (0) target = $region13
    $region12: #{tpu_custom_call.1} parent=1 // pred_region
      _
    $region13: #{tpu_custom_call.1} parent=1 // pred_fallthru
      _
    // Predicated region
    $region14: #{tpu_custom_call.1} parent=1 // pred_check
      _
    $region15: #{tpu_custom_call.1} parent=1 // pred_check_branch
      %18 = sbr.rel (0) target = $region17
    $region16: #{tpu_custom_call.1} parent=1 // pred_region
      _
    $region17: #{tpu_custom_call.1} parent=1 // pred_fallthru
      _
    // Predicated region
    $region18: #{tpu_custom_call.1} parent=1 // pred_check
      _
    $region19: #{tpu_custom_call.1} parent=1 // pred_check_branch
      %20 = sbr.rel (0) target = $region21
    $region20: #{tpu_custom_call.1} parent=1 // pred_region
      _
    $region21: #{tpu_custom_call.1} parent=1 // pred_fallthru
      _
    %v22 = vld [vmem:[%s0] sm:$0xff]
    %v23 = vld [vmem:[%s0 + $0x8] sm:$0xff]
    %v24 = vld [vmem:[%s0 + $0x10] sm:$0xff]
    %v25 = vld [vmem:[%s0 + $0x18] sm:$0xff]
    %v26 = vld [vmem:[%s0 + $0x20] sm:$0xff]
    %v27 = vld [vmem:[%s0 + $0x28] sm:$0xff]
    %v28 = vld [vmem:[%s0 + $0x30] sm:$0xff]
    %v29 = vld [vmem:[%s0 + $0x38] sm:$0xff]
    %v30 = vld [vmem:[%s0 + $0x40] sm:$0xff]
    %v31 = vld [vmem:[%s0 + $0x48] sm:$0xff]
    %v32 = vld [vmem:[%s0 + $0x50] sm:$0xff]
    %v33 = vld [vmem:[%s0 + $0x58] sm:$0xff]
    %v34 = vld [vmem:[%s0 + $0x60] sm:$0xff]
    %v35 = vld [vmem:[%s0 + $0x68] sm:$0xff]
    %v36 = vld [vmem:[%s0 + $0x70] sm:$0xff]
    %v37 = vld [vmem:[%s0 + $0x78] sm:$0xff]
    %v38 = vld [vmem:[%s0 + $0x80] sm:$0xff]
    %v39 = vld [vmem:[%s0 + $0x88] sm:$0xff]
    %v40 = vld [vmem:[%s0 + $0x90] sm:$0xff]
    %v41 = vld [vmem:[%s0 + $0x98] sm:$0xff]
    %v42 = vld [vmem:[%s0 + $0xa0] sm:$0xff]
    %v43 = vld [vmem:[%s0 + $0xa8] sm:$0xff]
    %v44 = vld [vmem:[%s0 + $0xb0] sm:$0xff]
    %v45 = vld [vmem:[%s0 + $0xb8] sm:$0xff]
    %v46 = vld [vmem:[%s0 + $0xc0] sm:$0xff]
    %v47 = vld [vmem:[%s0 + $0xc8] sm:$0xff]
    %v48 = vld [vmem:[%s0 + $0xd0] sm:$0xff]
    %v49 = vld [vmem:[%s0 + $0xd8] sm:$0xff]
    %v50 = vld [vmem:[%s0 + $0xe0] sm:$0xff]
    %v51 = vld [vmem:[%s0 + $0xe8] sm:$0xff]
    %v52 = vld [vmem:[%s0 + $0xf0] sm:$0xff]
    %v53 = vld [vmem:[%s0 + $0xf8] sm:$0xff]
    %v54 = vld [vmem:[%s0 + $0x100] sm:$0xff]
    %v55 = vld [vmem:[%s0 + $0x108] sm:$0xff]
    %v56 = vld [vmem:[%s0 + $0x110] sm:$0xff]
    %v57 = vld [vmem:[%s0 + $0x118] sm:$0xff]
    %v58 = vld [vmem:[%s0 + $0x120] sm:$0xff]
    %v59 = vld [vmem:[%s0 + $0x128] sm:$0xff]
    %v60 = vld [vmem:[%s0 + $0x130] sm:$0xff]
    %v61 = vld [vmem:[%s0 + $0x138] sm:$0xff]
    %v62 = vld [vmem:[%s0 + $0x140] sm:$0xff]
    %v63 = vld [vmem:[%s0 + $0x148] sm:$0xff]
    %v64 = vld [vmem:[%s0 + $0x150] sm:$0xff]
    %v65 = vld [vmem:[%s0 + $0x158] sm:$0xff]
    %v66 = vld [vmem:[%s0 + $0x160] sm:$0xff]
    %v67 = vld [vmem:[%s0 + $0x168] sm:$0xff]
    %v68 = vld [vmem:[%s0 + $0x170] sm:$0xff]
    %v69 = vld [vmem:[%s0 + $0x178] sm:$0xff]
    %v70 = vld [vmem:[%s0 + $0x180] sm:$0xff]
    %v71 = vld [vmem:[%s0 + $0x188] sm:$0xff]
    %v72 = vld [vmem:[%s0 + $0x190] sm:$0xff]
    %v73 = vld [vmem:[%s0 + $0x198] sm:$0xff]
    %v74 = vld [vmem:[%s0 + $0x1a0] sm:$0xff]
    %v75 = vld [vmem:[%s0 + $0x1a8] sm:$0xff]
    %v76 = vld [vmem:[%s0 + $0x1b0] sm:$0xff]
    %v77 = vld [vmem:[%s0 + $0x1b8] sm:$0xff]
    %v78 = vld [vmem:[%s0 + $0x1c0] sm:$0xff]
    %v79 = vld [vmem:[%s0 + $0x1c8] sm:$0xff]
    %v80 = vld [vmem:[%s0 + $0x1d0] sm:$0xff]
    %v81 = vld [vmem:[%s0 + $0x1d8] sm:$0xff]
    %v82 = vld [vmem:[%s0 + $0x1e0] sm:$0xff]
    %v83 = vld [vmem:[%s0 + $0x1e8] sm:$0xff]
    %v84 = vld [vmem:[%s0 + $0x1f0] sm:$0xff]
    %v85 = vld [vmem:[%s0 + $0x1f8] sm:$0xff]
    %v86 = vld [vmem:[%s0 + $0x200] sm:$0xff]
    %v87 = vld [vmem:[%s0 + $0x208] sm:$0xff]
    %v88 = vpack.c.bf16 %v22, %v22
    %v89 = vpack.c.bf16 %v23, %v23
    %v90 = vpack.c.bf16 %v24, %v24
    %v91 = vpack.c.bf16 %v25, %v25
    %v92 = vpack.c.bf16 %v26, %v26
    %v93 = vpack.c.bf16 %v27, %v27
    %v94 = vpack.c.bf16 %v28, %v28
    %v95 = vpack.c.bf16 %v29, %v29
    %v96 = vpack.c.bf16 %v30, %v30
    %v97 = vpack.c.bf16 %v31, %v31
    %v98 = vpack.c.bf16 %v32, %v32
    %v99 = vpack.c.bf16 %v33, %v33
    %v100 = vpack.c.bf16 %v34, %v34
    %v101 = vpack.c.bf16 %v35, %v35
    %v102 = vpack.c.bf16 %v36, %v36
    %v103 = vpack.c.bf16 %v37, %v37
    %v104 = vpack.c.bf16 %v38, %v38
    %v105 = vpack.c.bf16 %v39, %v39
    %v106 = vpack.c.bf16 %v40, %v40
    %v107 = vpack.c.bf16 %v41, %v41
    %v108 = vpack.c.bf16 %v42, %v42
    %v109 = vpack.c.bf16 %v43, %v43
    %v110 = vpack.c.bf16 %v44, %v44
    %v111 = vpack.c.bf16 %v45, %v45
    %v112 = vpack.c.bf16 %v46, %v46
    %v113 = vpack.c.bf16 %v47, %v47
    %v114 = vpack.c.bf16 %v48, %v48
    %v115 = vpack.c.bf16 %v49, %v49
    %v116 = vpack.c.bf16 %v50, %v50
    %v117 = vpack.c.bf16 %v51, %v51
    %v118 = vpack.c.bf16 %v52, %v52
    %v119 = vpack.c.bf16 %v53, %v53
    %v120 = vpack.c.bf16 %v54, %v54
    %v121 = vpack.c.bf16 %v55, %v55
    %v122 = vpack.c.bf16 %v56, %v56
    %v123 = vpack.c.bf16 %v57, %v57
    %v124 = vpack.c.bf16 %v58, %v58
    %v125 = vpack.c.bf16 %v59, %v59
    %v126 = vpack.c.bf16 %v60, %v60
    %v127 = vpack.c.bf16 %v61, %v61
    %v128 = vpack.c.bf16 %v62, %v62
    %v129 = vpack.c.bf16 %v63, %v63
    %v130 = vpack.c.bf16 %v64, %v64
    %v131 = vpack.c.bf16 %v65, %v65
    %v132 = vpack.c.bf16 %v66, %v66
    %v133 = vpack.c.bf16 %v67, %v67
    %v134 = vpack.c.bf16 %v68, %v68
    %v135 = vpack.c.bf16 %v69, %v69
    %v136 = vpack.c.bf16 %v70, %v70
    %v137 = vpack.c.bf16 %v71, %v71
    %v138 = vpack.c.bf16 %v72, %v72
    %v139 = vpack.c.bf16 %v73, %v73
    %v140 = vpack.c.bf16 %v74, %v74
    %v141 = vpack.c.bf16 %v75, %v75
    %v142 = vpack.c.bf16 %v76, %v76
    %v143 = vpack.c.bf16 %v77, %v77
    %v144 = vpack.c.bf16 %v78, %v78
    %v145 = vpack.c.bf16 %v79, %v79
    %v146 = vpack.c.bf16 %v80, %v80
    %v147 = vpack.c.bf16 %v81, %v81
    %v148 = vpack.c.bf16 %v82, %v82
    %v149 = vpack.c.bf16 %v83, %v83
    %v150 = vpack.c.bf16 %v84, %v84
    %v151 = vpack.c.bf16 %v85, %v85
    %v152 = vpack.c.bf16 %v86, %v86
    %v153 = vpack.c.bf16 %v87, %v87
    %v154 = vld [vmem:[%s1] sm:$0xf]
    %v155 = vld [vmem:[%s1 + $0x4] sm:$0xf]
    %v156 = vld [vmem:[%s1 + $0x8] sm:$0xf]
    %v157 = vld [vmem:[%s1 + $0xc] sm:$0xf]
    %v158 = vld [vmem:[%s1 + $0x10] sm:$0xf]
    %v159 = vld [vmem:[%s1 + $0x14] sm:$0xf]
    %v160 = vld [vmem:[%s1 + $0x18] sm:$0xf]
    %v161 = vld [vmem:[%s1 + $0x1c] sm:$0xf]
    %v162 = vld [vmem:[%s1 + $0x20] sm:$0xf]
    %v163 = vld [vmem:[%s1 + $0x24] sm:$0xf]
    %v164 = vld [vmem:[%s1 + $0x28] sm:$0xf]
    %v165 = vld [vmem:[%s1 + $0x2c] sm:$0xf]
    %v166 = vld [vmem:[%s1 + $0x30] sm:$0xf]
    %v167 = vld [vmem:[%s1 + $0x34] sm:$0xf]
    %v168 = vld [vmem:[%s1 + $0x38] sm:$0xf]
    %v169 = vld [vmem:[%s1 + $0x3c] sm:$0xf]
    %v170 = vld [vmem:[%s1 + $0x40] sm:$0xf]
    %v171 = vld [vmem:[%s1 + $0x44] sm:$0xf]
    %v172 = vld [vmem:[%s1 + $0x48] sm:$0xf]
    %v173 = vld [vmem:[%s1 + $0x4c] sm:$0xf]
    %v174 = vld [vmem:[%s1 + $0x50] sm:$0xf]
    %v175 = vld [vmem:[%s1 + $0x54] sm:$0xf]
    %v176 = vld [vmem:[%s1 + $0x58] sm:$0xf]
    %v177 = vld [vmem:[%s1 + $0x5c] sm:$0xf]
    %v178 = vld [vmem:[%s1 + $0x60] sm:$0xf]
    %v179 = vld [vmem:[%s1 + $0x64] sm:$0xf]
    %v180 = vld [vmem:[%s1 + $0x68] sm:$0xf]
    %v181 = vld [vmem:[%s1 + $0x6c] sm:$0xf]
    %v182 = vld [vmem:[%s1 + $0x70] sm:$0xf]
    %v183 = vld [vmem:[%s1 + $0x74] sm:$0xf]
    %v184 = vld [vmem:[%s1 + $0x78] sm:$0xf]
    %v185 = vld [vmem:[%s1 + $0x7c] sm:$0xf]
    %v186 = vld [vmem:[%s1 + $0x80] sm:$0xf]
    %v187 = vld [vmem:[%s1 + $0x84] sm:$0xf]
    %v188 = vld [vmem:[%s1 + $0x88] sm:$0xf]
    %v189 = vld [vmem:[%s1 + $0x8c] sm:$0xf]
    %v190 = vld [vmem:[%s1 + $0x90] sm:$0xf]
    %v191 = vld [vmem:[%s1 + $0x94] sm:$0xf]
    %v192 = vld [vmem:[%s1 + $0x98] sm:$0xf]
    %v193 = vld [vmem:[%s1 + $0x9c] sm:$0xf]
    %v194 = vld [vmem:[%s1 + $0xa0] sm:$0xf]
    %v195 = vld [vmem:[%s1 + $0xa4] sm:$0xf]
    %v196 = vld [vmem:[%s1 + $0xa8] sm:$0xf]
    %v197 = vld [vmem:[%s1 + $0xac] sm:$0xf]
    %v198 = vld [vmem:[%s1 + $0xb0] sm:$0xf]
    %v199 = vld [vmem:[%s1 + $0xb4] sm:$0xf]
    %v200 = vld [vmem:[%s1 + $0xb8] sm:$0xf]
    %v201 = vld [vmem:[%s1 + $0xbc] sm:$0xf]
    %v202 = vld [vmem:[%s1 + $0xc0] sm:$0xf]
    %v203 = vld [vmem:[%s1 + $0xc4] sm:$0xf]
    %v204 = vld [vmem:[%s1 + $0xc8] sm:$0xf]
    %v205 = vld [vmem:[%s1 + $0xcc] sm:$0xf]
    %v206 = vld [vmem:[%s1 + $0xd0] sm:$0xf]
    %v207 = vld [vmem:[%s1 + $0xd4] sm:$0xf]
    %v208 = vld [vmem:[%s1 + $0xd8] sm:$0xf]
    %v209 = vld [vmem:[%s1 + $0xdc] sm:$0xf]
    %v210 = vld [vmem:[%s1 + $0xe0] sm:$0xf]
    %v211 = vld [vmem:[%s1 + $0xe4] sm:$0xf]
    %v212 = vld [vmem:[%s1 + $0xe8] sm:$0xf]
    %v213 = vld [vmem:[%s1 + $0xec] sm:$0xf]
    %v214 = vld [vmem:[%s1 + $0xf0] sm:$0xf]
    %v215 = vld [vmem:[%s1 + $0xf4] sm:$0xf]
    %v216 = vld [vmem:[%s1 + $0xf8] sm:$0xf]
    %v217 = vld [vmem:[%s1 + $0xfc] sm:$0xf]
    %v218 = vld [vmem:[%s1 + $0x100] sm:$0xf]
    %v219 = vld [vmem:[%s1 + $0x104] sm:$0xf]
    %v220 = vld [vmem:[%s1 + $0x108] sm:$0xf]
    %v221 = vld [vmem:[%s1 + $0x10c] sm:$0xf]
    %v222 = vld [vmem:[%s1 + $0x110] sm:$0xf]
    %v223 = vld [vmem:[%s1 + $0x114] sm:$0xf]
    %v224 = vld [vmem:[%s1 + $0x118] sm:$0xf]
    %v225 = vld [vmem:[%s1 + $0x11c] sm:$0xf]
    %v226 = vld [vmem:[%s1 + $0x120] sm:$0xf]
    %v227 = vld [vmem:[%s1 + $0x124] sm:$0xf]
    %v228 = vld [vmem:[%s1 + $0x128] sm:$0xf]
    %v229 = vld [vmem:[%s1 + $0x12c] sm:$0xf]
    %v230 = vld [vmem:[%s1 + $0x130] sm:$0xf]
    %v231 = vld [vmem:[%s1 + $0x134] sm:$0xf]
    %v232 = vld [vmem:[%s1 + $0x138] sm:$0xf]
    %v233 = vld [vmem:[%s1 + $0x13c] sm:$0xf]
    %v234 = vld [vmem:[%s1 + $0x140] sm:$0xf]
    %v235 = vld [vmem:[%s1 + $0x144] sm:$0xf]
    %v236 = vld [vmem:[%s1 + $0x148] sm:$0xf]
    %v237 = vld [vmem:[%s1 + $0x14c] sm:$0xf]
    %v238 = vld [vmem:[%s1 + $0x150] sm:$0xf]
    %v239 = vld [vmem:[%s1 + $0x154] sm:$0xf]
    %v240 = vld [vmem:[%s1 + $0x158] sm:$0xf]
    %v241 = vld [vmem:[%s1 + $0x15c] sm:$0xf]
    %v242 = vld [vmem:[%s1 + $0x160] sm:$0xf]
    %v243 = vld [vmem:[%s1 + $0x164] sm:$0xf]
    %v244 = vld [vmem:[%s1 + $0x168] sm:$0xf]
    %v245 = vld [vmem:[%s1 + $0x16c] sm:$0xf]
    %v246 = vld [vmem:[%s1 + $0x170] sm:$0xf]
    %v247 = vld [vmem:[%s1 + $0x174] sm:$0xf]
    %v248 = vld [vmem:[%s1 + $0x178] sm:$0xf]
    %v249 = vld [vmem:[%s1 + $0x17c] sm:$0xf]
    %v250 = vld [vmem:[%s1 + $0x180] sm:$0xf]
    %v251 = vld [vmem:[%s1 + $0x184] sm:$0xf]
    %v252 = vld [vmem:[%s1 + $0x188] sm:$0xf]
    %v253 = vld [vmem:[%s1 + $0x18c] sm:$0xf]
    %v254 = vld [vmem:[%s1 + $0x190] sm:$0xf]
    %v255 = vld [vmem:[%s1 + $0x194] sm:$0xf]
    %v256 = vld [vmem:[%s1 + $0x198] sm:$0xf]
    %v257 = vld [vmem:[%s1 + $0x19c] sm:$0xf]
    %v258 = vld [vmem:[%s1 + $0x1a0] sm:$0xf]
    %v259 = vld [vmem:[%s1 + $0x1a4] sm:$0xf]
    %v260 = vld [vmem:[%s1 + $0x1a8] sm:$0xf]
    %v261 = vld [vmem:[%s1 + $0x1ac] sm:$0xf]
    %v262 = vld [vmem:[%s1 + $0x1b0] sm:$0xf]
    %v263 = vld [vmem:[%s1 + $0x1b4] sm:$0xf]
    %v264 = vld [vmem:[%s1 + $0x1b8] sm:$0xf]
    %v265 = vld [vmem:[%s1 + $0x1bc] sm:$0xf]
    %v266 = vld [vmem:[%s1 + $0x1c0] sm:$0xf]
    %v267 = vld [vmem:[%s1 + $0x1c4] sm:$0xf]
    %v268 = vld [vmem:[%s1 + $0x1c8] sm:$0xf]
    %v269 = vld [vmem:[%s1 + $0x1cc] sm:$0xf]
    %v270 = vld [vmem:[%s1 + $0x1d0] sm:$0xf]
    %v271 = vld [vmem:[%s1 + $0x1d4] sm:$0xf]
    %v272 = vld [vmem:[%s1 + $0x1d8] sm:$0xf]
    %v273 = vld [vmem:[%s1 + $0x1dc] sm:$0xf]
    %v274 = vld [vmem:[%s1 + $0x1e0] sm:$0xf]
    %v275 = vld [vmem:[%s1 + $0x1e4] sm:$0xf]
    %v276 = vld [vmem:[%s1 + $0x1e8] sm:$0xf]
    %v277 = vld [vmem:[%s1 + $0x1ec] sm:$0xf]
    %v278 = vld [vmem:[%s1 + $0x1f0] sm:$0xf]
    %v279 = vld [vmem:[%s1 + $0x1f4] sm:$0xf]
    %v280 = vld [vmem:[%s1 + $0x1f8] sm:$0xf]
    %v281 = vld [vmem:[%s1 + $0x1fc] sm:$0xf]
    %v282 = vld [vmem:[%s1 + $0x200] sm:$0xf]
    %v283 = vld [vmem:[%s1 + $0x204] sm:$0xf]
    %v284 = vld [vmem:[%s1 + $0x208] sm:$0xf]
    %v285 = vld [vmem:[%s1 + $0x20c] sm:$0xf]
    %v286 = vld [vmem:[%s1 + $0x210] sm:$0xf]
    %v287 = vld [vmem:[%s1 + $0x214] sm:$0xf]
    %v288 = vld [vmem:[%s1 + $0x218] sm:$0xf]
    %v289 = vld [vmem:[%s1 + $0x21c] sm:$0xf]
    %v290 = vld [vmem:[%s1 + $0x220] sm:$0xf]
    %v291 = vld [vmem:[%s1 + $0x224] sm:$0xf]
    %v292 = vld [vmem:[%s1 + $0x228] sm:$0xf]
    %v293 = vld [vmem:[%s1 + $0x22c] sm:$0xf]
    %v294 = vld [vmem:[%s1 + $0x230] sm:$0xf]
    %v295 = vld [vmem:[%s1 + $0x234] sm:$0xf]
    %v296 = vld [vmem:[%s1 + $0x238] sm:$0xf]
    %v297 = vld [vmem:[%s1 + $0x23c] sm:$0xf]
    %v298 = vld [vmem:[%s1 + $0x240] sm:$0xf]
    %v299 = vld [vmem:[%s1 + $0x244] sm:$0xf]
    %v300 = vld [vmem:[%s1 + $0x248] sm:$0xf]
    %v301 = vld [vmem:[%s1 + $0x24c] sm:$0xf]
    %v302 = vld [vmem:[%s1 + $0x250] sm:$0xf]
    %v303 = vld [vmem:[%s1 + $0x254] sm:$0xf]
    %v304 = vld [vmem:[%s1 + $0x258] sm:$0xf]
    %v305 = vld [vmem:[%s1 + $0x25c] sm:$0xf]
    %v306 = vld [vmem:[%s1 + $0x260] sm:$0xf]
    %v307 = vld [vmem:[%s1 + $0x264] sm:$0xf]
    %v308 = vld [vmem:[%s1 + $0x268] sm:$0xf]
    %v309 = vld [vmem:[%s1 + $0x26c] sm:$0xf]
    %v310 = vld [vmem:[%s1 + $0x270] sm:$0xf]
    %v311 = vld [vmem:[%s1 + $0x274] sm:$0xf]
    %v312 = vld [vmem:[%s1 + $0x278] sm:$0xf]
    %v313 = vld [vmem:[%s1 + $0x27c] sm:$0xf]
    %v314 = vld [vmem:[%s1 + $0x280] sm:$0xf]
    %v315 = vld [vmem:[%s1 + $0x284] sm:$0xf]
    %v316 = vld [vmem:[%s1 + $0x288] sm:$0xf]
    %v317 = vld [vmem:[%s1 + $0x28c] sm:$0xf]
    %v318 = vld [vmem:[%s1 + $0x290] sm:$0xf]
    %v319 = vld [vmem:[%s1 + $0x294] sm:$0xf]
    %v320 = vld [vmem:[%s1 + $0x298] sm:$0xf]
    %v321 = vld [vmem:[%s1 + $0x29c] sm:$0xf]
    %v322 = vld [vmem:[%s1 + $0x2a0] sm:$0xf]
    %v323 = vld [vmem:[%s1 + $0x2a4] sm:$0xf]
    %v324 = vld [vmem:[%s1 + $0x2a8] sm:$0xf]
    %v325 = vld [vmem:[%s1 + $0x2ac] sm:$0xf]
    %v326 = vld [vmem:[%s1 + $0x2b0] sm:$0xf]
    %v327 = vld [vmem:[%s1 + $0x2b4] sm:$0xf]
    %v328 = vld [vmem:[%s1 + $0x2b8] sm:$0xf]
    %v329 = vld [vmem:[%s1 + $0x2bc] sm:$0xf]
    %v330 = vld [vmem:[%s1 + $0x2c0] sm:$0xf]
    %v331 = vld [vmem:[%s1 + $0x2c4] sm:$0xf]
    %v332 = vld [vmem:[%s1 + $0x2c8] sm:$0xf]
    %v333 = vld [vmem:[%s1 + $0x2cc] sm:$0xf]
    %v334 = vld [vmem:[%s1 + $0x2d0] sm:$0xf]
    %v335 = vld [vmem:[%s1 + $0x2d4] sm:$0xf]
    %v336 = vld [vmem:[%s1 + $0x2d8] sm:$0xf]
    %v337 = vld [vmem:[%s1 + $0x2dc] sm:$0xf]
    %v338 = vld [vmem:[%s1 + $0x2e0] sm:$0xf]
    %v339 = vld [vmem:[%s1 + $0x2e4] sm:$0xf]
    %v340 = vld [vmem:[%s1 + $0x2e8] sm:$0xf]
    %v341 = vld [vmem:[%s1 + $0x2ec] sm:$0xf]
    %v342 = vld [vmem:[%s1 + $0x2f0] sm:$0xf]
    %v343 = vld [vmem:[%s1 + $0x2f4] sm:$0xf]
    %v344 = vld [vmem:[%s1 + $0x2f8] sm:$0xf]
    %v345 = vld [vmem:[%s1 + $0x2fc] sm:$0xf]
    %v346 = vld [vmem:[%s1 + $0x300] sm:$0xf]
    %v347 = vld [vmem:[%s1 + $0x304] sm:$0xf]
    %v348 = vld [vmem:[%s1 + $0x308] sm:$0xf]
    %v349 = vld [vmem:[%s1 + $0x30c] sm:$0xf]
    %v350 = vld [vmem:[%s1 + $0x310] sm:$0xf]
    %v351 = vld [vmem:[%s1 + $0x314] sm:$0xf]
    %v352 = vld [vmem:[%s1 + $0x318] sm:$0xf]
    %v353 = vld [vmem:[%s1 + $0x31c] sm:$0xf]
    %v354 = vld [vmem:[%s1 + $0x320] sm:$0xf]
    %v355 = vld [vmem:[%s1 + $0x324] sm:$0xf]
    %v356 = vld [vmem:[%s1 + $0x328] sm:$0xf]
    %v357 = vld [vmem:[%s1 + $0x32c] sm:$0xf]
    %v358 = vld [vmem:[%s1 + $0x330] sm:$0xf]
    %v359 = vld [vmem:[%s1 + $0x334] sm:$0xf]
    %v360 = vld [vmem:[%s1 + $0x338] sm:$0xf]
    %v361 = vld [vmem:[%s1 + $0x33c] sm:$0xf]
    %v362 = vld [vmem:[%s1 + $0x340] sm:$0xf]
    %v363 = vld [vmem:[%s1 + $0x344] sm:$0xf]
    %v364 = vld [vmem:[%s1 + $0x348] sm:$0xf]
    %v365 = vld [vmem:[%s1 + $0x34c] sm:$0xf]
    %v366 = vld [vmem:[%s1 + $0x350] sm:$0xf]
    %v367 = vld [vmem:[%s1 + $0x354] sm:$0xf]
    %v368 = vld [vmem:[%s1 + $0x358] sm:$0xf]
    %v369 = vld [vmem:[%s1 + $0x35c] sm:$0xf]
    %v370 = vld [vmem:[%s1 + $0x360] sm:$0xf]
    %v371 = vld [vmem:[%s1 + $0x364] sm:$0xf]
    %v372 = vld [vmem:[%s1 + $0x368] sm:$0xf]
    %v373 = vld [vmem:[%s1 + $0x36c] sm:$0xf]
    %v374 = vld [vmem:[%s1 + $0x370] sm:$0xf]
    %v375 = vld [vmem:[%s1 + $0x374] sm:$0xf]
    %v376 = vld [vmem:[%s1 + $0x378] sm:$0xf]
    %v377 = vld [vmem:[%s1 + $0x37c] sm:$0xf]
    %v378 = vld [vmem:[%s1 + $0x380] sm:$0xf]
    %v379 = vld [vmem:[%s1 + $0x384] sm:$0xf]
    %v380 = vld [vmem:[%s1 + $0x388] sm:$0xf]
    %v381 = vld [vmem:[%s1 + $0x38c] sm:$0xf]
    %v382 = vld [vmem:[%s1 + $0x390] sm:$0xf]
    %v383 = vld [vmem:[%s1 + $0x394] sm:$0xf]
    %v384 = vld [vmem:[%s1 + $0x398] sm:$0xf]
    %v385 = vld [vmem:[%s1 + $0x39c] sm:$0xf]
    %v386 = vld [vmem:[%s1 + $0x3a0] sm:$0xf]
    %v387 = vld [vmem:[%s1 + $0x3a4] sm:$0xf]
    %v388 = vld [vmem:[%s1 + $0x3a8] sm:$0xf]
    %v389 = vld [vmem:[%s1 + $0x3ac] sm:$0xf]
    %v390 = vld [vmem:[%s1 + $0x3b0] sm:$0xf]
    %v391 = vld [vmem:[%s1 + $0x3b4] sm:$0xf]
    %v392 = vld [vmem:[%s1 + $0x3b8] sm:$0xf]
    %v393 = vld [vmem:[%s1 + $0x3bc] sm:$0xf]
    %v394 = vld [vmem:[%s1 + $0x3c0] sm:$0xf]
    %v395 = vld [vmem:[%s1 + $0x3c4] sm:$0xf]
    %v396 = vld [vmem:[%s1 + $0x3c8] sm:$0xf]
    %v397 = vld [vmem:[%s1 + $0x3cc] sm:$0xf]
    %v398 = vld [vmem:[%s1 + $0x3d0] sm:$0xf]
    %v399 = vld [vmem:[%s1 + $0x3d4] sm:$0xf]
    %v400 = vld [vmem:[%s1 + $0x3d8] sm:$0xf]
    %v401 = vld [vmem:[%s1 + $0x3dc] sm:$0xf]
    %v402 = vld [vmem:[%s1 + $0x3e0] sm:$0xf]
    %v403 = vld [vmem:[%s1 + $0x3e4] sm:$0xf]
    %v404 = vld [vmem:[%s1 + $0x3e8] sm:$0xf]
    %v405 = vld [vmem:[%s1 + $0x3ec] sm:$0xf]
    %v406 = vld [vmem:[%s1 + $0x3f0] sm:$0xf]
    %v407 = vld [vmem:[%s1 + $0x3f4] sm:$0xf]
    %v408 = vld [vmem:[%s1 + $0x3f8] sm:$0xf]
    %v409 = vld [vmem:[%s1 + $0x3fc] sm:$0xf]
    %v410 = vld [vmem:[%s1 + $0x400] sm:$0xf]
    %v411 = vld [vmem:[%s1 + $0x404] sm:$0xf]
    %v412 = vld [vmem:[%s1 + $0x408] sm:$0xf]
    %v413 = vld [vmem:[%s1 + $0x40c] sm:$0xf]
    %v414 = vld [vmem:[%s1 + $0x410] sm:$0xf]
    %v415 = vld [vmem:[%s1 + $0x414] sm:$0xf]
    %v416 = vld [vmem:[%s1 + $0x418] sm:$0xf]
    %v417 = vld [vmem:[%s1 + $0x41c] sm:$0xf]
    %v418 = vld [vmem:[%s1 + $0x420] sm:$0xf]
    %v419 = vld [vmem:[%s1 + $0x424] sm:$0xf]
    %v420 = vld [vmem:[%s1 + $0x428] sm:$0xf]
    %v421 = vld [vmem:[%s1 + $0x42c] sm:$0xf]
    %v422 = vld [vmem:[%s1 + $0x430] sm:$0xf]
    %v423 = vld [vmem:[%s1 + $0x434] sm:$0xf]
    %v424 = vld [vmem:[%s1 + $0x438] sm:$0xf]
    %v425 = vld [vmem:[%s1 + $0x43c] sm:$0xf]
    %v426 = vld [vmem:[%s1 + $0x440] sm:$0xf]
    %v427 = vld [vmem:[%s1 + $0x444] sm:$0xf]
    %v428 = vld [vmem:[%s1 + $0x448] sm:$0xf]
    %v429 = vld [vmem:[%s1 + $0x44c] sm:$0xf]
    %v430 = vld [vmem:[%s1 + $0x450] sm:$0xf]
    %v431 = vld [vmem:[%s1 + $0x454] sm:$0xf]
    %v432 = vld [vmem:[%s1 + $0x458] sm:$0xf]
    %v433 = vld [vmem:[%s1 + $0x45c] sm:$0xf]
    %v434 = vld [vmem:[%s1 + $0x460] sm:$0xf]
    %v435 = vld [vmem:[%s1 + $0x464] sm:$0xf]
    %v436 = vld [vmem:[%s1 + $0x468] sm:$0xf]
    %v437 = vld [vmem:[%s1 + $0x46c] sm:$0xf]
    %v438 = vld [vmem:[%s1 + $0x470] sm:$0xf]
    %v439 = vld [vmem:[%s1 + $0x474] sm:$0xf]
    %v440 = vld [vmem:[%s1 + $0x478] sm:$0xf]
    %v441 = vld [vmem:[%s1 + $0x47c] sm:$0xf]
    %v442 = vld [vmem:[%s1 + $0x480] sm:$0xf]
    %v443 = vld [vmem:[%s1 + $0x484] sm:$0xf]
    %v444 = vld [vmem:[%s1 + $0x488] sm:$0xf]
    %v445 = vld [vmem:[%s1 + $0x48c] sm:$0xf]
    %v446 = vld [vmem:[%s1 + $0x490] sm:$0xf]
    %v447 = vld [vmem:[%s1 + $0x494] sm:$0xf]
    %v448 = vld [vmem:[%s1 + $0x498] sm:$0xf]
    %v449 = vld [vmem:[%s1 + $0x49c] sm:$0xf]
    %v450 = vld [vmem:[%s1 + $0x4a0] sm:$0xf]
    %v451 = vld [vmem:[%s1 + $0x4a4] sm:$0xf]
    %v452 = vld [vmem:[%s1 + $0x4a8] sm:$0xf]
    %v453 = vld [vmem:[%s1 + $0x4ac] sm:$0xf]
    %v454 = vld [vmem:[%s1 + $0x4b0] sm:$0xf]
    %v455 = vld [vmem:[%s1 + $0x4b4] sm:$0xf]
    %v456 = vld [vmem:[%s1 + $0x4b8] sm:$0xf]
    %v457 = vld [vmem:[%s1 + $0x4bc] sm:$0xf]
    %v458 = vld [vmem:[%s1 + $0x4c0] sm:$0xf]
    %v459 = vld [vmem:[%s1 + $0x4c4] sm:$0xf]
    %v460 = vld [vmem:[%s1 + $0x4c8] sm:$0xf]
    %v461 = vld [vmem:[%s1 + $0x4cc] sm:$0xf]
    %v462 = vld [vmem:[%s1 + $0x4d0] sm:$0xf]
    %v463 = vld [vmem:[%s1 + $0x4d4] sm:$0xf]
    %v464 = vld [vmem:[%s1 + $0x4d8] sm:$0xf]
    %v465 = vld [vmem:[%s1 + $0x4dc] sm:$0xf]
    %v466 = vld [vmem:[%s1 + $0x4e0] sm:$0xf]
    %v467 = vld [vmem:[%s1 + $0x4e4] sm:$0xf]
    %v468 = vld [vmem:[%s1 + $0x4e8] sm:$0xf]
    %v469 = vld [vmem:[%s1 + $0x4ec] sm:$0xf]
    %v470 = vld [vmem:[%s1 + $0x4f0] sm:$0xf]
    %v471 = vld [vmem:[%s1 + $0x4f4] sm:$0xf]
    %v472 = vld [vmem:[%s1 + $0x4f8] sm:$0xf]
    %v473 = vld [vmem:[%s1 + $0x4fc] sm:$0xf]
    %v474 = vld [vmem:[%s1 + $0x500] sm:$0xf]
    %v475 = vld [vmem:[%s1 + $0x504] sm:$0xf]
    %v476 = vld [vmem:[%s1 + $0x508] sm:$0xf]
    %v477 = vld [vmem:[%s1 + $0x50c] sm:$0xf]
    %v478 = vld [vmem:[%s1 + $0x510] sm:$0xf]
    %v479 = vld [vmem:[%s1 + $0x514] sm:$0xf]
    %v480 = vld [vmem:[%s1 + $0x518] sm:$0xf]
    %v481 = vld [vmem:[%s1 + $0x51c] sm:$0xf]
    %v482 = vld [vmem:[%s1 + $0x520] sm:$0xf]
    %v483 = vld [vmem:[%s1 + $0x524] sm:$0xf]
    %v484 = vld [vmem:[%s1 + $0x528] sm:$0xf]
    %v485 = vld [vmem:[%s1 + $0x52c] sm:$0xf]
    %v486 = vld [vmem:[%s1 + $0x530] sm:$0xf]
    %v487 = vld [vmem:[%s1 + $0x534] sm:$0xf]
    %v488 = vld [vmem:[%s1 + $0x538] sm:$0xf]
    %v489 = vld [vmem:[%s1 + $0x53c] sm:$0xf]
    %v490 = vld [vmem:[%s1 + $0x540] sm:$0xf]
    %v491 = vld [vmem:[%s1 + $0x544] sm:$0xf]
    %v492 = vld [vmem:[%s1 + $0x548] sm:$0xf]
    %v493 = vld [vmem:[%s1 + $0x54c] sm:$0xf]
    %v494 = vld [vmem:[%s1 + $0x550] sm:$0xf]
    %v495 = vld [vmem:[%s1 + $0x554] sm:$0xf]
    %v496 = vld [vmem:[%s1 + $0x558] sm:$0xf]
    %v497 = vld [vmem:[%s1 + $0x55c] sm:$0xf]
    %v498 = vld [vmem:[%s1 + $0x560] sm:$0xf]
    %v499 = vld [vmem:[%s1 + $0x564] sm:$0xf]
    %v500 = vld [vmem:[%s1 + $0x568] sm:$0xf]
    %v501 = vld [vmem:[%s1 + $0x56c] sm:$0xf]
    %v502 = vld [vmem:[%s1 + $0x570] sm:$0xf]
    %v503 = vld [vmem:[%s1 + $0x574] sm:$0xf]
    %v504 = vld [vmem:[%s1 + $0x578] sm:$0xf]
    %v505 = vld [vmem:[%s1 + $0x57c] sm:$0xf]
    %v506 = vld [vmem:[%s1 + $0x580] sm:$0xf]
    %v507 = vld [vmem:[%s1 + $0x584] sm:$0xf]
    %v508 = vld [vmem:[%s1 + $0x588] sm:$0xf]
    %v509 = vld [vmem:[%s1 + $0x58c] sm:$0xf]
    %v510 = vld [vmem:[%s1 + $0x590] sm:$0xf]
    %v511 = vld [vmem:[%s1 + $0x594] sm:$0xf]
    %v512 = vld [vmem:[%s1 + $0x598] sm:$0xf]
    %v513 = vld [vmem:[%s1 + $0x59c] sm:$0xf]
    %v514 = vld [vmem:[%s1 + $0x5a0] sm:$0xf]
    %v515 = vld [vmem:[%s1 + $0x5a4] sm:$0xf]
    %v516 = vld [vmem:[%s1 + $0x5a8] sm:$0xf]
    %v517 = vld [vmem:[%s1 + $0x5ac] sm:$0xf]
    %v518 = vld [vmem:[%s1 + $0x5b0] sm:$0xf]
    %v519 = vld [vmem:[%s1 + $0x5b4] sm:$0xf]
    %v520 = vld [vmem:[%s1 + $0x5b8] sm:$0xf]
    %v521 = vld [vmem:[%s1 + $0x5bc] sm:$0xf]
    %v522 = vld [vmem:[%s1 + $0x5c0] sm:$0xf]
    %v523 = vld [vmem:[%s1 + $0x5c4] sm:$0xf]
    %v524 = vld [vmem:[%s1 + $0x5c8] sm:$0xf]
    %v525 = vld [vmem:[%s1 + $0x5cc] sm:$0xf]
    %v526 = vld [vmem:[%s1 + $0x5d0] sm:$0xf]
    %v527 = vld [vmem:[%s1 + $0x5d4] sm:$0xf]
    %v528 = vld [vmem:[%s1 + $0x5d8] sm:$0xf]
    %v529 = vld [vmem:[%s1 + $0x5dc] sm:$0xf]
    %v530 = vld [vmem:[%s1 + $0x5e0] sm:$0xf]
    %v531 = vld [vmem:[%s1 + $0x5e4] sm:$0xf]
    %v532 = vld [vmem:[%s1 + $0x5e8] sm:$0xf]
    %v533 = vld [vmem:[%s1 + $0x5ec] sm:$0xf]
    %v534 = vld [vmem:[%s1 + $0x5f0] sm:$0xf]
    %v535 = vld [vmem:[%s1 + $0x5f4] sm:$0xf]
    %v536 = vld [vmem:[%s1 + $0x5f8] sm:$0xf]
    %v537 = vld [vmem:[%s1 + $0x5fc] sm:$0xf]
    %v538 = vld [vmem:[%s1 + $0x600] sm:$0xf]
    %v539 = vld [vmem:[%s1 + $0x604] sm:$0xf]
    %v540 = vld [vmem:[%s1 + $0x608] sm:$0xf]
    %v541 = vld [vmem:[%s1 + $0x60c] sm:$0xf]
    %v542 = vld [vmem:[%s1 + $0x610] sm:$0xf]
    %v543 = vld [vmem:[%s1 + $0x614] sm:$0xf]
    %v544 = vld [vmem:[%s1 + $0x618] sm:$0xf]
    %v545 = vld [vmem:[%s1 + $0x61c] sm:$0xf]
    %v546 = vld [vmem:[%s1 + $0x620] sm:$0xf]
    %v547 = vld [vmem:[%s1 + $0x624] sm:$0xf]
    %v548 = vld [vmem:[%s1 + $0x628] sm:$0xf]
    %v549 = vld [vmem:[%s1 + $0x62c] sm:$0xf]
    %v550 = vld [vmem:[%s1 + $0x630] sm:$0xf]
    %v551 = vld [vmem:[%s1 + $0x634] sm:$0xf]
    %v552 = vld [vmem:[%s1 + $0x638] sm:$0xf]
    %v553 = vld [vmem:[%s1 + $0x63c] sm:$0xf]
    %v554 = vld [vmem:[%s1 + $0x640] sm:$0xf]
    %v555 = vld [vmem:[%s1 + $0x644] sm:$0xf]
    %v556 = vld [vmem:[%s1 + $0x648] sm:$0xf]
    %v557 = vld [vmem:[%s1 + $0x64c] sm:$0xf]
    %v558 = vld [vmem:[%s1 + $0x650] sm:$0xf]
    %v559 = vld [vmem:[%s1 + $0x654] sm:$0xf]
    %v560 = vld [vmem:[%s1 + $0x658] sm:$0xf]
    %v561 = vld [vmem:[%s1 + $0x65c] sm:$0xf]
    %v562 = vld [vmem:[%s1 + $0x660] sm:$0xf]
    %v563 = vld [vmem:[%s1 + $0x664] sm:$0xf]
    %v564 = vld [vmem:[%s1 + $0x668] sm:$0xf]
    %v565 = vld [vmem:[%s1 + $0x66c] sm:$0xf]
    %v566 = vld [vmem:[%s1 + $0x670] sm:$0xf]
    %v567 = vld [vmem:[%s1 + $0x674] sm:$0xf]
    %v568 = vld [vmem:[%s1 + $0x678] sm:$0xf]
    %v569 = vld [vmem:[%s1 + $0x67c] sm:$0xf]
    %v570 = vld [vmem:[%s1 + $0x680] sm:$0xf]
    %v571 = vld [vmem:[%s1 + $0x684] sm:$0xf]
    %v572 = vld [vmem:[%s1 + $0x688] sm:$0xf]
    %v573 = vld [vmem:[%s1 + $0x68c] sm:$0xf]
    %v574 = vld [vmem:[%s1 + $0x690] sm:$0xf]
    %v575 = vld [vmem:[%s1 + $0x694] sm:$0xf]
    %v576 = vld [vmem:[%s1 + $0x698] sm:$0xf]
    %v577 = vld [vmem:[%s1 + $0x69c] sm:$0xf]
    %v578 = vld [vmem:[%s1 + $0x6a0] sm:$0xf]
    %v579 = vld [vmem:[%s1 + $0x6a4] sm:$0xf]
    %v580 = vld [vmem:[%s1 + $0x6a8] sm:$0xf]
    %v581 = vld [vmem:[%s1 + $0x6ac] sm:$0xf]
    %v582 = vld [vmem:[%s1 + $0x6b0] sm:$0xf]
    %v583 = vld [vmem:[%s1 + $0x6b4] sm:$0xf]
    %v584 = vld [vmem:[%s1 + $0x6b8] sm:$0xf]
    %v585 = vld [vmem:[%s1 + $0x6bc] sm:$0xf]
    %v586 = vld [vmem:[%s1 + $0x6c0] sm:$0xf]
    %v587 = vld [vmem:[%s1 + $0x6c4] sm:$0xf]
    %v588 = vld [vmem:[%s1 + $0x6c8] sm:$0xf]
    %v589 = vld [vmem:[%s1 + $0x6cc] sm:$0xf]
    %v590 = vld [vmem:[%s1 + $0x6d0] sm:$0xf]
    %v591 = vld [vmem:[%s1 + $0x6d4] sm:$0xf]
    %v592 = vld [vmem:[%s1 + $0x6d8] sm:$0xf]
    %v593 = vld [vmem:[%s1 + $0x6dc] sm:$0xf]
    %v594 = vld [vmem:[%s1 + $0x6e0] sm:$0xf]
    %v595 = vld [vmem:[%s1 + $0x6e4] sm:$0xf]
    %v596 = vld [vmem:[%s1 + $0x6e8] sm:$0xf]
    %v597 = vld [vmem:[%s1 + $0x6ec] sm:$0xf]
    %v598 = vld [vmem:[%s1 + $0x6f0] sm:$0xf]
    %v599 = vld [vmem:[%s1 + $0x6f4] sm:$0xf]
    %v600 = vld [vmem:[%s1 + $0x6f8] sm:$0xf]
    %v601 = vld [vmem:[%s1 + $0x6fc] sm:$0xf]
    %v602 = vld [vmem:[%s1 + $0x700] sm:$0xf]
    %v603 = vld [vmem:[%s1 + $0x704] sm:$0xf]
    %v604 = vld [vmem:[%s1 + $0x708] sm:$0xf]
    %v605 = vld [vmem:[%s1 + $0x70c] sm:$0xf]
    %v606 = vld [vmem:[%s1 + $0x710] sm:$0xf]
    %v607 = vld [vmem:[%s1 + $0x714] sm:$0xf]
    %v608 = vld [vmem:[%s1 + $0x718] sm:$0xf]
    %v609 = vld [vmem:[%s1 + $0x71c] sm:$0xf]
    %v610 = vld [vmem:[%s1 + $0x720] sm:$0xf]
    %v611 = vld [vmem:[%s1 + $0x724] sm:$0xf]
    %v612 = vld [vmem:[%s1 + $0x728] sm:$0xf]
    %v613 = vld [vmem:[%s1 + $0x72c] sm:$0xf]
    %v614 = vld [vmem:[%s1 + $0x730] sm:$0xf]
    %v615 = vld [vmem:[%s1 + $0x734] sm:$0xf]
    %v616 = vld [vmem:[%s1 + $0x738] sm:$0xf]
    %v617 = vld [vmem:[%s1 + $0x73c] sm:$0xf]
    %v618 = vld [vmem:[%s1 + $0x740] sm:$0xf]
    %v619 = vld [vmem:[%s1 + $0x744] sm:$0xf]
    %v620 = vld [vmem:[%s1 + $0x748] sm:$0xf]
    %v621 = vld [vmem:[%s1 + $0x74c] sm:$0xf]
    %v622 = vld [vmem:[%s1 + $0x750] sm:$0xf]
    %v623 = vld [vmem:[%s1 + $0x754] sm:$0xf]
    %v624 = vld [vmem:[%s1 + $0x758] sm:$0xf]
    %v625 = vld [vmem:[%s1 + $0x75c] sm:$0xf]
    %v626 = vld [vmem:[%s1 + $0x760] sm:$0xf]
    %v627 = vld [vmem:[%s1 + $0x764] sm:$0xf]
    %v628 = vld [vmem:[%s1 + $0x768] sm:$0xf]
    %v629 = vld [vmem:[%s1 + $0x76c] sm:$0xf]
    %v630 = vld [vmem:[%s1 + $0x770] sm:$0xf]
    %v631 = vld [vmem:[%s1 + $0x774] sm:$0xf]
    %v632 = vld [vmem:[%s1 + $0x778] sm:$0xf]
    %v633 = vld [vmem:[%s1 + $0x77c] sm:$0xf]
    %v634 = vld [vmem:[%s1 + $0x780] sm:$0xf]
    %v635 = vld [vmem:[%s1 + $0x784] sm:$0xf]
    %v636 = vld [vmem:[%s1 + $0x788] sm:$0xf]
    %v637 = vld [vmem:[%s1 + $0x78c] sm:$0xf]
    %v638 = vld [vmem:[%s1 + $0x790] sm:$0xf]
    %v639 = vld [vmem:[%s1 + $0x794] sm:$0xf]
    %v640 = vld [vmem:[%s1 + $0x798] sm:$0xf]
    %v641 = vld [vmem:[%s1 + $0x79c] sm:$0xf]
    %v642 = vld [vmem:[%s1 + $0x7a0] sm:$0xf]
    %v643 = vld [vmem:[%s1 + $0x7a4] sm:$0xf]
    %v644 = vld [vmem:[%s1 + $0x7a8] sm:$0xf]
    %v645 = vld [vmem:[%s1 + $0x7ac] sm:$0xf]
    %v646 = vld [vmem:[%s1 + $0x7b0] sm:$0xf]
    %v647 = vld [vmem:[%s1 + $0x7b4] sm:$0xf]
    %v648 = vld [vmem:[%s1 + $0x7b8] sm:$0xf]
    %v649 = vld [vmem:[%s1 + $0x7bc] sm:$0xf]
    %v650 = vld [vmem:[%s1 + $0x7c0] sm:$0xf]
    %v651 = vld [vmem:[%s1 + $0x7c4] sm:$0xf]
    %v652 = vld [vmem:[%s1 + $0x7c8] sm:$0xf]
    %v653 = vld [vmem:[%s1 + $0x7cc] sm:$0xf]
    %v654 = vld [vmem:[%s1 + $0x7d0] sm:$0xf]
    %v655 = vld [vmem:[%s1 + $0x7d4] sm:$0xf]
    %v656 = vld [vmem:[%s1 + $0x7d8] sm:$0xf]
    %v657 = vld [vmem:[%s1 + $0x7dc] sm:$0xf]
    %v658 = vld [vmem:[%s1 + $0x7e0] sm:$0xf]
    %v659 = vld [vmem:[%s1 + $0x7e4] sm:$0xf]
    %v660 = vld [vmem:[%s1 + $0x7e8] sm:$0xf]
    %v661 = vld [vmem:[%s1 + $0x7ec] sm:$0xf]
    %v662 = vld [vmem:[%s1 + $0x7f0] sm:$0xf]
    %v663 = vld [vmem:[%s1 + $0x7f4] sm:$0xf]
    %v664 = vld [vmem:[%s1 + $0x7f8] sm:$0xf]
    %v665 = vld [vmem:[%s1 + $0x7fc] sm:$0xf]
    %v666 = vld [vmem:[%s1 + $0x800] sm:$0xf]
    %v667 = vld [vmem:[%s1 + $0x804] sm:$0xf]
    %v668 = vld [vmem:[%s1 + $0x808] sm:$0xf]
    %v669 = vld [vmem:[%s1 + $0x80c] sm:$0xf]
    %v670 = vld [vmem:[%s1 + $0x810] sm:$0xf]
    %v671 = vld [vmem:[%s1 + $0x814] sm:$0xf]
    %v672 = vld [vmem:[%s1 + $0x818] sm:$0xf]
    %v673 = vld [vmem:[%s1 + $0x81c] sm:$0xf]
    %v674 = vld [vmem:[%s1 + $0x820] sm:$0xf]
    %v675 = vld [vmem:[%s1 + $0x824] sm:$0xf]
    %v676 = vld [vmem:[%s1 + $0x828] sm:$0xf]
    %v677 = vld [vmem:[%s1 + $0x82c] sm:$0xf]
    %v678 = vld [vmem:[%s1 + $0x830] sm:$0xf]
    %v679 = vld [vmem:[%s1 + $0x834] sm:$0xf]
    %v680 = vld [vmem:[%s1 + $0x838] sm:$0xf]
    %v681 = vld [vmem:[%s1 + $0x83c] sm:$0xf]
    %v682 = vld [vmem:[%s1 + $0x840] sm:$0xf]
    %v683 = vld [vmem:[%s1 + $0x844] sm:$0xf]
    %v684 = vld [vmem:[%s1 + $0x848] sm:$0xf]
    %v685 = vld [vmem:[%s1 + $0x84c] sm:$0xf]
    %v686 = vld [vmem:[%s1 + $0x850] sm:$0xf]
    %v687 = vld [vmem:[%s1 + $0x854] sm:$0xf]
    %v688 = vld [vmem:[%s1 + $0x858] sm:$0xf]
    %v689 = vld [vmem:[%s1 + $0x85c] sm:$0xf]
    %v690 = vld [vmem:[%s1 + $0x860] sm:$0xf]
    %v691 = vld [vmem:[%s1 + $0x864] sm:$0xf]
    %v692 = vld [vmem:[%s1 + $0x868] sm:$0xf]
    %v693 = vld [vmem:[%s1 + $0x86c] sm:$0xf]
    %v694 = vld [vmem:[%s1 + $0x870] sm:$0xf]
    %v695 = vld [vmem:[%s1 + $0x874] sm:$0xf]
    %v696 = vld [vmem:[%s1 + $0x878] sm:$0xf]
    %v697 = vld [vmem:[%s1 + $0x87c] sm:$0xf]
    %v698 = vld [vmem:[%s1 + $0x880] sm:$0xf]
    %v699 = vld [vmem:[%s1 + $0x884] sm:$0xf]
    %v700 = vld [vmem:[%s1 + $0x888] sm:$0xf]
    %v701 = vld [vmem:[%s1 + $0x88c] sm:$0xf]
    %v702 = vld [vmem:[%s1 + $0x890] sm:$0xf]
    %v703 = vld [vmem:[%s1 + $0x894] sm:$0xf]
    %v704 = vld [vmem:[%s1 + $0x898] sm:$0xf]
    %v705 = vld [vmem:[%s1 + $0x89c] sm:$0xf]
    %v706 = vld [vmem:[%s1 + $0x8a0] sm:$0xf]
    %v707 = vld [vmem:[%s1 + $0x8a4] sm:$0xf]
    %v708 = vld [vmem:[%s1 + $0x8a8] sm:$0xf]
    %v709 = vld [vmem:[%s1 + $0x8ac] sm:$0xf]
    %v710 = vld [vmem:[%s1 + $0x8b0] sm:$0xf]
    %v711 = vld [vmem:[%s1 + $0x8b4] sm:$0xf]
    %v712 = vld [vmem:[%s1 + $0x8b8] sm:$0xf]
    %v713 = vld [vmem:[%s1 + $0x8bc] sm:$0xf]
    %v714 = vld [vmem:[%s1 + $0x8c0] sm:$0xf]
    %v715 = vld [vmem:[%s1 + $0x8c4] sm:$0xf]
    %v716 = vld [vmem:[%s1 + $0x8c8] sm:$0xf]
    %v717 = vld [vmem:[%s1 + $0x8cc] sm:$0xf]
    %v718 = vld [vmem:[%s1 + $0x8d0] sm:$0xf]
    %v719 = vld [vmem:[%s1 + $0x8d4] sm:$0xf]
    %v720 = vld [vmem:[%s1 + $0x8d8] sm:$0xf]
    %v721 = vld [vmem:[%s1 + $0x8dc] sm:$0xf]
    %v722 = vld [vmem:[%s1 + $0x8e0] sm:$0xf]
    %v723 = vld [vmem:[%s1 + $0x8e4] sm:$0xf]
    %v724 = vld [vmem:[%s1 + $0x8e8] sm:$0xf]
    %v725 = vld [vmem:[%s1 + $0x8ec] sm:$0xf]
    %v726 = vld [vmem:[%s1 + $0x8f0] sm:$0xf]
    %v727 = vld [vmem:[%s1 + $0x8f4] sm:$0xf]
    %v728 = vld [vmem:[%s1 + $0x8f8] sm:$0xf]
    %v729 = vld [vmem:[%s1 + $0x8fc] sm:$0xf]
    %v730 = vld [vmem:[%s1 + $0x900] sm:$0xf]
    %v731 = vld [vmem:[%s1 + $0x904] sm:$0xf]
    %v732 = vld [vmem:[%s1 + $0x908] sm:$0xf]
    %v733 = vld [vmem:[%s1 + $0x90c] sm:$0xf]
    %v734 = vld [vmem:[%s1 + $0x910] sm:$0xf]
    %v735 = vld [vmem:[%s1 + $0x914] sm:$0xf]
    %v736 = vld [vmem:[%s1 + $0x918] sm:$0xf]
    %v737 = vld [vmem:[%s1 + $0x91c] sm:$0xf]
    %v738 = vld [vmem:[%s1 + $0x920] sm:$0xf]
    %v739 = vld [vmem:[%s1 + $0x924] sm:$0xf]
    %v740 = vld [vmem:[%s1 + $0x928] sm:$0xf]
    %v741 = vld [vmem:[%s1 + $0x92c] sm:$0xf]
    %v742 = vld [vmem:[%s1 + $0x930] sm:$0xf]
    %v743 = vld [vmem:[%s1 + $0x934] sm:$0xf]
    %v744 = vld [vmem:[%s1 + $0x938] sm:$0xf]
    %v745 = vld [vmem:[%s1 + $0x93c] sm:$0xf]
    %v746 = vld [vmem:[%s1 + $0x940] sm:$0xf]
    %v747 = vld [vmem:[%s1 + $0x944] sm:$0xf]
    %v748 = vld [vmem:[%s1 + $0x948] sm:$0xf]
    %v749 = vld [vmem:[%s1 + $0x94c] sm:$0xf]
    %v750 = vld [vmem:[%s1 + $0x950] sm:$0xf]
    %v751 = vld [vmem:[%s1 + $0x954] sm:$0xf]
    %v752 = vld [vmem:[%s1 + $0x958] sm:$0xf]
    %v753 = vld [vmem:[%s1 + $0x95c] sm:$0xf]
    %v754 = vld [vmem:[%s1 + $0x960] sm:$0xf]
    %v755 = vld [vmem:[%s1 + $0x964] sm:$0xf]
    %v756 = vld [vmem:[%s1 + $0x968] sm:$0xf]
    %v757 = vld [vmem:[%s1 + $0x96c] sm:$0xf]
    %v758 = vld [vmem:[%s1 + $0x970] sm:$0xf]
    %v759 = vld [vmem:[%s1 + $0x974] sm:$0xf]
    %v760 = vld [vmem:[%s1 + $0x978] sm:$0xf]
    %v761 = vld [vmem:[%s1 + $0x97c] sm:$0xf]
    %v762 = vld [vmem:[%s1 + $0x980] sm:$0xf]
    %v763 = vld [vmem:[%s1 + $0x984] sm:$0xf]
    %v764 = vld [vmem:[%s1 + $0x988] sm:$0xf]
    %v765 = vld [vmem:[%s1 + $0x98c] sm:$0xf]
    %v766 = vld [vmem:[%s1 + $0x990] sm:$0xf]
    %v767 = vld [vmem:[%s1 + $0x994] sm:$0xf]
    %v768 = vld [vmem:[%s1 + $0x998] sm:$0xf]
    %v769 = vld [vmem:[%s1 + $0x99c] sm:$0xf]
    %v770 = vld [vmem:[%s1 + $0x9a0] sm:$0xf]
    %v771 = vld [vmem:[%s1 + $0x9a4] sm:$0xf]
    %v772 = vld [vmem:[%s1 + $0x9a8] sm:$0xf]
    %v773 = vld [vmem:[%s1 + $0x9ac] sm:$0xf]
    %v774 = vld [vmem:[%s1 + $0x9b0] sm:$0xf]
    %v775 = vld [vmem:[%s1 + $0x9b4] sm:$0xf]
    %v776 = vld [vmem:[%s1 + $0x9b8] sm:$0xf]
    %v777 = vld [vmem:[%s1 + $0x9bc] sm:$0xf]
    %v778 = vld [vmem:[%s1 + $0x9c0] sm:$0xf]
    %v779 = vld [vmem:[%s1 + $0x9c4] sm:$0xf]
    %v780 = vld [vmem:[%s1 + $0x9c8] sm:$0xf]
    %v781 = vld [vmem:[%s1 + $0x9cc] sm:$0xf]
    %v782 = vld [vmem:[%s1 + $0x9d0] sm:$0xf]
    %v783 = vld [vmem:[%s1 + $0x9d4] sm:$0xf]
    %v784 = vld [vmem:[%s1 + $0x9d8] sm:$0xf]
    %v785 = vld [vmem:[%s1 + $0x9dc] sm:$0xf]
    %v786 = vld [vmem:[%s1 + $0x9e0] sm:$0xf]
    %v787 = vld [vmem:[%s1 + $0x9e4] sm:$0xf]
    %v788 = vld [vmem:[%s1 + $0x9e8] sm:$0xf]
    %v789 = vld [vmem:[%s1 + $0x9ec] sm:$0xf]
    %v790 = vld [vmem:[%s1 + $0x9f0] sm:$0xf]
    %v791 = vld [vmem:[%s1 + $0x9f4] sm:$0xf]
    %v792 = vld [vmem:[%s1 + $0x9f8] sm:$0xf]
    %v793 = vld [vmem:[%s1 + $0x9fc] sm:$0xf]
    %v794 = vld [vmem:[%s1 + $0xa00] sm:$0xf]
    %v795 = vld [vmem:[%s1 + $0xa04] sm:$0xf]
    %v796 = vld [vmem:[%s1 + $0xa08] sm:$0xf]
    %v797 = vld [vmem:[%s1 + $0xa0c] sm:$0xf]
    %v798 = vld [vmem:[%s1 + $0xa10] sm:$0xf]
    %v799 = vld [vmem:[%s1 + $0xa14] sm:$0xf]
    %v800 = vld [vmem:[%s1 + $0xa18] sm:$0xf]
    %v801 = vld [vmem:[%s1 + $0xa1c] sm:$0xf]
    %v802 = vld [vmem:[%s1 + $0xa20] sm:$0xf]
    %v803 = vld [vmem:[%s1 + $0xa24] sm:$0xf]
    %v804 = vld [vmem:[%s1 + $0xa28] sm:$0xf]
    %v805 = vld [vmem:[%s1 + $0xa2c] sm:$0xf]
    %v806 = vld [vmem:[%s1 + $0xa30] sm:$0xf]
    %v807 = vld [vmem:[%s1 + $0xa34] sm:$0xf]
    %v808 = vld [vmem:[%s1 + $0xa38] sm:$0xf]
    %v809 = vld [vmem:[%s1 + $0xa3c] sm:$0xf]
    %v810 = vld [vmem:[%s1 + $0xa40] sm:$0xf]
    %v811 = vld [vmem:[%s1 + $0xa44] sm:$0xf]
    %v812 = vld [vmem:[%s1 + $0xa48] sm:$0xf]
    %v813 = vld [vmem:[%s1 + $0xa4c] sm:$0xf]
    %v814 = vld [vmem:[%s1 + $0xa50] sm:$0xf]
    %v815 = vld [vmem:[%s1 + $0xa54] sm:$0xf]
    %v816 = vld [vmem:[%s1 + $0xa58] sm:$0xf]
    %v817 = vld [vmem:[%s1 + $0xa5c] sm:$0xf]
    %v818 = vld [vmem:[%s1 + $0xa60] sm:$0xf]
    %v819 = vld [vmem:[%s1 + $0xa64] sm:$0xf]
    %v820 = vld [vmem:[%s1 + $0xa68] sm:$0xf]
    %v821 = vld [vmem:[%s1 + $0xa6c] sm:$0xf]
    %v822 = vld [vmem:[%s1 + $0xa70] sm:$0xf]
    %v823 = vld [vmem:[%s1 + $0xa74] sm:$0xf]
    %v824 = vld [vmem:[%s1 + $0xa78] sm:$0xf]
    %v825 = vld [vmem:[%s1 + $0xa7c] sm:$0xf]
    %v826 = vld [vmem:[%s1 + $0xa80] sm:$0xf]
    %v827 = vld [vmem:[%s1 + $0xa84] sm:$0xf]
    %v828 = vld [vmem:[%s1 + $0xa88] sm:$0xf]
    %v829 = vld [vmem:[%s1 + $0xa8c] sm:$0xf]
    %v830 = vld [vmem:[%s1 + $0xa90] sm:$0xf]
    %v831 = vld [vmem:[%s1 + $0xa94] sm:$0xf]
    %v832 = vld [vmem:[%s1 + $0xa98] sm:$0xf]
    %v833 = vld [vmem:[%s1 + $0xa9c] sm:$0xf]
    %v834 = vld [vmem:[%s1 + $0xaa0] sm:$0xf]
    %v835 = vld [vmem:[%s1 + $0xaa4] sm:$0xf]
    %v836 = vld [vmem:[%s1 + $0xaa8] sm:$0xf]
    %v837 = vld [vmem:[%s1 + $0xaac] sm:$0xf]
    %v838 = vld [vmem:[%s1 + $0xab0] sm:$0xf]
    %v839 = vld [vmem:[%s1 + $0xab4] sm:$0xf]
    %v840 = vld [vmem:[%s1 + $0xab8] sm:$0xf]
    %v841 = vld [vmem:[%s1 + $0xabc] sm:$0xf]
    %v842 = vld [vmem:[%s1 + $0xac0] sm:$0xf]
    %v843 = vld [vmem:[%s1 + $0xac4] sm:$0xf]
    %v844 = vld [vmem:[%s1 + $0xac8] sm:$0xf]
    %v845 = vld [vmem:[%s1 + $0xacc] sm:$0xf]
    %v846 = vld [vmem:[%s1 + $0xad0] sm:$0xf]
    %v847 = vld [vmem:[%s1 + $0xad4] sm:$0xf]
    %v848 = vld [vmem:[%s1 + $0xad8] sm:$0xf]
    %v849 = vld [vmem:[%s1 + $0xadc] sm:$0xf]
    %v850 = vld [vmem:[%s1 + $0xae0] sm:$0xf]
    %v851 = vld [vmem:[%s1 + $0xae4] sm:$0xf]
    %v852 = vld [vmem:[%s1 + $0xae8] sm:$0xf]
    %v853 = vld [vmem:[%s1 + $0xaec] sm:$0xf]
    %v854 = vld [vmem:[%s1 + $0xaf0] sm:$0xf]
    %v855 = vld [vmem:[%s1 + $0xaf4] sm:$0xf]
    %v856 = vld [vmem:[%s1 + $0xaf8] sm:$0xf]
    %v857 = vld [vmem:[%s1 + $0xafc] sm:$0xf]
    %v858 = vld [vmem:[%s1 + $0xb00] sm:$0xf]
    %v859 = vld [vmem:[%s1 + $0xb04] sm:$0xf]
    %v860 = vld [vmem:[%s1 + $0xb08] sm:$0xf]
    %v861 = vld [vmem:[%s1 + $0xb0c] sm:$0xf]
    %v862 = vld [vmem:[%s1 + $0xb10] sm:$0xf]
    %v863 = vld [vmem:[%s1 + $0xb14] sm:$0xf]
    %v864 = vld [vmem:[%s1 + $0xb18] sm:$0xf]
    %v865 = vld [vmem:[%s1 + $0xb1c] sm:$0xf]
    %v866 = vld [vmem:[%s1 + $0xb20] sm:$0xf]
    %v867 = vld [vmem:[%s1 + $0xb24] sm:$0xf]
    %v868 = vld [vmem:[%s1 + $0xb28] sm:$0xf]
    %v869 = vld [vmem:[%s1 + $0xb2c] sm:$0xf]
    %v870 = vld [vmem:[%s1 + $0xb30] sm:$0xf]
    %v871 = vld [vmem:[%s1 + $0xb34] sm:$0xf]
    %v872 = vld [vmem:[%s1 + $0xb38] sm:$0xf]
    %v873 = vld [vmem:[%s1 + $0xb3c] sm:$0xf]
    %v874 = vld [vmem:[%s1 + $0xb40] sm:$0xf]
    %v875 = vld [vmem:[%s1 + $0xb44] sm:$0xf]
    %v876 = vld [vmem:[%s1 + $0xb48] sm:$0xf]
    %v877 = vld [vmem:[%s1 + $0xb4c] sm:$0xf]
    %v878 = vld [vmem:[%s1 + $0xb50] sm:$0xf]
    %v879 = vld [vmem:[%s1 + $0xb54] sm:$0xf]
    %v880 = vld [vmem:[%s1 + $0xb58] sm:$0xf]
    %v881 = vld [vmem:[%s1 + $0xb5c] sm:$0xf]
    %v882 = vld [vmem:[%s1 + $0xb60] sm:$0xf]
    %v883 = vld [vmem:[%s1 + $0xb64] sm:$0xf]
    %v884 = vld [vmem:[%s1 + $0xb68] sm:$0xf]
    %v885 = vld [vmem:[%s1 + $0xb6c] sm:$0xf]
    %v886 = vld [vmem:[%s1 + $0xb70] sm:$0xf]
    %v887 = vld [vmem:[%s1 + $0xb74] sm:$0xf]
    %v888 = vld [vmem:[%s1 + $0xb78] sm:$0xf]
    %v889 = vld [vmem:[%s1 + $0xb7c] sm:$0xf]
    %v890 = vld [vmem:[%s1 + $0xb80] sm:$0xf]
    %v891 = vld [vmem:[%s1 + $0xb84] sm:$0xf]
    %v892 = vld [vmem:[%s1 + $0xb88] sm:$0xf]
    %v893 = vld [vmem:[%s1 + $0xb8c] sm:$0xf]
    %v894 = vld [vmem:[%s1 + $0xb90] sm:$0xf]
    %v895 = vld [vmem:[%s1 + $0xb94] sm:$0xf]
    %v896 = vld [vmem:[%s1 + $0xb98] sm:$0xf]
    %v897 = vld [vmem:[%s1 + $0xb9c] sm:$0xf]
    %v898 = vld [vmem:[%s1 + $0xba0] sm:$0xf]
    %v899 = vld [vmem:[%s1 + $0xba4] sm:$0xf]
    %v900 = vld [vmem:[%s1 + $0xba8] sm:$0xf]
    %v901 = vld [vmem:[%s1 + $0xbac] sm:$0xf]
    %v902 = vld [vmem:[%s1 + $0xbb0] sm:$0xf]
    %v903 = vld [vmem:[%s1 + $0xbb4] sm:$0xf]
    %v904 = vld [vmem:[%s1 + $0xbb8] sm:$0xf]
    %v905 = vld [vmem:[%s1 + $0xbbc] sm:$0xf]
    %v906 = vld [vmem:[%s1 + $0xbc0] sm:$0xf]
    %v907 = vld [vmem:[%s1 + $0xbc4] sm:$0xf]
    %v908 = vld [vmem:[%s1 + $0xbc8] sm:$0xf]
    %v909 = vld [vmem:[%s1 + $0xbcc] sm:$0xf]
    %v910 = vld [vmem:[%s1 + $0xbd0] sm:$0xf]
    %v911 = vld [vmem:[%s1 + $0xbd4] sm:$0xf]
    %v912 = vld [vmem:[%s1 + $0xbd8] sm:$0xf]
    %v913 = vld [vmem:[%s1 + $0xbdc] sm:$0xf]
    %v914 = vld [vmem:[%s1 + $0xbe0] sm:$0xf]
    %v915 = vld [vmem:[%s1 + $0xbe4] sm:$0xf]
    %v916 = vld [vmem:[%s1 + $0xbe8] sm:$0xf]
    %v917 = vld [vmem:[%s1 + $0xbec] sm:$0xf]
    %v918 = vld [vmem:[%s1 + $0xbf0] sm:$0xf]
    %v919 = vld [vmem:[%s1 + $0xbf4] sm:$0xf]
    %v920 = vld [vmem:[%s1 + $0xbf8] sm:$0xf]
    %v921 = vld [vmem:[%s1 + $0xbfc] sm:$0xf]
    %v922 = vld [vmem:[%s1 + $0xc00] sm:$0xf]
    %v923 = vld [vmem:[%s1 + $0xc04] sm:$0xf]
    %v924 = vld [vmem:[%s1 + $0xc08] sm:$0xf]
    %v925 = vld [vmem:[%s1 + $0xc0c] sm:$0xf]
    %v926 = vld [vmem:[%s1 + $0xc10] sm:$0xf]
    %v927 = vld [vmem:[%s1 + $0xc14] sm:$0xf]
    %v928 = vld [vmem:[%s1 + $0xc18] sm:$0xf]
    %v929 = vld [vmem:[%s1 + $0xc1c] sm:$0xf]
    %v930 = vld [vmem:[%s1 + $0xc20] sm:$0xf]
    %v931 = vld [vmem:[%s1 + $0xc24] sm:$0xf]
    %v932 = vld [vmem:[%s1 + $0xc28] sm:$0xf]
    %v933 = vld [vmem:[%s1 + $0xc2c] sm:$0xf]
    %v934 = vld [vmem:[%s1 + $0xc30] sm:$0xf]
    %v935 = vld [vmem:[%s1 + $0xc34] sm:$0xf]
    %v936 = vld [vmem:[%s1 + $0xc38] sm:$0xf]
    %v937 = vld [vmem:[%s1 + $0xc3c] sm:$0xf]
    %v938 = vld [vmem:[%s1 + $0xc40] sm:$0xf]
    %v939 = vld [vmem:[%s1 + $0xc44] sm:$0xf]
    %v940 = vld [vmem:[%s1 + $0xc48] sm:$0xf]
    %v941 = vld [vmem:[%s1 + $0xc4c] sm:$0xf]
    %v942 = vld [vmem:[%s1 + $0xc50] sm:$0xf]
    %v943 = vld [vmem:[%s1 + $0xc54] sm:$0xf]
    %v944 = vld [vmem:[%s1 + $0xc58] sm:$0xf]
    %v945 = vld [vmem:[%s1 + $0xc5c] sm:$0xf]
    %v946 = vld [vmem:[%s1 + $0xc60] sm:$0xf]
    %v947 = vld [vmem:[%s1 + $0xc64] sm:$0xf]
    %v948 = vld [vmem:[%s1 + $0xc68] sm:$0xf]
    %v949 = vld [vmem:[%s1 + $0xc6c] sm:$0xf]
    %v950 = vld [vmem:[%s1 + $0xc70] sm:$0xf]
    %v951 = vld [vmem:[%s1 + $0xc74] sm:$0xf]
    %v952 = vld [vmem:[%s1 + $0xc78] sm:$0xf]
    %v953 = vld [vmem:[%s1 + $0xc7c] sm:$0xf]
    %v954 = vld [vmem:[%s1 + $0xc80] sm:$0xf]
    %v955 = vld [vmem:[%s1 + $0xc84] sm:$0xf]
    %v956 = vld [vmem:[%s1 + $0xc88] sm:$0xf]
    %v957 = vld [vmem:[%s1 + $0xc8c] sm:$0xf]
    %v958 = vld [vmem:[%s1 + $0xc90] sm:$0xf]
    %v959 = vld [vmem:[%s1 + $0xc94] sm:$0xf]
    %v960 = vld [vmem:[%s1 + $0xc98] sm:$0xf]
    %v961 = vld [vmem:[%s1 + $0xc9c] sm:$0xf]
    %v962 = vld [vmem:[%s1 + $0xca0] sm:$0xf]
    %v963 = vld [vmem:[%s1 + $0xca4] sm:$0xf]
    %v964 = vld [vmem:[%s1 + $0xca8] sm:$0xf]
    %v965 = vld [vmem:[%s1 + $0xcac] sm:$0xf]
    %v966 = vld [vmem:[%s1 + $0xcb0] sm:$0xf]
    %v967 = vld [vmem:[%s1 + $0xcb4] sm:$0xf]
    %v968 = vld [vmem:[%s1 + $0xcb8] sm:$0xf]
    %v969 = vld [vmem:[%s1 + $0xcbc] sm:$0xf]
    %v970 = vld [vmem:[%s1 + $0xcc0] sm:$0xf]
    %v971 = vld [vmem:[%s1 + $0xcc4] sm:$0xf]
    %v972 = vld [vmem:[%s1 + $0xcc8] sm:$0xf]
    %v973 = vld [vmem:[%s1 + $0xccc] sm:$0xf]
    %v974 = vld [vmem:[%s1 + $0xcd0] sm:$0xf]
    %v975 = vld [vmem:[%s1 + $0xcd4] sm:$0xf]
    %v976 = vld [vmem:[%s1 + $0xcd8] sm:$0xf]
    %v977 = vld [vmem:[%s1 + $0xcdc] sm:$0xf]
    %v978 = vld [vmem:[%s1 + $0xce0] sm:$0xf]
    %v979 = vld [vmem:[%s1 + $0xce4] sm:$0xf]
    %v980 = vld [vmem:[%s1 + $0xce8] sm:$0xf]
    %v981 = vld [vmem:[%s1 + $0xcec] sm:$0xf]
    %v982 = vld [vmem:[%s1 + $0xcf0] sm:$0xf]
    %v983 = vld [vmem:[%s1 + $0xcf4] sm:$0xf]
    %v984 = vld [vmem:[%s1 + $0xcf8] sm:$0xf]
    %v985 = vld [vmem:[%s1 + $0xcfc] sm:$0xf]
    %v986 = vld [vmem:[%s1 + $0xd00] sm:$0xf]
    %v987 = vld [vmem:[%s1 + $0xd04] sm:$0xf]
    %v988 = vld [vmem:[%s1 + $0xd08] sm:$0xf]
    %v989 = vld [vmem:[%s1 + $0xd0c] sm:$0xf]
    %v990 = vld [vmem:[%s1 + $0xd10] sm:$0xf]
    %v991 = vld [vmem:[%s1 + $0xd14] sm:$0xf]
    %v992 = vld [vmem:[%s1 + $0xd18] sm:$0xf]
    %v993 = vld [vmem:[%s1 + $0xd1c] sm:$0xf]
    %v994 = vld [vmem:[%s1 + $0xd20] sm:$0xf]
    %v995 = vld [vmem:[%s1 + $0xd24] sm:$0xf]
    %v996 = vld [vmem:[%s1 + $0xd28] sm:$0xf]
    %v997 = vld [vmem:[%s1 + $0xd2c] sm:$0xf]
    %v998 = vld [vmem:[%s1 + $0xd30] sm:$0xf]
    %v999 = vld [vmem:[%s1 + $0xd34] sm:$0xf]
    %v1000 = vld [vmem:[%s1 + $0xd38] sm:$0xf]
    %v1001 = vld [vmem:[%s1 + $0xd3c] sm:$0xf]
    %v1002 = vld [vmem:[%s1 + $0xd40] sm:$0xf]
    %v1003 = vld [vmem:[%s1 + $0xd44] sm:$0xf]
    %v1004 = vld [vmem:[%s1 + $0xd48] sm:$0xf]
    %v1005 = vld [vmem:[%s1 + $0xd4c] sm:$0xf]
    %v1006 = vld [vmem:[%s1 + $0xd50] sm:$0xf]
    %v1007 = vld [vmem:[%s1 + $0xd54] sm:$0xf]
    %v1008 = vld [vmem:[%s1 + $0xd58] sm:$0xf]
    %v1009 = vld [vmem:[%s1 + $0xd5c] sm:$0xf]
    %v1010 = vld [vmem:[%s1 + $0xd60] sm:$0xf]
    %v1011 = vld [vmem:[%s1 + $0xd64] sm:$0xf]
    %v1012 = vld [vmem:[%s1 + $0xd68] sm:$0xf]
    %v1013 = vld [vmem:[%s1 + $0xd6c] sm:$0xf]
    %v1014 = vld [vmem:[%s1 + $0xd70] sm:$0xf]
    %v1015 = vld [vmem:[%s1 + $0xd74] sm:$0xf]
    %v1016 = vld [vmem:[%s1 + $0xd78] sm:$0xf]
    %v1017 = vld [vmem:[%s1 + $0xd7c] sm:$0xf]
    %v1018 = vld [vmem:[%s1 + $0xd80] sm:$0xf]
    %v1019 = vld [vmem:[%s1 + $0xd84] sm:$0xf]
    %v1020 = vld [vmem:[%s1 + $0xd88] sm:$0xf]
    %v1021 = vld [vmem:[%s1 + $0xd8c] sm:$0xf]
    %v1022 = vld [vmem:[%s1 + $0xd90] sm:$0xf]
    %v1023 = vld [vmem:[%s1 + $0xd94] sm:$0xf]
    %v1024 = vld [vmem:[%s1 + $0xd98] sm:$0xf]
    %v1025 = vld [vmem:[%s1 + $0xd9c] sm:$0xf]
    %v1026 = vld [vmem:[%s1 + $0xda0] sm:$0xf]
    %v1027 = vld [vmem:[%s1 + $0xda4] sm:$0xf]
    %v1028 = vld [vmem:[%s1 + $0xda8] sm:$0xf]
    %v1029 = vld [vmem:[%s1 + $0xdac] sm:$0xf]
    %v1030 = vld [vmem:[%s1 + $0xdb0] sm:$0xf]
    %v1031 = vld [vmem:[%s1 + $0xdb4] sm:$0xf]
    %v1032 = vld [vmem:[%s1 + $0xdb8] sm:$0xf]
    %v1033 = vld [vmem:[%s1 + $0xdbc] sm:$0xf]
    %v1034 = vld [vmem:[%s1 + $0xdc0] sm:$0xf]
    %v1035 = vld [vmem:[%s1 + $0xdc4] sm:$0xf]
    %v1036 = vld [vmem:[%s1 + $0xdc8] sm:$0xf]
    %v1037 = vld [vmem:[%s1 + $0xdcc] sm:$0xf]
    %v1038 = vld [vmem:[%s1 + $0xdd0] sm:$0xf]
    %v1039 = vld [vmem:[%s1 + $0xdd4] sm:$0xf]
    %v1040 = vld [vmem:[%s1 + $0xdd8] sm:$0xf]
    %v1041 = vld [vmem:[%s1 + $0xddc] sm:$0xf]
    %v1042 = vld [vmem:[%s1 + $0xde0] sm:$0xf]
    %v1043 = vld [vmem:[%s1 + $0xde4] sm:$0xf]
    %v1044 = vld [vmem:[%s1 + $0xde8] sm:$0xf]
    %v1045 = vld [vmem:[%s1 + $0xdec] sm:$0xf]
    %v1046 = vld [vmem:[%s1 + $0xdf0] sm:$0xf]
    %v1047 = vld [vmem:[%s1 + $0xdf4] sm:$0xf]
    %v1048 = vld [vmem:[%s1 + $0xdf8] sm:$0xf]
    %v1049 = vld [vmem:[%s1 + $0xdfc] sm:$0xf]
    %v1050 = vld [vmem:[%s1 + $0xe00] sm:$0xf]
    %v1051 = vld [vmem:[%s1 + $0xe04] sm:$0xf]
    %v1052 = vld [vmem:[%s1 + $0xe08] sm:$0xf]
    %v1053 = vld [vmem:[%s1 + $0xe0c] sm:$0xf]
    %v1054 = vld [vmem:[%s1 + $0xe10] sm:$0xf]
    %v1055 = vld [vmem:[%s1 + $0xe14] sm:$0xf]
    %v1056 = vld [vmem:[%s1 + $0xe18] sm:$0xf]
    %v1057 = vld [vmem:[%s1 + $0xe1c] sm:$0xf]
    %v1058 = vld [vmem:[%s1 + $0xe20] sm:$0xf]
    %v1059 = vld [vmem:[%s1 + $0xe24] sm:$0xf]
    %v1060 = vld [vmem:[%s1 + $0xe28] sm:$0xf]
    %v1061 = vld [vmem:[%s1 + $0xe2c] sm:$0xf]
    %v1062 = vld [vmem:[%s1 + $0xe30] sm:$0xf]
    %v1063 = vld [vmem:[%s1 + $0xe34] sm:$0xf]
    %v1064 = vld [vmem:[%s1 + $0xe38] sm:$0xf]
    %v1065 = vld [vmem:[%s1 + $0xe3c] sm:$0xf]
    %v1066 = vld [vmem:[%s1 + $0xe40] sm:$0xf]
    %v1067 = vld [vmem:[%s1 + $0xe44] sm:$0xf]
    %v1068 = vld [vmem:[%s1 + $0xe48] sm:$0xf]
    %v1069 = vld [vmem:[%s1 + $0xe4c] sm:$0xf]
    %v1070 = vld [vmem:[%s1 + $0xe50] sm:$0xf]
    %v1071 = vld [vmem:[%s1 + $0xe54] sm:$0xf]
    %v1072 = vld [vmem:[%s1 + $0xe58] sm:$0xf]
    %v1073 = vld [vmem:[%s1 + $0xe5c] sm:$0xf]
    %v1074 = vld [vmem:[%s1 + $0xe60] sm:$0xf]
    %v1075 = vld [vmem:[%s1 + $0xe64] sm:$0xf]
    %v1076 = vld [vmem:[%s1 + $0xe68] sm:$0xf]
    %v1077 = vld [vmem:[%s1 + $0xe6c] sm:$0xf]
    %v1078 = vld [vmem:[%s1 + $0xe70] sm:$0xf]
    %v1079 = vld [vmem:[%s1 + $0xe74] sm:$0xf]
    %v1080 = vld [vmem:[%s1 + $0xe78] sm:$0xf]
    %v1081 = vld [vmem:[%s1 + $0xe7c] sm:$0xf]
    %v1082 = vld [vmem:[%s1 + $0xe80] sm:$0xf]
    %v1083 = vld [vmem:[%s1 + $0xe84] sm:$0xf]
    %v1084 = vld [vmem:[%s1 + $0xe88] sm:$0xf]
    %v1085 = vld [vmem:[%s1 + $0xe8c] sm:$0xf]
    %v1086 = vld [vmem:[%s1 + $0xe90] sm:$0xf]
    %v1087 = vld [vmem:[%s1 + $0xe94] sm:$0xf]
    %v1088 = vld [vmem:[%s1 + $0xe98] sm:$0xf]
    %v1089 = vld [vmem:[%s1 + $0xe9c] sm:$0xf]
    %v1090 = vld [vmem:[%s1 + $0xea0] sm:$0xf]
    %v1091 = vld [vmem:[%s1 + $0xea4] sm:$0xf]
    %v1092 = vld [vmem:[%s1 + $0xea8] sm:$0xf]
    %v1093 = vld [vmem:[%s1 + $0xeac] sm:$0xf]
    %v1094 = vld [vmem:[%s1 + $0xeb0] sm:$0xf]
    %v1095 = vld [vmem:[%s1 + $0xeb4] sm:$0xf]
    %v1096 = vld [vmem:[%s1 + $0xeb8] sm:$0xf]
    %v1097 = vld [vmem:[%s1 + $0xebc] sm:$0xf]
    %v1098 = vld [vmem:[%s1 + $0xec0] sm:$0xf]
    %v1099 = vld [vmem:[%s1 + $0xec4] sm:$0xf]
    %v1100 = vld [vmem:[%s1 + $0xec8] sm:$0xf]
    %v1101 = vld [vmem:[%s1 + $0xecc] sm:$0xf]
    %v1102 = vld [vmem:[%s1 + $0xed0] sm:$0xf]
    %v1103 = vld [vmem:[%s1 + $0xed4] sm:$0xf]
    %v1104 = vld [vmem:[%s1 + $0xed8] sm:$0xf]
    %v1105 = vld [vmem:[%s1 + $0xedc] sm:$0xf]
    %v1106 = vld [vmem:[%s1 + $0xee0] sm:$0xf]
    %v1107 = vld [vmem:[%s1 + $0xee4] sm:$0xf]
    %v1108 = vld [vmem:[%s1 + $0xee8] sm:$0xf]
    %v1109 = vld [vmem:[%s1 + $0xeec] sm:$0xf]
    %v1110 = vld [vmem:[%s1 + $0xef0] sm:$0xf]
    %v1111 = vld [vmem:[%s1 + $0xef4] sm:$0xf]
    %v1112 = vld [vmem:[%s1 + $0xef8] sm:$0xf]
    %v1113 = vld [vmem:[%s1 + $0xefc] sm:$0xf]
    %v1114 = vld [vmem:[%s1 + $0xf00] sm:$0xf]
    %v1115 = vld [vmem:[%s1 + $0xf04] sm:$0xf]
    %v1116 = vld [vmem:[%s1 + $0xf08] sm:$0xf]
    %v1117 = vld [vmem:[%s1 + $0xf0c] sm:$0xf]
    %v1118 = vld [vmem:[%s1 + $0xf10] sm:$0xf]
    %v1119 = vld [vmem:[%s1 + $0xf14] sm:$0xf]
    %v1120 = vld [vmem:[%s1 + $0xf18] sm:$0xf]
    %v1121 = vld [vmem:[%s1 + $0xf1c] sm:$0xf]
    %v1122 = vld [vmem:[%s1 + $0xf20] sm:$0xf]
    %v1123 = vld [vmem:[%s1 + $0xf24] sm:$0xf]
    %v1124 = vld [vmem:[%s1 + $0xf28] sm:$0xf]
    %v1125 = vld [vmem:[%s1 + $0xf2c] sm:$0xf]
    %v1126 = vld [vmem:[%s1 + $0xf30] sm:$0xf]
    %v1127 = vld [vmem:[%s1 + $0xf34] sm:$0xf]
    %v1128 = vld [vmem:[%s1 + $0xf38] sm:$0xf]
    %v1129 = vld [vmem:[%s1 + $0xf3c] sm:$0xf]
    %v1130 = vld [vmem:[%s1 + $0xf40] sm:$0xf]
    %v1131 = vld [vmem:[%s1 + $0xf44] sm:$0xf]
    %v1132 = vld [vmem:[%s1 + $0xf48] sm:$0xf]
    %v1133 = vld [vmem:[%s1 + $0xf4c] sm:$0xf]
    %v1134 = vld [vmem:[%s1 + $0xf50] sm:$0xf]
    %v1135 = vld [vmem:[%s1 + $0xf54] sm:$0xf]
    %v1136 = vld [vmem:[%s1 + $0xf58] sm:$0xf]
    %v1137 = vld [vmem:[%s1 + $0xf5c] sm:$0xf]
    %v1138 = vld [vmem:[%s1 + $0xf60] sm:$0xf]
    %v1139 = vld [vmem:[%s1 + $0xf64] sm:$0xf]
    %v1140 = vld [vmem:[%s1 + $0xf68] sm:$0xf]
    %v1141 = vld [vmem:[%s1 + $0xf6c] sm:$0xf]
    %v1142 = vld [vmem:[%s1 + $0xf70] sm:$0xf]
    %v1143 = vld [vmem:[%s1 + $0xf74] sm:$0xf]
    %v1144 = vld [vmem:[%s1 + $0xf78] sm:$0xf]
    %v1145 = vld [vmem:[%s1 + $0xf7c] sm:$0xf]
    %v1146 = vld [vmem:[%s1 + $0xf80] sm:$0xf]
    %v1147 = vld [vmem:[%s1 + $0xf84] sm:$0xf]
    %v1148 = vld [vmem:[%s1 + $0xf88] sm:$0xf]
    %v1149 = vld [vmem:[%s1 + $0xf8c] sm:$0xf]
    %v1150 = vld [vmem:[%s1 + $0xf90] sm:$0xf]
    %v1151 = vld [vmem:[%s1 + $0xf94] sm:$0xf]
    %v1152 = vld [vmem:[%s1 + $0xf98] sm:$0xf]
    %v1153 = vld [vmem:[%s1 + $0xf9c] sm:$0xf]
    %v1154 = vld [vmem:[%s1 + $0xfa0] sm:$0xf]
    %v1155 = vld [vmem:[%s1 + $0xfa4] sm:$0xf]
    %v1156 = vld [vmem:[%s1 + $0xfa8] sm:$0xf]
    %v1157 = vld [vmem:[%s1 + $0xfac] sm:$0xf]
    %v1158 = vld [vmem:[%s1 + $0xfb0] sm:$0xf]
    %v1159 = vld [vmem:[%s1 + $0xfb4] sm:$0xf]
    %v1160 = vld [vmem:[%s1 + $0xfb8] sm:$0xf]
    %v1161 = vld [vmem:[%s1 + $0xfbc] sm:$0xf]
    %v1162 = vld [vmem:[%s1 + $0xfc0] sm:$0xf]
    %v1163 = vld [vmem:[%s1 + $0xfc4] sm:$0xf]
    %v1164 = vld [vmem:[%s1 + $0xfc8] sm:$0xf]
    %v1165 = vld [vmem:[%s1 + $0xfcc] sm:$0xf]
    %v1166 = vld [vmem:[%s1 + $0xfd0] sm:$0xf]
    %v1167 = vld [vmem:[%s1 + $0xfd4] sm:$0xf]
    %v1168 = vld [vmem:[%s1 + $0xfd8] sm:$0xf]
    %v1169 = vld [vmem:[%s1 + $0xfdc] sm:$0xf]
    %v1170 = vld [vmem:[%s1 + $0xfe0] sm:$0xf]
    %v1171 = vld [vmem:[%s1 + $0xfe4] sm:$0xf]
    %v1172 = vld [vmem:[%s1 + $0xfe8] sm:$0xf]
    %v1173 = vld [vmem:[%s1 + $0xfec] sm:$0xf]
    %v1174 = vld [vmem:[%s1 + $0xff0] sm:$0xf]
    %v1175 = vld [vmem:[%s1 + $0xff4] sm:$0xf]
    %v1176 = vld [vmem:[%s1 + $0xff8] sm:$0xf]
    %v1177 = vld [vmem:[%s1 + $0xffc] sm:$0xf]
    %v1178 = vld [vmem:[%s1 + $0x1000] sm:$0xf]
    %v1179 = vld [vmem:[%s1 + $0x1004] sm:$0xf]
    %v1180 = vld [vmem:[%s1 + $0x1008] sm:$0xf]
    %v1181 = vld [vmem:[%s1 + $0x100c] sm:$0xf]
    %v1182 = vld [vmem:[%s1 + $0x1010] sm:$0xf]
    %v1183 = vld [vmem:[%s1 + $0x1014] sm:$0xf]
    %v1184 = vld [vmem:[%s1 + $0x1018] sm:$0xf]
    %v1185 = vld [vmem:[%s1 + $0x101c] sm:$0xf]
    %v1186 = vld [vmem:[%s1 + $0x1020] sm:$0xf]
    %v1187 = vld [vmem:[%s1 + $0x1024] sm:$0xf]
    %v1188 = vld [vmem:[%s1 + $0x1028] sm:$0xf]
    %v1189 = vld [vmem:[%s1 + $0x102c] sm:$0xf]
    %v1190 = vld [vmem:[%s1 + $0x1030] sm:$0xf]
    %v1191 = vld [vmem:[%s1 + $0x1034] sm:$0xf]
    %v1192 = vld [vmem:[%s1 + $0x1038] sm:$0xf]
    %v1193 = vld [vmem:[%s1 + $0x103c] sm:$0xf]
    %v1194 = vld [vmem:[%s1 + $0x1040] sm:$0xf]
    %v1195 = vld [vmem:[%s1 + $0x1044] sm:$0xf]
    %v1196 = vld [vmem:[%s1 + $0x1048] sm:$0xf]
    %v1197 = vld [vmem:[%s1 + $0x104c] sm:$0xf]
    %v1198 = vld [vmem:[%s1 + $0x1050] sm:$0xf]
    %v1199 = vld [vmem:[%s1 + $0x1054] sm:$0xf]
    %v1200 = vld [vmem:[%s1 + $0x1058] sm:$0xf]
    %v1201 = vld [vmem:[%s1 + $0x105c] sm:$0xf]
    %v1202 = vld [vmem:[%s1 + $0x1060] sm:$0xf]
    %v1203 = vld [vmem:[%s1 + $0x1064] sm:$0xf]
    %v1204 = vld [vmem:[%s2] sm:$0x1]
    %v1206 = vlaneseq
    %v1207 = vshrl.u32 %v1206, 7
    %v1208 = vsub.s32 0, %v1207
    %v1209 = vrot.slane %v1204, %v1208
    %v2261 = vunpack.c.l.b16 %v154
    %v2262 = vunpack.c.l.b16 %v155
    %v2263 = vunpack.c.l.b16 %v156
    %v2264 = vunpack.c.l.b16 %v157
    %v2265 = vunpack.c.l.b16 %v158
    %v2266 = vunpack.c.l.b16 %v159
    %v2267 = vunpack.c.l.b16 %v160
    %v2268 = vunpack.c.l.b16 %v161
    %v2269 = vunpack.c.l.b16 %v162
    %v2270 = vunpack.c.l.b16 %v163
    %v2271 = vunpack.c.l.b16 %v164
    %v2272 = vunpack.c.l.b16 %v165
    %v2273 = vunpack.c.l.b16 %v166
    %v2274 = vunpack.c.l.b16 %v167
    %v2275 = vunpack.c.l.b16 %v168
    %v2276 = vunpack.c.l.b16 %v169
    %v2277 = vunpack.c.l.b16 %v170
    %v2278 = vunpack.c.l.b16 %v171
    %v2279 = vunpack.c.l.b16 %v172
    %v2280 = vunpack.c.l.b16 %v173
    %v2281 = vunpack.c.l.b16 %v174
    %v2282 = vunpack.c.l.b16 %v175
    %v2283 = vunpack.c.l.b16 %v176
    %v2284 = vunpack.c.l.b16 %v177
    %v2285 = vunpack.c.l.b16 %v178
    %v2286 = vunpack.c.l.b16 %v179
    %v2287 = vunpack.c.l.b16 %v180
    %v2288 = vunpack.c.l.b16 %v181
    %v2289 = vunpack.c.l.b16 %v182
    %v2290 = vunpack.c.l.b16 %v183
    %v2291 = vunpack.c.l.b16 %v184
    %v2292 = vunpack.c.l.b16 %v185
    %v2293 = vunpack.c.l.b16 %v186
    %v2294 = vunpack.c.l.b16 %v187
    %v2295 = vunpack.c.l.b16 %v188
    %v2296 = vunpack.c.l.b16 %v189
    %v2297 = vunpack.c.l.b16 %v190
    %v2298 = vunpack.c.l.b16 %v191
    %v2299 = vunpack.c.l.b16 %v192
    %v2300 = vunpack.c.l.b16 %v193
    %v2301 = vunpack.c.l.b16 %v194
    %v2302 = vunpack.c.l.b16 %v195
    %v2303 = vunpack.c.l.b16 %v196
    %v2304 = vunpack.c.l.b16 %v197
    %v2305 = vunpack.c.l.b16 %v198
    %v2306 = vunpack.c.l.b16 %v199
    %v2307 = vunpack.c.l.b16 %v200
    %v2308 = vunpack.c.l.b16 %v201
    %v2309 = vunpack.c.l.b16 %v202
    %v2310 = vunpack.c.l.b16 %v203
    %v2311 = vunpack.c.l.b16 %v204
    %v2312 = vunpack.c.l.b16 %v205
    %v2313 = vunpack.c.l.b16 %v206
    %v2314 = vunpack.c.l.b16 %v207
    %v2315 = vunpack.c.l.b16 %v208
    %v2316 = vunpack.c.l.b16 %v209
    %v2317 = vunpack.c.l.b16 %v210
    %v2318 = vunpack.c.l.b16 %v211
    %v2319 = vunpack.c.l.b16 %v212
    %v2320 = vunpack.c.l.b16 %v213
    %v2321 = vunpack.c.l.b16 %v214
    %v2322 = vunpack.c.l.b16 %v215
    %v2323 = vunpack.c.l.b16 %v216
    %v2324 = vunpack.c.l.b16 %v217
    %v2325 = vunpack.c.l.b16 %v218
    %v2326 = vunpack.c.l.b16 %v219
    %v2327 = vunpack.c.l.b16 %v220
    %v2328 = vunpack.c.l.b16 %v221
    %v2329 = vunpack.c.l.b16 %v222
    %v2330 = vunpack.c.l.b16 %v223
    %v2331 = vunpack.c.l.b16 %v224
    %v2332 = vunpack.c.l.b16 %v225
    %v2333 = vunpack.c.l.b16 %v226
    %v2334 = vunpack.c.l.b16 %v227
    %v2335 = vunpack.c.l.b16 %v228
    %v2336 = vunpack.c.l.b16 %v229
    %v2337 = vunpack.c.l.b16 %v230
    %v2338 = vunpack.c.l.b16 %v231
    %v2339 = vunpack.c.l.b16 %v232
    %v2340 = vunpack.c.l.b16 %v233
    %v2341 = vunpack.c.l.b16 %v234
    %v2342 = vunpack.c.l.b16 %v235
    %v2343 = vunpack.c.l.b16 %v236
    %v2344 = vunpack.c.l.b16 %v237
    %v2345 = vunpack.c.l.b16 %v238
    %v2346 = vunpack.c.l.b16 %v239
    %v2347 = vunpack.c.l.b16 %v240
    %v2348 = vunpack.c.l.b16 %v241
    %v2349 = vunpack.c.l.b16 %v242
    %v2350 = vunpack.c.l.b16 %v243
    %v2351 = vunpack.c.l.b16 %v244
    %v2352 = vunpack.c.l.b16 %v245
    %v2353 = vunpack.c.l.b16 %v246
    %v2354 = vunpack.c.l.b16 %v247
    %v2355 = vunpack.c.l.b16 %v248
    %v2356 = vunpack.c.l.b16 %v249
    %v2357 = vunpack.c.l.b16 %v250
    %v2358 = vunpack.c.l.b16 %v251
    %v2359 = vunpack.c.l.b16 %v252
    %v2360 = vunpack.c.l.b16 %v253
    %v2361 = vunpack.c.l.b16 %v254
    %v2362 = vunpack.c.l.b16 %v255
    %v2363 = vunpack.c.l.b16 %v256
    %v2364 = vunpack.c.l.b16 %v257
    %v2365 = vunpack.c.l.b16 %v258
    %v2366 = vunpack.c.l.b16 %v259
    %v2367 = vunpack.c.l.b16 %v260
    %v2368 = vunpack.c.l.b16 %v261
    %v2369 = vunpack.c.l.b16 %v262
    %v2370 = vunpack.c.l.b16 %v263
    %v2371 = vunpack.c.l.b16 %v264
    %v2372 = vunpack.c.l.b16 %v265
    %v2373 = vunpack.c.l.b16 %v266
    %v2374 = vunpack.c.l.b16 %v267
    %v2375 = vunpack.c.l.b16 %v268
    %v2376 = vunpack.c.l.b16 %v269
    %v2377 = vunpack.c.l.b16 %v270
    %v2378 = vunpack.c.l.b16 %v271
    %v2379 = vunpack.c.l.b16 %v272
    %v2380 = vunpack.c.l.b16 %v273
    %v2381 = vunpack.c.l.b16 %v274
    %v2382 = vunpack.c.l.b16 %v275
    %v2383 = vunpack.c.l.b16 %v276
    %v2384 = vunpack.c.l.b16 %v277
    %v2385 = vunpack.c.l.b16 %v278
    %v2386 = vunpack.c.l.b16 %v279
    %v2387 = vunpack.c.l.b16 %v280
    %v2388 = vunpack.c.l.b16 %v281
    %v2389 = vunpack.c.l.b16 %v282
    %v2390 = vunpack.c.l.b16 %v283
    %v2391 = vunpack.c.l.b16 %v284
    %v2392 = vunpack.c.l.b16 %v285
    %v2393 = vunpack.c.l.b16 %v286
    %v2394 = vunpack.c.l.b16 %v287
    %v2395 = vunpack.c.l.b16 %v288
    %v2396 = vunpack.c.l.b16 %v289
    %v2397 = vunpack.c.l.b16 %v290
    %v2398 = vunpack.c.l.b16 %v291
    %v2399 = vunpack.c.l.b16 %v292
    %v2400 = vunpack.c.l.b16 %v293
    %v2401 = vunpack.c.l.b16 %v294
    %v2402 = vunpack.c.l.b16 %v295
    %v2403 = vunpack.c.l.b16 %v296
    %v2404 = vunpack.c.l.b16 %v297
    %v2405 = vunpack.c.l.b16 %v298
    %v2406 = vunpack.c.l.b16 %v299
    %v2407 = vunpack.c.l.b16 %v300
    %v2408 = vunpack.c.l.b16 %v301
    %v2409 = vunpack.c.l.b16 %v302
    %v2410 = vunpack.c.l.b16 %v303
    %v2411 = vunpack.c.l.b16 %v304
    %v2412 = vunpack.c.l.b16 %v305
    %v2413 = vunpack.c.l.b16 %v306
    %v2414 = vunpack.c.l.b16 %v307
    %v2415 = vunpack.c.l.b16 %v308
    %v2416 = vunpack.c.l.b16 %v309
    %v2417 = vunpack.c.l.b16 %v310
    %v2418 = vunpack.c.l.b16 %v311
    %v2419 = vunpack.c.l.b16 %v312
    %v2420 = vunpack.c.l.b16 %v313
    %v2421 = vunpack.c.l.b16 %v314
    %v2422 = vunpack.c.l.b16 %v315
    %v2423 = vunpack.c.l.b16 %v316
    %v2424 = vunpack.c.l.b16 %v317
    %v2425 = vunpack.c.l.b16 %v318
    %v2426 = vunpack.c.l.b16 %v319
    %v2427 = vunpack.c.l.b16 %v320
    %v2428 = vunpack.c.l.b16 %v321
    %v2429 = vunpack.c.l.b16 %v322
    %v2430 = vunpack.c.l.b16 %v323
    %v2431 = vunpack.c.l.b16 %v324
    %v2432 = vunpack.c.l.b16 %v325
    %v2433 = vunpack.c.l.b16 %v326
    %v2434 = vunpack.c.l.b16 %v327
    %v2435 = vunpack.c.l.b16 %v328
    %v2436 = vunpack.c.l.b16 %v329
    %v2437 = vunpack.c.l.b16 %v330
    %v2438 = vunpack.c.l.b16 %v331
    %v2439 = vunpack.c.l.b16 %v332
    %v2440 = vunpack.c.l.b16 %v333
    %v2441 = vunpack.c.l.b16 %v334
    %v2442 = vunpack.c.l.b16 %v335
    %v2443 = vunpack.c.l.b16 %v336
    %v2444 = vunpack.c.l.b16 %v337
    %v2445 = vunpack.c.l.b16 %v338
    %v2446 = vunpack.c.l.b16 %v339
    %v2447 = vunpack.c.l.b16 %v340
    %v2448 = vunpack.c.l.b16 %v341
    %v2449 = vunpack.c.l.b16 %v342
    %v2450 = vunpack.c.l.b16 %v343
    %v2451 = vunpack.c.l.b16 %v344
    %v2452 = vunpack.c.l.b16 %v345
    %v2453 = vunpack.c.l.b16 %v346
    %v2454 = vunpack.c.l.b16 %v347
    %v2455 = vunpack.c.l.b16 %v348
    %v2456 = vunpack.c.l.b16 %v349
    %v2457 = vunpack.c.l.b16 %v350
    %v2458 = vunpack.c.l.b16 %v351
    %v2459 = vunpack.c.l.b16 %v352
    %v2460 = vunpack.c.l.b16 %v353
    %v2461 = vunpack.c.l.b16 %v354
    %v2462 = vunpack.c.l.b16 %v355
    %v2463 = vunpack.c.l.b16 %v356
    %v2464 = vunpack.c.l.b16 %v357
    %v2465 = vunpack.c.l.b16 %v358
    %v2466 = vunpack.c.l.b16 %v359
    %v2467 = vunpack.c.l.b16 %v360
    %v2468 = vunpack.c.l.b16 %v361
    %v2469 = vunpack.c.l.b16 %v362
    %v2470 = vunpack.c.l.b16 %v363
    %v2471 = vunpack.c.l.b16 %v364
    %v2472 = vunpack.c.l.b16 %v365
    %v2473 = vunpack.c.l.b16 %v366
    %v2474 = vunpack.c.l.b16 %v367
    %v2475 = vunpack.c.l.b16 %v368
    %v2476 = vunpack.c.l.b16 %v369
    %v2477 = vunpack.c.l.b16 %v370
    %v2478 = vunpack.c.l.b16 %v371
    %v2479 = vunpack.c.l.b16 %v372
    %v2480 = vunpack.c.l.b16 %v373
    %v2481 = vunpack.c.l.b16 %v374
    %v2482 = vunpack.c.l.b16 %v375
    %v2483 = vunpack.c.l.b16 %v376
    %v2484 = vunpack.c.l.b16 %v377
    %v2485 = vunpack.c.l.b16 %v378
    %v2486 = vunpack.c.l.b16 %v379
    %v2487 = vunpack.c.l.b16 %v380
    %v2488 = vunpack.c.l.b16 %v381
    %v2489 = vunpack.c.l.b16 %v382
    %v2490 = vunpack.c.l.b16 %v383
    %v2491 = vunpack.c.l.b16 %v384
    %v2492 = vunpack.c.l.b16 %v385
    %v2493 = vunpack.c.l.b16 %v386
    %v2494 = vunpack.c.l.b16 %v387
    %v2495 = vunpack.c.l.b16 %v388
    %v2496 = vunpack.c.l.b16 %v389
    %v2497 = vunpack.c.l.b16 %v390
    %v2498 = vunpack.c.l.b16 %v391
    %v2499 = vunpack.c.l.b16 %v392
    %v2500 = vunpack.c.l.b16 %v393
    %v2501 = vunpack.c.l.b16 %v394
    %v2502 = vunpack.c.l.b16 %v395
    %v2503 = vunpack.c.l.b16 %v396
    %v2504 = vunpack.c.l.b16 %v397
    %v2505 = vunpack.c.l.b16 %v398
    %v2506 = vunpack.c.l.b16 %v399
    %v2507 = vunpack.c.l.b16 %v400
    %v2508 = vunpack.c.l.b16 %v401
    %v2509 = vunpack.c.l.b16 %v402
    %v2510 = vunpack.c.l.b16 %v403
    %v2511 = vunpack.c.l.b16 %v404
    %v2512 = vunpack.c.l.b16 %v405
    %v2513 = vunpack.c.l.b16 %v406
    %v2514 = vunpack.c.l.b16 %v407
    %v2515 = vunpack.c.l.b16 %v408
    %v2516 = vunpack.c.l.b16 %v409
    %v2517 = vunpack.c.l.b16 %v410
    %v2518 = vunpack.c.l.b16 %v411
    %v2519 = vunpack.c.l.b16 %v412
    %v2520 = vunpack.c.l.b16 %v413
    %v2521 = vunpack.c.l.b16 %v414
    %v2522 = vunpack.c.l.b16 %v415
    %v2523 = vunpack.c.l.b16 %v416
    %v2524 = vunpack.c.l.b16 %v417
    %v2525 = vunpack.c.l.b16 %v418
    %v2526 = vunpack.c.l.b16 %v419
    %v2527 = vunpack.c.l.b16 %v420
    %v2528 = vunpack.c.l.b16 %v421
    %v2529 = vunpack.c.l.b16 %v422
    %v2530 = vunpack.c.l.b16 %v423
    %v2531 = vunpack.c.l.b16 %v424
    %v2532 = vunpack.c.l.b16 %v425
    %v2533 = vunpack.c.l.b16 %v426
    %v2534 = vunpack.c.l.b16 %v427
    %v2535 = vunpack.c.l.b16 %v428
    %v2536 = vunpack.c.l.b16 %v429
    %v2537 = vunpack.c.l.b16 %v430
    %v2538 = vunpack.c.l.b16 %v431
    %v2539 = vunpack.c.l.b16 %v432
    %v2540 = vunpack.c.l.b16 %v433
    %v2541 = vunpack.c.l.b16 %v434
    %v2542 = vunpack.c.l.b16 %v435
    %v2543 = vunpack.c.l.b16 %v436
    %v2544 = vunpack.c.l.b16 %v437
    %v2545 = vunpack.c.l.b16 %v438
    %v2546 = vunpack.c.l.b16 %v439
    %v2547 = vunpack.c.l.b16 %v440
    %v2548 = vunpack.c.l.b16 %v441
    %v2549 = vunpack.c.l.b16 %v442
    %v2550 = vunpack.c.l.b16 %v443
    %v2551 = vunpack.c.l.b16 %v444
    %v2552 = vunpack.c.l.b16 %v445
    %v2553 = vunpack.c.l.b16 %v446
    %v2554 = vunpack.c.l.b16 %v447
    %v2555 = vunpack.c.l.b16 %v448
    %v2556 = vunpack.c.l.b16 %v449
    %v2557 = vunpack.c.l.b16 %v450
    %v2558 = vunpack.c.l.b16 %v451
    %v2559 = vunpack.c.l.b16 %v452
    %v2560 = vunpack.c.l.b16 %v453
    %v2561 = vunpack.c.l.b16 %v454
    %v2562 = vunpack.c.l.b16 %v455
    %v2563 = vunpack.c.l.b16 %v456
    %v2564 = vunpack.c.l.b16 %v457
    %v2565 = vunpack.c.l.b16 %v458
    %v2566 = vunpack.c.l.b16 %v459
    %v2567 = vunpack.c.l.b16 %v460
    %v2568 = vunpack.c.l.b16 %v461
    %v2569 = vunpack.c.l.b16 %v462
    %v2570 = vunpack.c.l.b16 %v463
    %v2571 = vunpack.c.l.b16 %v464
    %v2572 = vunpack.c.l.b16 %v465
    %v2573 = vunpack.c.l.b16 %v466
    %v2574 = vunpack.c.l.b16 %v467
    %v2575 = vunpack.c.l.b16 %v468
    %v2576 = vunpack.c.l.b16 %v469
    %v2577 = vunpack.c.l.b16 %v470
    %v2578 = vunpack.c.l.b16 %v471
    %v2579 = vunpack.c.l.b16 %v472
    %v2580 = vunpack.c.l.b16 %v473
    %v2581 = vunpack.c.l.b16 %v474
    %v2582 = vunpack.c.l.b16 %v475
    %v2583 = vunpack.c.l.b16 %v476
    %v2584 = vunpack.c.l.b16 %v477
    %v2585 = vunpack.c.l.b16 %v478
    %v2586 = vunpack.c.l.b16 %v479
    %v2587 = vunpack.c.l.b16 %v480
    %v2588 = vunpack.c.l.b16 %v481
    %v2589 = vunpack.c.l.b16 %v482
    %v2590 = vunpack.c.l.b16 %v483
    %v2591 = vunpack.c.l.b16 %v484
    %v2592 = vunpack.c.l.b16 %v485
    %v2593 = vunpack.c.l.b16 %v486
    %v2594 = vunpack.c.l.b16 %v487
    %v2595 = vunpack.c.l.b16 %v488
    %v2596 = vunpack.c.l.b16 %v489
    %v2597 = vunpack.c.l.b16 %v490
    %v2598 = vunpack.c.l.b16 %v491
    %v2599 = vunpack.c.l.b16 %v492
    %v2600 = vunpack.c.l.b16 %v493
    %v2601 = vunpack.c.l.b16 %v494
    %v2602 = vunpack.c.l.b16 %v495
    %v2603 = vunpack.c.l.b16 %v496
    %v2604 = vunpack.c.l.b16 %v497
    %v2605 = vunpack.c.l.b16 %v498
    %v2606 = vunpack.c.l.b16 %v499
    %v2607 = vunpack.c.l.b16 %v500
    %v2608 = vunpack.c.l.b16 %v501
    %v2609 = vunpack.c.l.b16 %v502
    %v2610 = vunpack.c.l.b16 %v503
    %v2611 = vunpack.c.l.b16 %v504
    %v2612 = vunpack.c.l.b16 %v505
    %v2613 = vunpack.c.l.b16 %v506
    %v2614 = vunpack.c.l.b16 %v507
    %v2615 = vunpack.c.l.b16 %v508
    %v2616 = vunpack.c.l.b16 %v509
    %v2617 = vunpack.c.l.b16 %v510
    %v2618 = vunpack.c.l.b16 %v511
    %v2619 = vunpack.c.l.b16 %v512
    %v2620 = vunpack.c.l.b16 %v513
    %v2621 = vunpack.c.l.b16 %v514
    %v2622 = vunpack.c.l.b16 %v515
    %v2623 = vunpack.c.l.b16 %v516
    %v2624 = vunpack.c.l.b16 %v517
    %v2625 = vunpack.c.l.b16 %v518
    %v2626 = vunpack.c.l.b16 %v519
    %v2627 = vunpack.c.l.b16 %v520
    %v2628 = vunpack.c.l.b16 %v521
    %v2629 = vunpack.c.l.b16 %v522
    %v2630 = vunpack.c.l.b16 %v523
    %v2631 = vunpack.c.l.b16 %v524
    %v2632 = vunpack.c.l.b16 %v525
    %v2633 = vunpack.c.l.b16 %v526
    %v2634 = vunpack.c.l.b16 %v527
    %v2635 = vunpack.c.l.b16 %v528
    %v2636 = vunpack.c.l.b16 %v529
    %v2637 = vunpack.c.l.b16 %v530
    %v2638 = vunpack.c.l.b16 %v531
    %v2639 = vunpack.c.l.b16 %v532
    %v2640 = vunpack.c.l.b16 %v533
    %v2641 = vunpack.c.l.b16 %v534
    %v2642 = vunpack.c.l.b16 %v535
    %v2643 = vunpack.c.l.b16 %v536
    %v2644 = vunpack.c.l.b16 %v537
    %v2645 = vunpack.c.l.b16 %v538
    %v2646 = vunpack.c.l.b16 %v539
    %v2647 = vunpack.c.l.b16 %v540
    %v2648 = vunpack.c.l.b16 %v541
    %v2649 = vunpack.c.l.b16 %v542
    %v2650 = vunpack.c.l.b16 %v543
    %v2651 = vunpack.c.l.b16 %v544
    %v2652 = vunpack.c.l.b16 %v545
    %v2653 = vunpack.c.l.b16 %v546
    %v2654 = vunpack.c.l.b16 %v547
    %v2655 = vunpack.c.l.b16 %v548
    %v2656 = vunpack.c.l.b16 %v549
    %v2657 = vunpack.c.l.b16 %v550
    %v2658 = vunpack.c.l.b16 %v551
    %v2659 = vunpack.c.l.b16 %v552
    %v2660 = vunpack.c.l.b16 %v553
    %v2661 = vunpack.c.l.b16 %v554
    %v2662 = vunpack.c.l.b16 %v555
    %v2663 = vunpack.c.l.b16 %v556
    %v2664 = vunpack.c.l.b16 %v557
    %v2665 = vunpack.c.l.b16 %v558
    %v2666 = vunpack.c.l.b16 %v559
    %v2667 = vunpack.c.l.b16 %v560
    %v2668 = vunpack.c.l.b16 %v561
    %v2669 = vunpack.c.l.b16 %v562
    %v2670 = vunpack.c.l.b16 %v563
    %v2671 = vunpack.c.l.b16 %v564
    %v2672 = vunpack.c.l.b16 %v565
    %v2673 = vunpack.c.l.b16 %v566
    %v2674 = vunpack.c.l.b16 %v567
    %v2675 = vunpack.c.l.b16 %v568
    %v2676 = vunpack.c.l.b16 %v569
    %v2677 = vunpack.c.l.b16 %v570
    %v2678 = vunpack.c.l.b16 %v571
    %v2679 = vunpack.c.l.b16 %v572
    %v2680 = vunpack.c.l.b16 %v573
    %v2681 = vunpack.c.l.b16 %v574
    %v2682 = vunpack.c.l.b16 %v575
    %v2683 = vunpack.c.l.b16 %v576
    %v2684 = vunpack.c.l.b16 %v577
    %v2685 = vunpack.c.l.b16 %v578
    %v2686 = vunpack.c.l.b16 %v579
    %v2687 = vunpack.c.l.b16 %v580
    %v2688 = vunpack.c.l.b16 %v581
    %v2689 = vunpack.c.l.b16 %v582
    %v2690 = vunpack.c.l.b16 %v583
    %v2691 = vunpack.c.l.b16 %v584
    %v2692 = vunpack.c.l.b16 %v585
    %v2693 = vunpack.c.l.b16 %v586
    %v2694 = vunpack.c.l.b16 %v587
    %v2695 = vunpack.c.l.b16 %v588
    %v2696 = vunpack.c.l.b16 %v589
    %v2697 = vunpack.c.l.b16 %v590
    %v2698 = vunpack.c.l.b16 %v591
    %v2699 = vunpack.c.l.b16 %v592
    %v2700 = vunpack.c.l.b16 %v593
    %v2701 = vunpack.c.l.b16 %v594
    %v2702 = vunpack.c.l.b16 %v595
    %v2703 = vunpack.c.l.b16 %v596
    %v2704 = vunpack.c.l.b16 %v597
    %v2705 = vunpack.c.l.b16 %v598
    %v2706 = vunpack.c.l.b16 %v599
    %v2707 = vunpack.c.l.b16 %v600
    %v2708 = vunpack.c.l.b16 %v601
    %v2709 = vunpack.c.l.b16 %v602
    %v2710 = vunpack.c.l.b16 %v603
    %v2711 = vunpack.c.l.b16 %v604
    %v2712 = vunpack.c.l.b16 %v605
    %v2713 = vunpack.c.l.b16 %v606
    %v2714 = vunpack.c.l.b16 %v607
    %v2715 = vunpack.c.l.b16 %v608
    %v2716 = vunpack.c.l.b16 %v609
    %v2717 = vunpack.c.l.b16 %v610
    %v2718 = vunpack.c.l.b16 %v611
    %v2719 = vunpack.c.l.b16 %v612
    %v2720 = vunpack.c.l.b16 %v613
    %v2721 = vunpack.c.l.b16 %v614
    %v2722 = vunpack.c.l.b16 %v615
    %v2723 = vunpack.c.l.b16 %v616
    %v2724 = vunpack.c.l.b16 %v617
    %v2725 = vunpack.c.l.b16 %v618
    %v2726 = vunpack.c.l.b16 %v619
    %v2727 = vunpack.c.l.b16 %v620
    %v2728 = vunpack.c.l.b16 %v621
    %v2729 = vunpack.c.l.b16 %v622
    %v2730 = vunpack.c.l.b16 %v623
    %v2731 = vunpack.c.l.b16 %v624
    %v2732 = vunpack.c.l.b16 %v625
    %v2733 = vunpack.c.l.b16 %v626
    %v2734 = vunpack.c.l.b16 %v627
    %v2735 = vunpack.c.l.b16 %v628
    %v2736 = vunpack.c.l.b16 %v629
    %v2737 = vunpack.c.l.b16 %v630
    %v2738 = vunpack.c.l.b16 %v631
    %v2739 = vunpack.c.l.b16 %v632
    %v2740 = vunpack.c.l.b16 %v633
    %v2741 = vunpack.c.l.b16 %v634
    %v2742 = vunpack.c.l.b16 %v635
    %v2743 = vunpack.c.l.b16 %v636
    %v2744 = vunpack.c.l.b16 %v637
    %v2745 = vunpack.c.l.b16 %v638
    %v2746 = vunpack.c.l.b16 %v639
    %v2747 = vunpack.c.l.b16 %v640
    %v2748 = vunpack.c.l.b16 %v641
    %v2749 = vunpack.c.l.b16 %v642
    %v2750 = vunpack.c.l.b16 %v643
    %v2751 = vunpack.c.l.b16 %v644
    %v2752 = vunpack.c.l.b16 %v645
    %v2753 = vunpack.c.l.b16 %v646
    %v2754 = vunpack.c.l.b16 %v647
    %v2755 = vunpack.c.l.b16 %v648
    %v2756 = vunpack.c.l.b16 %v649
    %v2757 = vunpack.c.l.b16 %v650
    %v2758 = vunpack.c.l.b16 %v651
    %v2759 = vunpack.c.l.b16 %v652
    %v2760 = vunpack.c.l.b16 %v653
    %v2761 = vunpack.c.l.b16 %v654
    %v2762 = vunpack.c.l.b16 %v655
    %v2763 = vunpack.c.l.b16 %v656
    %v2764 = vunpack.c.l.b16 %v657
    %v2765 = vunpack.c.l.b16 %v658
    %v2766 = vunpack.c.l.b16 %v659
    %v2767 = vunpack.c.l.b16 %v660
    %v2768 = vunpack.c.l.b16 %v661
    %v2769 = vunpack.c.l.b16 %v662
    %v2770 = vunpack.c.l.b16 %v663
    %v2771 = vunpack.c.l.b16 %v664
    %v2772 = vunpack.c.l.b16 %v665
    %v2773 = vunpack.c.l.b16 %v666
    %v2774 = vunpack.c.l.b16 %v667
    %v2775 = vunpack.c.l.b16 %v668
    %v2776 = vunpack.c.l.b16 %v669
    %v2777 = vunpack.c.l.b16 %v670
    %v2778 = vunpack.c.l.b16 %v671
    %v2779 = vunpack.c.l.b16 %v672
    %v2780 = vunpack.c.l.b16 %v673
    %v2781 = vunpack.c.l.b16 %v674
    %v2782 = vunpack.c.l.b16 %v675
    %v2783 = vunpack.c.l.b16 %v676
    %v2784 = vunpack.c.l.b16 %v677
    %v2785 = vunpack.c.l.b16 %v678
    %v2786 = vunpack.c.l.b16 %v679
    %v2787 = vunpack.c.l.b16 %v680
    %v2788 = vunpack.c.l.b16 %v681
    %v2789 = vunpack.c.l.b16 %v682
    %v2790 = vunpack.c.l.b16 %v683
    %v2791 = vunpack.c.l.b16 %v684
    %v2792 = vunpack.c.l.b16 %v685
    %v2793 = vunpack.c.l.b16 %v686
    %v2794 = vunpack.c.l.b16 %v687
    %v2795 = vunpack.c.l.b16 %v688
    %v2796 = vunpack.c.l.b16 %v689
    %v2797 = vunpack.c.l.b16 %v690
    %v2798 = vunpack.c.l.b16 %v691
    %v2799 = vunpack.c.l.b16 %v692
    %v2800 = vunpack.c.l.b16 %v693
    %v2801 = vunpack.c.l.b16 %v694
    %v2802 = vunpack.c.l.b16 %v695
    %v2803 = vunpack.c.l.b16 %v696
    %v2804 = vunpack.c.l.b16 %v697
    %v2805 = vunpack.c.l.b16 %v698
    %v2806 = vunpack.c.l.b16 %v699
    %v2807 = vunpack.c.l.b16 %v700
    %v2808 = vunpack.c.l.b16 %v701
    %v2809 = vunpack.c.l.b16 %v702
    %v2810 = vunpack.c.l.b16 %v703
    %v2811 = vunpack.c.l.b16 %v704
    %v2812 = vunpack.c.l.b16 %v705
    %v2813 = vunpack.c.l.b16 %v706
    %v2814 = vunpack.c.l.b16 %v707
    %v2815 = vunpack.c.l.b16 %v708
    %v2816 = vunpack.c.l.b16 %v709
    %v2817 = vunpack.c.l.b16 %v710
    %v2818 = vunpack.c.l.b16 %v711
    %v2819 = vunpack.c.l.b16 %v712
    %v2820 = vunpack.c.l.b16 %v713
    %v2821 = vunpack.c.l.b16 %v714
    %v2822 = vunpack.c.l.b16 %v715
    %v2823 = vunpack.c.l.b16 %v716
    %v2824 = vunpack.c.l.b16 %v717
    %v2825 = vunpack.c.l.b16 %v718
    %v2826 = vunpack.c.l.b16 %v719
    %v2827 = vunpack.c.l.b16 %v720
    %v2828 = vunpack.c.l.b16 %v721
    %v2829 = vunpack.c.l.b16 %v722
    %v2830 = vunpack.c.l.b16 %v723
    %v2831 = vunpack.c.l.b16 %v724
    %v2832 = vunpack.c.l.b16 %v725
    %v2833 = vunpack.c.l.b16 %v726
    %v2834 = vunpack.c.l.b16 %v727
    %v2835 = vunpack.c.l.b16 %v728
    %v2836 = vunpack.c.l.b16 %v729
    %v2837 = vunpack.c.l.b16 %v730
    %v2838 = vunpack.c.l.b16 %v731
    %v2839 = vunpack.c.l.b16 %v732
    %v2840 = vunpack.c.l.b16 %v733
    %v2841 = vunpack.c.l.b16 %v734
    %v2842 = vunpack.c.l.b16 %v735
    %v2843 = vunpack.c.l.b16 %v736
    %v2844 = vunpack.c.l.b16 %v737
    %v2845 = vunpack.c.l.b16 %v738
    %v2846 = vunpack.c.l.b16 %v739
    %v2847 = vunpack.c.l.b16 %v740
    %v2848 = vunpack.c.l.b16 %v741
    %v2849 = vunpack.c.l.b16 %v742
    %v2850 = vunpack.c.l.b16 %v743
    %v2851 = vunpack.c.l.b16 %v744
    %v2852 = vunpack.c.l.b16 %v745
    %v2853 = vunpack.c.l.b16 %v746
    %v2854 = vunpack.c.l.b16 %v747
    %v2855 = vunpack.c.l.b16 %v748
    %v2856 = vunpack.c.l.b16 %v749
    %v2857 = vunpack.c.l.b16 %v750
    %v2858 = vunpack.c.l.b16 %v751
    %v2859 = vunpack.c.l.b16 %v752
    %v2860 = vunpack.c.l.b16 %v753
    %v2861 = vunpack.c.l.b16 %v754
    %v2862 = vunpack.c.l.b16 %v755
    %v2863 = vunpack.c.l.b16 %v756
    %v2864 = vunpack.c.l.b16 %v757
    %v2865 = vunpack.c.l.b16 %v758
    %v2866 = vunpack.c.l.b16 %v759
    %v2867 = vunpack.c.l.b16 %v760
    %v2868 = vunpack.c.l.b16 %v761
    %v2869 = vunpack.c.l.b16 %v762
    %v2870 = vunpack.c.l.b16 %v763
    %v2871 = vunpack.c.l.b16 %v764
    %v2872 = vunpack.c.l.b16 %v765
    %v2873 = vunpack.c.l.b16 %v766
    %v2874 = vunpack.c.l.b16 %v767
    %v2875 = vunpack.c.l.b16 %v768
    %v2876 = vunpack.c.l.b16 %v769
    %v2877 = vunpack.c.l.b16 %v770
    %v2878 = vunpack.c.l.b16 %v771
    %v2879 = vunpack.c.l.b16 %v772
    %v2880 = vunpack.c.l.b16 %v773
    %v2881 = vunpack.c.l.b16 %v774
    %v2882 = vunpack.c.l.b16 %v775
    %v2883 = vunpack.c.l.b16 %v776
    %v2884 = vunpack.c.l.b16 %v777
    %v2885 = vunpack.c.l.b16 %v778
    %v2886 = vunpack.c.l.b16 %v779
    %v2887 = vunpack.c.l.b16 %v780
    %v2888 = vunpack.c.l.b16 %v781
    %v2889 = vunpack.c.l.b16 %v782
    %v2890 = vunpack.c.l.b16 %v783
    %v2891 = vunpack.c.l.b16 %v784
    %v2892 = vunpack.c.l.b16 %v785
    %v2893 = vunpack.c.l.b16 %v786
    %v2894 = vunpack.c.l.b16 %v787
    %v2895 = vunpack.c.l.b16 %v788
    %v2896 = vunpack.c.l.b16 %v789
    %v2897 = vunpack.c.l.b16 %v790
    %v2898 = vunpack.c.l.b16 %v791
    %v2899 = vunpack.c.l.b16 %v792
    %v2900 = vunpack.c.l.b16 %v793
    %v2901 = vunpack.c.l.b16 %v794
    %v2902 = vunpack.c.l.b16 %v795
    %v2903 = vunpack.c.l.b16 %v796
    %v2904 = vunpack.c.l.b16 %v797
    %v2905 = vunpack.c.l.b16 %v798
    %v2906 = vunpack.c.l.b16 %v799
    %v2907 = vunpack.c.l.b16 %v800
    %v2908 = vunpack.c.l.b16 %v801
    %v2909 = vunpack.c.l.b16 %v802
    %v2910 = vunpack.c.l.b16 %v803
    %v2911 = vunpack.c.l.b16 %v804
    %v2912 = vunpack.c.l.b16 %v805
    %v2913 = vunpack.c.l.b16 %v806
    %v2914 = vunpack.c.l.b16 %v807
    %v2915 = vunpack.c.l.b16 %v808
    %v2916 = vunpack.c.l.b16 %v809
    %v2917 = vunpack.c.l.b16 %v810
    %v2918 = vunpack.c.l.b16 %v811
    %v2919 = vunpack.c.l.b16 %v812
    %v2920 = vunpack.c.l.b16 %v813
    %v2921 = vunpack.c.l.b16 %v814
    %v2922 = vunpack.c.l.b16 %v815
    %v2923 = vunpack.c.l.b16 %v816
    %v2924 = vunpack.c.l.b16 %v817
    %v2925 = vunpack.c.l.b16 %v818
    %v2926 = vunpack.c.l.b16 %v819
    %v2927 = vunpack.c.l.b16 %v820
    %v2928 = vunpack.c.l.b16 %v821
    %v2929 = vunpack.c.l.b16 %v822
    %v2930 = vunpack.c.l.b16 %v823
    %v2931 = vunpack.c.l.b16 %v824
    %v2932 = vunpack.c.l.b16 %v825
    %v2933 = vunpack.c.l.b16 %v826
    %v2934 = vunpack.c.l.b16 %v827
    %v2935 = vunpack.c.l.b16 %v828
    %v2936 = vunpack.c.l.b16 %v829
    %v2937 = vunpack.c.l.b16 %v830
    %v2938 = vunpack.c.l.b16 %v831
    %v2939 = vunpack.c.l.b16 %v832
    %v2940 = vunpack.c.l.b16 %v833
    %v2941 = vunpack.c.l.b16 %v834
    %v2942 = vunpack.c.l.b16 %v835
    %v2943 = vunpack.c.l.b16 %v836
    %v2944 = vunpack.c.l.b16 %v837
    %v2945 = vunpack.c.l.b16 %v838
    %v2946 = vunpack.c.l.b16 %v839
    %v2947 = vunpack.c.l.b16 %v840
    %v2948 = vunpack.c.l.b16 %v841
    %v2949 = vunpack.c.l.b16 %v842
    %v2950 = vunpack.c.l.b16 %v843
    %v2951 = vunpack.c.l.b16 %v844
    %v2952 = vunpack.c.l.b16 %v845
    %v2953 = vunpack.c.l.b16 %v846
    %v2954 = vunpack.c.l.b16 %v847
    %v2955 = vunpack.c.l.b16 %v848
    %v2956 = vunpack.c.l.b16 %v849
    %v2957 = vunpack.c.l.b16 %v850
    %v2958 = vunpack.c.l.b16 %v851
    %v2959 = vunpack.c.l.b16 %v852
    %v2960 = vunpack.c.l.b16 %v853
    %v2961 = vunpack.c.l.b16 %v854
    %v2962 = vunpack.c.l.b16 %v855
    %v2963 = vunpack.c.l.b16 %v856
    %v2964 = vunpack.c.l.b16 %v857
    %v2965 = vunpack.c.l.b16 %v858
    %v2966 = vunpack.c.l.b16 %v859
    %v2967 = vunpack.c.l.b16 %v860
    %v2968 = vunpack.c.l.b16 %v861
    %v2969 = vunpack.c.l.b16 %v862
    %v2970 = vunpack.c.l.b16 %v863
    %v2971 = vunpack.c.l.b16 %v864
    %v2972 = vunpack.c.l.b16 %v865
    %v2973 = vunpack.c.l.b16 %v866
    %v2974 = vunpack.c.l.b16 %v867
    %v2975 = vunpack.c.l.b16 %v868
    %v2976 = vunpack.c.l.b16 %v869
    %v2977 = vunpack.c.l.b16 %v870
    %v2978 = vunpack.c.l.b16 %v871
    %v2979 = vunpack.c.l.b16 %v872
    %v2980 = vunpack.c.l.b16 %v873
    %v2981 = vunpack.c.l.b16 %v874
    %v2982 = vunpack.c.l.b16 %v875
    %v2983 = vunpack.c.l.b16 %v876
    %v2984 = vunpack.c.l.b16 %v877
    %v2985 = vunpack.c.l.b16 %v878
    %v2986 = vunpack.c.l.b16 %v879
    %v2987 = vunpack.c.l.b16 %v880
    %v2988 = vunpack.c.l.b16 %v881
    %v2989 = vunpack.c.l.b16 %v882
    %v2990 = vunpack.c.l.b16 %v883
    %v2991 = vunpack.c.l.b16 %v884
    %v2992 = vunpack.c.l.b16 %v885
    %v2993 = vunpack.c.l.b16 %v886
    %v2994 = vunpack.c.l.b16 %v887
    %v2995 = vunpack.c.l.b16 %v888
    %v2996 = vunpack.c.l.b16 %v889
    %v2997 = vunpack.c.l.b16 %v890
    %v2998 = vunpack.c.l.b16 %v891
    %v2999 = vunpack.c.l.b16 %v892
    %v3000 = vunpack.c.l.b16 %v893
    %v3001 = vunpack.c.l.b16 %v894
    %v3002 = vunpack.c.l.b16 %v895
    %v3003 = vunpack.c.l.b16 %v896
    %v3004 = vunpack.c.l.b16 %v897
    %v3005 = vunpack.c.l.b16 %v898
    %v3006 = vunpack.c.l.b16 %v899
    %v3007 = vunpack.c.l.b16 %v900
    %v3008 = vunpack.c.l.b16 %v901
    %v3009 = vunpack.c.l.b16 %v902
    %v3010 = vunpack.c.l.b16 %v903
    %v3011 = vunpack.c.l.b16 %v904
    %v3012 = vunpack.c.l.b16 %v905
    %v3013 = vunpack.c.l.b16 %v906
    %v3014 = vunpack.c.l.b16 %v907
    %v3015 = vunpack.c.l.b16 %v908
    %v3016 = vunpack.c.l.b16 %v909
    %v3017 = vunpack.c.l.b16 %v910
    %v3018 = vunpack.c.l.b16 %v911
    %v3019 = vunpack.c.l.b16 %v912
    %v3020 = vunpack.c.l.b16 %v913
    %v3021 = vunpack.c.l.b16 %v914
    %v3022 = vunpack.c.l.b16 %v915
    %v3023 = vunpack.c.l.b16 %v916
    %v3024 = vunpack.c.l.b16 %v917
    %v3025 = vunpack.c.l.b16 %v918
    %v3026 = vunpack.c.l.b16 %v919
    %v3027 = vunpack.c.l.b16 %v920
    %v3028 = vunpack.c.l.b16 %v921
    %v3029 = vunpack.c.l.b16 %v922
    %v3030 = vunpack.c.l.b16 %v923
    %v3031 = vunpack.c.l.b16 %v924
    %v3032 = vunpack.c.l.b16 %v925
    %v3033 = vunpack.c.l.b16 %v926
    %v3034 = vunpack.c.l.b16 %v927
    %v3035 = vunpack.c.l.b16 %v928
    %v3036 = vunpack.c.l.b16 %v929
    %v3037 = vunpack.c.l.b16 %v930
    %v3038 = vunpack.c.l.b16 %v931
    %v3039 = vunpack.c.l.b16 %v932
    %v3040 = vunpack.c.l.b16 %v933
    %v3041 = vunpack.c.l.b16 %v934
    %v3042 = vunpack.c.l.b16 %v935
    %v3043 = vunpack.c.l.b16 %v936
    %v3044 = vunpack.c.l.b16 %v937
    %v3045 = vunpack.c.l.b16 %v938
    %v3046 = vunpack.c.l.b16 %v939
    %v3047 = vunpack.c.l.b16 %v940
    %v3048 = vunpack.c.l.b16 %v941
    %v3049 = vunpack.c.l.b16 %v942
    %v3050 = vunpack.c.l.b16 %v943
    %v3051 = vunpack.c.l.b16 %v944
    %v3052 = vunpack.c.l.b16 %v945
    %v3053 = vunpack.c.l.b16 %v946
    %v3054 = vunpack.c.l.b16 %v947
    %v3055 = vunpack.c.l.b16 %v948
    %v3056 = vunpack.c.l.b16 %v949
    %v3057 = vunpack.c.l.b16 %v950
    %v3058 = vunpack.c.l.b16 %v951
    %v3059 = vunpack.c.l.b16 %v952
    %v3060 = vunpack.c.l.b16 %v953
    %v3061 = vunpack.c.l.b16 %v954
    %v3062 = vunpack.c.l.b16 %v955
    %v3063 = vunpack.c.l.b16 %v956
    %v3064 = vunpack.c.l.b16 %v957
    %v3065 = vunpack.c.l.b16 %v958
    %v3066 = vunpack.c.l.b16 %v959
    %v3067 = vunpack.c.l.b16 %v960
    %v3068 = vunpack.c.l.b16 %v961
    %v3069 = vunpack.c.l.b16 %v962
    %v3070 = vunpack.c.l.b16 %v963
    %v3071 = vunpack.c.l.b16 %v964
    %v3072 = vunpack.c.l.b16 %v965
    %v3073 = vunpack.c.l.b16 %v966
    %v3074 = vunpack.c.l.b16 %v967
    %v3075 = vunpack.c.l.b16 %v968
    %v3076 = vunpack.c.l.b16 %v969
    %v3077 = vunpack.c.l.b16 %v970
    %v3078 = vunpack.c.l.b16 %v971
    %v3079 = vunpack.c.l.b16 %v972
    %v3080 = vunpack.c.l.b16 %v973
    %v3081 = vunpack.c.l.b16 %v974
    %v3082 = vunpack.c.l.b16 %v975
    %v3083 = vunpack.c.l.b16 %v976
    %v3084 = vunpack.c.l.b16 %v977
    %v3085 = vunpack.c.l.b16 %v978
    %v3086 = vunpack.c.l.b16 %v979
    %v3087 = vunpack.c.l.b16 %v980
    %v3088 = vunpack.c.l.b16 %v981
    %v3089 = vunpack.c.l.b16 %v982
    %v3090 = vunpack.c.l.b16 %v983
    %v3091 = vunpack.c.l.b16 %v984
    %v3092 = vunpack.c.l.b16 %v985
    %v3093 = vunpack.c.l.b16 %v986
    %v3094 = vunpack.c.l.b16 %v987
    %v3095 = vunpack.c.l.b16 %v988
    %v3096 = vunpack.c.l.b16 %v989
    %v3097 = vunpack.c.l.b16 %v990
    %v3098 = vunpack.c.l.b16 %v991
    %v3099 = vunpack.c.l.b16 %v992
    %v3100 = vunpack.c.l.b16 %v993
    %v3101 = vunpack.c.l.b16 %v994
    %v3102 = vunpack.c.l.b16 %v995
    %v3103 = vunpack.c.l.b16 %v996
    %v3104 = vunpack.c.l.b16 %v997
    %v3105 = vunpack.c.l.b16 %v998
    %v3106 = vunpack.c.l.b16 %v999
    %v3107 = vunpack.c.l.b16 %v1000
    %v3108 = vunpack.c.l.b16 %v1001
    %v3109 = vunpack.c.l.b16 %v1002
    %v3110 = vunpack.c.l.b16 %v1003
    %v3111 = vunpack.c.l.b16 %v1004
    %v3112 = vunpack.c.l.b16 %v1005
    %v3113 = vunpack.c.l.b16 %v1006
    %v3114 = vunpack.c.l.b16 %v1007
    %v3115 = vunpack.c.l.b16 %v1008
    %v3116 = vunpack.c.l.b16 %v1009
    %v3117 = vunpack.c.l.b16 %v1010
    %v3118 = vunpack.c.l.b16 %v1011
    %v3119 = vunpack.c.l.b16 %v1012
    %v3120 = vunpack.c.l.b16 %v1013
    %v3121 = vunpack.c.l.b16 %v1014
    %v3122 = vunpack.c.l.b16 %v1015
    %v3123 = vunpack.c.l.b16 %v1016
    %v3124 = vunpack.c.l.b16 %v1017
    %v3125 = vunpack.c.l.b16 %v1018
    %v3126 = vunpack.c.l.b16 %v1019
    %v3127 = vunpack.c.l.b16 %v1020
    %v3128 = vunpack.c.l.b16 %v1021
    %v3129 = vunpack.c.l.b16 %v1022
    %v3130 = vunpack.c.l.b16 %v1023
    %v3131 = vunpack.c.l.b16 %v1024
    %v3132 = vunpack.c.l.b16 %v1025
    %v3133 = vunpack.c.l.b16 %v1026
    %v3134 = vunpack.c.l.b16 %v1027
    %v3135 = vunpack.c.l.b16 %v1028
    %v3136 = vunpack.c.l.b16 %v1029
    %v3137 = vunpack.c.l.b16 %v1030
    %v3138 = vunpack.c.l.b16 %v1031
    %v3139 = vunpack.c.l.b16 %v1032
    %v3140 = vunpack.c.l.b16 %v1033
    %v3141 = vunpack.c.l.b16 %v1034
    %v3142 = vunpack.c.l.b16 %v1035
    %v3143 = vunpack.c.l.b16 %v1036
    %v3144 = vunpack.c.l.b16 %v1037
    %v3145 = vunpack.c.l.b16 %v1038
    %v3146 = vunpack.c.l.b16 %v1039
    %v3147 = vunpack.c.l.b16 %v1040
    %v3148 = vunpack.c.l.b16 %v1041
    %v3149 = vunpack.c.l.b16 %v1042
    %v3150 = vunpack.c.l.b16 %v1043
    %v3151 = vunpack.c.l.b16 %v1044
    %v3152 = vunpack.c.l.b16 %v1045
    %v3153 = vunpack.c.l.b16 %v1046
    %v3154 = vunpack.c.l.b16 %v1047
    %v3155 = vunpack.c.l.b16 %v1048
    %v3156 = vunpack.c.l.b16 %v1049
    %v3157 = vunpack.c.l.b16 %v1050
    %v3158 = vunpack.c.l.b16 %v1051
    %v3159 = vunpack.c.l.b16 %v1052
    %v3160 = vunpack.c.l.b16 %v1053
    %v3161 = vunpack.c.l.b16 %v1054
    %v3162 = vunpack.c.l.b16 %v1055
    %v3163 = vunpack.c.l.b16 %v1056
    %v3164 = vunpack.c.l.b16 %v1057
    %v3165 = vunpack.c.l.b16 %v1058
    %v3166 = vunpack.c.l.b16 %v1059
    %v3167 = vunpack.c.l.b16 %v1060
    %v3168 = vunpack.c.l.b16 %v1061
    %v3169 = vunpack.c.l.b16 %v1062
    %v3170 = vunpack.c.l.b16 %v1063
    %v3171 = vunpack.c.l.b16 %v1064
    %v3172 = vunpack.c.l.b16 %v1065
    %v3173 = vunpack.c.l.b16 %v1066
    %v3174 = vunpack.c.l.b16 %v1067
    %v3175 = vunpack.c.l.b16 %v1068
    %v3176 = vunpack.c.l.b16 %v1069
    %v3177 = vunpack.c.l.b16 %v1070
    %v3178 = vunpack.c.l.b16 %v1071
    %v3179 = vunpack.c.l.b16 %v1072
    %v3180 = vunpack.c.l.b16 %v1073
    %v3181 = vunpack.c.l.b16 %v1074
    %v3182 = vunpack.c.l.b16 %v1075
    %v3183 = vunpack.c.l.b16 %v1076
    %v3184 = vunpack.c.l.b16 %v1077
    %v3185 = vunpack.c.l.b16 %v1078
    %v3186 = vunpack.c.l.b16 %v1079
    %v3187 = vunpack.c.l.b16 %v1080
    %v3188 = vunpack.c.l.b16 %v1081
    %v3189 = vunpack.c.l.b16 %v1082
    %v3190 = vunpack.c.l.b16 %v1083
    %v3191 = vunpack.c.l.b16 %v1084
    %v3192 = vunpack.c.l.b16 %v1085
    %v3193 = vunpack.c.l.b16 %v1086
    %v3194 = vunpack.c.l.b16 %v1087
    %v3195 = vunpack.c.l.b16 %v1088
    %v3196 = vunpack.c.l.b16 %v1089
    %v3197 = vunpack.c.l.b16 %v1090
    %v3198 = vunpack.c.l.b16 %v1091
    %v3199 = vunpack.c.l.b16 %v1092
    %v3200 = vunpack.c.l.b16 %v1093
    %v3201 = vunpack.c.l.b16 %v1094
    %v3202 = vunpack.c.l.b16 %v1095
    %v3203 = vunpack.c.l.b16 %v1096
    %v3204 = vunpack.c.l.b16 %v1097
    %v3205 = vunpack.c.l.b16 %v1098
    %v3206 = vunpack.c.l.b16 %v1099
    %v3207 = vunpack.c.l.b16 %v1100
    %v3208 = vunpack.c.l.b16 %v1101
    %v3209 = vunpack.c.l.b16 %v1102
    %v3210 = vunpack.c.l.b16 %v1103
    %v3211 = vunpack.c.l.b16 %v1104
    %v3212 = vunpack.c.l.b16 %v1105
    %v3213 = vunpack.c.l.b16 %v1106
    %v3214 = vunpack.c.l.b16 %v1107
    %v3215 = vunpack.c.l.b16 %v1108
    %v3216 = vunpack.c.l.b16 %v1109
    %v3217 = vunpack.c.l.b16 %v1110
    %v3218 = vunpack.c.l.b16 %v1111
    %v3219 = vunpack.c.l.b16 %v1112
    %v3220 = vunpack.c.l.b16 %v1113
    %v3221 = vunpack.c.l.b16 %v1114
    %v3222 = vunpack.c.l.b16 %v1115
    %v3223 = vunpack.c.l.b16 %v1116
    %v3224 = vunpack.c.l.b16 %v1117
    %v3225 = vunpack.c.l.b16 %v1118
    %v3226 = vunpack.c.l.b16 %v1119
    %v3227 = vunpack.c.l.b16 %v1120
    %v3228 = vunpack.c.l.b16 %v1121
    %v3229 = vunpack.c.l.b16 %v1122
    %v3230 = vunpack.c.l.b16 %v1123
    %v3231 = vunpack.c.l.b16 %v1124
    %v3232 = vunpack.c.l.b16 %v1125
    %v3233 = vunpack.c.l.b16 %v1126
    %v3234 = vunpack.c.l.b16 %v1127
    %v3235 = vunpack.c.l.b16 %v1128
    %v3236 = vunpack.c.l.b16 %v1129
    %v3237 = vunpack.c.l.b16 %v1130
    %v3238 = vunpack.c.l.b16 %v1131
    %v3239 = vunpack.c.l.b16 %v1132
    %v3240 = vunpack.c.l.b16 %v1133
    %v3241 = vunpack.c.l.b16 %v1134
    %v3242 = vunpack.c.l.b16 %v1135
    %v3243 = vunpack.c.l.b16 %v1136
    %v3244 = vunpack.c.l.b16 %v1137
    %v3245 = vunpack.c.l.b16 %v1138
    %v3246 = vunpack.c.l.b16 %v1139
    %v3247 = vunpack.c.l.b16 %v1140
    %v3248 = vunpack.c.l.b16 %v1141
    %v3249 = vunpack.c.l.b16 %v1142
    %v3250 = vunpack.c.l.b16 %v1143
    %v3251 = vunpack.c.l.b16 %v1144
    %v3252 = vunpack.c.l.b16 %v1145
    %v3253 = vunpack.c.l.b16 %v1146
    %v3254 = vunpack.c.l.b16 %v1147
    %v3255 = vunpack.c.l.b16 %v1148
    %v3256 = vunpack.c.l.b16 %v1149
    %v3257 = vunpack.c.l.b16 %v1150
    %v3258 = vunpack.c.l.b16 %v1151
    %v3259 = vunpack.c.l.b16 %v1152
    %v3260 = vunpack.c.l.b16 %v1153
    %v3261 = vunpack.c.l.b16 %v1154
    %v3262 = vunpack.c.l.b16 %v1155
    %v3263 = vunpack.c.l.b16 %v1156
    %v3264 = vunpack.c.l.b16 %v1157
    %v3265 = vunpack.c.l.b16 %v1158
    %v3266 = vunpack.c.l.b16 %v1159
    %v3267 = vunpack.c.l.b16 %v1160
    %v3268 = vunpack.c.l.b16 %v1161
    %v3269 = vunpack.c.l.b16 %v1162
    %v3270 = vunpack.c.l.b16 %v1163
    %v3271 = vunpack.c.l.b16 %v1164
    %v3272 = vunpack.c.l.b16 %v1165
    %v3273 = vunpack.c.l.b16 %v1166
    %v3274 = vunpack.c.l.b16 %v1167
    %v3275 = vunpack.c.l.b16 %v1168
    %v3276 = vunpack.c.l.b16 %v1169
    %v3277 = vunpack.c.l.b16 %v1170
    %v3278 = vunpack.c.l.b16 %v1171
    %v3279 = vunpack.c.l.b16 %v1172
    %v3280 = vunpack.c.l.b16 %v1173
    %v3281 = vunpack.c.l.b16 %v1174
    %v3282 = vunpack.c.l.b16 %v1175
    %v3283 = vunpack.c.l.b16 %v1176
    %v3284 = vunpack.c.l.b16 %v1177
    %v3285 = vunpack.c.l.b16 %v1178
    %v3286 = vunpack.c.l.b16 %v1179
    %v3287 = vunpack.c.l.b16 %v1180
    %v3288 = vunpack.c.l.b16 %v1181
    %v3289 = vunpack.c.l.b16 %v1182
    %v3290 = vunpack.c.l.b16 %v1183
    %v3291 = vunpack.c.l.b16 %v1184
    %v3292 = vunpack.c.l.b16 %v1185
    %v3293 = vunpack.c.l.b16 %v1186
    %v3294 = vunpack.c.l.b16 %v1187
    %v3295 = vunpack.c.l.b16 %v1188
    %v3296 = vunpack.c.l.b16 %v1189
    %v3297 = vunpack.c.l.b16 %v1190
    %v3298 = vunpack.c.l.b16 %v1191
    %v3299 = vunpack.c.l.b16 %v1192
    %v3300 = vunpack.c.l.b16 %v1193
    %v3301 = vunpack.c.l.b16 %v1194
    %v3302 = vunpack.c.l.b16 %v1195
    %v3303 = vunpack.c.l.b16 %v1196
    %v3304 = vunpack.c.l.b16 %v1197
    %v3305 = vunpack.c.l.b16 %v1198
    %v3306 = vunpack.c.l.b16 %v1199
    %v3307 = vunpack.c.l.b16 %v1200
    %v3308 = vunpack.c.l.b16 %v1201
    %v3309 = vunpack.c.l.b16 %v1202
    %v3310 = vunpack.c.l.b16 %v1203
    %v3311 = vpack.c.b16 %v2262, %v2261
    %v3312 = vpack.c.b16 %v2264, %v2263
    %v3313 = vpack.c.b16 %v2266, %v2265
    %v3314 = vpack.c.b16 %v2268, %v2267
    %v3315 = vpack.c.b16 %v2270, %v2269
    %v3316 = vpack.c.b16 %v2272, %v2271
    %v3317 = vpack.c.b16 %v2274, %v2273
    %v3318 = vpack.c.b16 %v2276, %v2275
    %v3319 = vpack.c.b16 %v2278, %v2277
    %v3320 = vpack.c.b16 %v2280, %v2279
    %v3321 = vpack.c.b16 %v2282, %v2281
    %v3322 = vpack.c.b16 %v2284, %v2283
    %v3323 = vpack.c.b16 %v2286, %v2285
    %v3324 = vpack.c.b16 %v2288, %v2287
    %v3325 = vpack.c.b16 %v2290, %v2289
    %v3326 = vpack.c.b16 %v2292, %v2291
    %v3327 = vpack.c.b16 %v2294, %v2293
    %v3328 = vpack.c.b16 %v2296, %v2295
    %v3329 = vpack.c.b16 %v2298, %v2297
    %v3330 = vpack.c.b16 %v2300, %v2299
    %v3331 = vpack.c.b16 %v2302, %v2301
    %v3332 = vpack.c.b16 %v2304, %v2303
    %v3333 = vpack.c.b16 %v2306, %v2305
    %v3334 = vpack.c.b16 %v2308, %v2307
    %v3335 = vpack.c.b16 %v2310, %v2309
    %v3336 = vpack.c.b16 %v2312, %v2311
    %v3337 = vpack.c.b16 %v2314, %v2313
    %v3338 = vpack.c.b16 %v2316, %v2315
    %v3339 = vpack.c.b16 %v2318, %v2317
    %v3340 = vpack.c.b16 %v2320, %v2319
    %v3341 = vpack.c.b16 %v2322, %v2321
    %v3342 = vpack.c.b16 %v2324, %v2323
    %v3343 = vpack.c.b16 %v2326, %v2325
    %v3344 = vpack.c.b16 %v2328, %v2327
    %v3345 = vpack.c.b16 %v2330, %v2329
    %v3346 = vpack.c.b16 %v2332, %v2331
    %v3347 = vpack.c.b16 %v2334, %v2333
    %v3348 = vpack.c.b16 %v2336, %v2335
    %v3349 = vpack.c.b16 %v2338, %v2337
    %v3350 = vpack.c.b16 %v2340, %v2339
    %v3351 = vpack.c.b16 %v2342, %v2341
    %v3352 = vpack.c.b16 %v2344, %v2343
    %v3353 = vpack.c.b16 %v2346, %v2345
    %v3354 = vpack.c.b16 %v2348, %v2347
    %v3355 = vpack.c.b16 %v2350, %v2349
    %v3356 = vpack.c.b16 %v2352, %v2351
    %v3357 = vpack.c.b16 %v2354, %v2353
    %v3358 = vpack.c.b16 %v2356, %v2355
    %v3359 = vpack.c.b16 %v2358, %v2357
    %v3360 = vpack.c.b16 %v2360, %v2359
    %v3361 = vpack.c.b16 %v2362, %v2361
    %v3362 = vpack.c.b16 %v2364, %v2363
    %v3363 = vpack.c.b16 %v2366, %v2365
    %v3364 = vpack.c.b16 %v2368, %v2367
    %v3365 = vpack.c.b16 %v2370, %v2369
    %v3366 = vpack.c.b16 %v2372, %v2371
    %v3367 = vpack.c.b16 %v2374, %v2373
    %v3368 = vpack.c.b16 %v2376, %v2375
    %v3369 = vpack.c.b16 %v2378, %v2377
    %v3370 = vpack.c.b16 %v2380, %v2379
    %v3371 = vpack.c.b16 %v2382, %v2381
    %v3372 = vpack.c.b16 %v2384, %v2383
    %v3373 = vpack.c.b16 %v2386, %v2385
    %v3374 = vpack.c.b16 %v2388, %v2387
    %v3375 = vpack.c.b16 %v2390, %v2389
    %v3376 = vpack.c.b16 %v2392, %v2391
    %v3377 = vpack.c.b16 %v2394, %v2393
    %v3378 = vpack.c.b16 %v2396, %v2395
    %v3379 = vpack.c.b16 %v2398, %v2397
    %v3380 = vpack.c.b16 %v2400, %v2399
    %v3381 = vpack.c.b16 %v2402, %v2401
    %v3382 = vpack.c.b16 %v2404, %v2403
    %v3383 = vpack.c.b16 %v2406, %v2405
    %v3384 = vpack.c.b16 %v2408, %v2407
    %v3385 = vpack.c.b16 %v2410, %v2409
    %v3386 = vpack.c.b16 %v2412, %v2411
    %v3387 = vpack.c.b16 %v2414, %v2413
    %v3388 = vpack.c.b16 %v2416, %v2415
    %v3389 = vpack.c.b16 %v2418, %v2417
    %v3390 = vpack.c.b16 %v2420, %v2419
    %v3391 = vpack.c.b16 %v2422, %v2421
    %v3392 = vpack.c.b16 %v2424, %v2423
    %v3393 = vpack.c.b16 %v2426, %v2425
    %v3394 = vpack.c.b16 %v2428, %v2427
    %v3395 = vpack.c.b16 %v2430, %v2429
    %v3396 = vpack.c.b16 %v2432, %v2431
    %v3397 = vpack.c.b16 %v2434, %v2433
    %v3398 = vpack.c.b16 %v2436, %v2435
    %v3399 = vpack.c.b16 %v2438, %v2437
    %v3400 = vpack.c.b16 %v2440, %v2439
    %v3401 = vpack.c.b16 %v2442, %v2441
    %v3402 = vpack.c.b16 %v2444, %v2443
    %v3403 = vpack.c.b16 %v2446, %v2445
    %v3404 = vpack.c.b16 %v2448, %v2447
    %v3405 = vpack.c.b16 %v2450, %v2449
    %v3406 = vpack.c.b16 %v2452, %v2451
    %v3407 = vpack.c.b16 %v2454, %v2453
    %v3408 = vpack.c.b16 %v2456, %v2455
    %v3409 = vpack.c.b16 %v2458, %v2457
    %v3410 = vpack.c.b16 %v2460, %v2459
    %v3411 = vpack.c.b16 %v2462, %v2461
    %v3412 = vpack.c.b16 %v2464, %v2463
    %v3413 = vpack.c.b16 %v2466, %v2465
    %v3414 = vpack.c.b16 %v2468, %v2467
    %v3415 = vpack.c.b16 %v2470, %v2469
    %v3416 = vpack.c.b16 %v2472, %v2471
    %v3417 = vpack.c.b16 %v2474, %v2473
    %v3418 = vpack.c.b16 %v2476, %v2475
    %v3419 = vpack.c.b16 %v2478, %v2477
    %v3420 = vpack.c.b16 %v2480, %v2479
    %v3421 = vpack.c.b16 %v2482, %v2481
    %v3422 = vpack.c.b16 %v2484, %v2483
    %v3423 = vpack.c.b16 %v2486, %v2485
    %v3424 = vpack.c.b16 %v2488, %v2487
    %v3425 = vpack.c.b16 %v2490, %v2489
    %v3426 = vpack.c.b16 %v2492, %v2491
    %v3427 = vpack.c.b16 %v2494, %v2493
    %v3428 = vpack.c.b16 %v2496, %v2495
    %v3429 = vpack.c.b16 %v2498, %v2497
    %v3430 = vpack.c.b16 %v2500, %v2499
    %v3431 = vpack.c.b16 %v2502, %v2501
    %v3432 = vpack.c.b16 %v2504, %v2503
    %v3433 = vpack.c.b16 %v2506, %v2505
    %v3434 = vpack.c.b16 %v2508, %v2507
    %v3435 = vpack.c.b16 %v2510, %v2509
    %v3436 = vpack.c.b16 %v2512, %v2511
    %v3437 = vpack.c.b16 %v2514, %v2513
    %v3438 = vpack.c.b16 %v2516, %v2515
    %v3439 = vpack.c.b16 %v2518, %v2517
    %v3440 = vpack.c.b16 %v2520, %v2519
    %v3441 = vpack.c.b16 %v2522, %v2521
    %v3442 = vpack.c.b16 %v2524, %v2523
    %v3443 = vpack.c.b16 %v2526, %v2525
    %v3444 = vpack.c.b16 %v2528, %v2527
    %v3445 = vpack.c.b16 %v2530, %v2529
    %v3446 = vpack.c.b16 %v2532, %v2531
    %v3447 = vpack.c.b16 %v2534, %v2533
    %v3448 = vpack.c.b16 %v2536, %v2535
    %v3449 = vpack.c.b16 %v2538, %v2537
    %v3450 = vpack.c.b16 %v2540, %v2539
    %v3451 = vpack.c.b16 %v2542, %v2541
    %v3452 = vpack.c.b16 %v2544, %v2543
    %v3453 = vpack.c.b16 %v2546, %v2545
    %v3454 = vpack.c.b16 %v2548, %v2547
    %v3455 = vpack.c.b16 %v2550, %v2549
    %v3456 = vpack.c.b16 %v2552, %v2551
    %v3457 = vpack.c.b16 %v2554, %v2553
    %v3458 = vpack.c.b16 %v2556, %v2555
    %v3459 = vpack.c.b16 %v2558, %v2557
    %v3460 = vpack.c.b16 %v2560, %v2559
    %v3461 = vpack.c.b16 %v2562, %v2561
    %v3462 = vpack.c.b16 %v2564, %v2563
    %v3463 = vpack.c.b16 %v2566, %v2565
    %v3464 = vpack.c.b16 %v2568, %v2567
    %v3465 = vpack.c.b16 %v2570, %v2569
    %v3466 = vpack.c.b16 %v2572, %v2571
    %v3467 = vpack.c.b16 %v2574, %v2573
    %v3468 = vpack.c.b16 %v2576, %v2575
    %v3469 = vpack.c.b16 %v2578, %v2577
    %v3470 = vpack.c.b16 %v2580, %v2579
    %v3471 = vpack.c.b16 %v2582, %v2581
    %v3472 = vpack.c.b16 %v2584, %v2583
    %v3473 = vpack.c.b16 %v2586, %v2585
    %v3474 = vpack.c.b16 %v2588, %v2587
    %v3475 = vpack.c.b16 %v2590, %v2589
    %v3476 = vpack.c.b16 %v2592, %v2591
    %v3477 = vpack.c.b16 %v2594, %v2593
    %v3478 = vpack.c.b16 %v2596, %v2595
    %v3479 = vpack.c.b16 %v2598, %v2597
    %v3480 = vpack.c.b16 %v2600, %v2599
    %v3481 = vpack.c.b16 %v2602, %v2601
    %v3482 = vpack.c.b16 %v2604, %v2603
    %v3483 = vpack.c.b16 %v2606, %v2605
    %v3484 = vpack.c.b16 %v2608, %v2607
    %v3485 = vpack.c.b16 %v2610, %v2609
    %v3486 = vpack.c.b16 %v2612, %v2611
    %v3487 = vpack.c.b16 %v2614, %v2613
    %v3488 = vpack.c.b16 %v2616, %v2615
    %v3489 = vpack.c.b16 %v2618, %v2617
    %v3490 = vpack.c.b16 %v2620, %v2619
    %v3491 = vpack.c.b16 %v2622, %v2621
    %v3492 = vpack.c.b16 %v2624, %v2623
    %v3493 = vpack.c.b16 %v2626, %v2625
    %v3494 = vpack.c.b16 %v2628, %v2627
    %v3495 = vpack.c.b16 %v2630, %v2629
    %v3496 = vpack.c.b16 %v2632, %v2631
    %v3497 = vpack.c.b16 %v2634, %v2633
    %v3498 = vpack.c.b16 %v2636, %v2635
    %v3499 = vpack.c.b16 %v2638, %v2637
    %v3500 = vpack.c.b16 %v2640, %v2639
    %v3501 = vpack.c.b16 %v2642, %v2641
    %v3502 = vpack.c.b16 %v2644, %v2643
    %v3503 = vpack.c.b16 %v2646, %v2645
    %v3504 = vpack.c.b16 %v2648, %v2647
    %v3505 = vpack.c.b16 %v2650, %v2649
    %v3506 = vpack.c.b16 %v2652, %v2651
    %v3507 = vpack.c.b16 %v2654, %v2653
    %v3508 = vpack.c.b16 %v2656, %v2655
    %v3509 = vpack.c.b16 %v2658, %v2657
    %v3510 = vpack.c.b16 %v2660, %v2659
    %v3511 = vpack.c.b16 %v2662, %v2661
    %v3512 = vpack.c.b16 %v2664, %v2663
    %v3513 = vpack.c.b16 %v2666, %v2665
    %v3514 = vpack.c.b16 %v2668, %v2667
    %v3515 = vpack.c.b16 %v2670, %v2669
    %v3516 = vpack.c.b16 %v2672, %v2671
    %v3517 = vpack.c.b16 %v2674, %v2673
    %v3518 = vpack.c.b16 %v2676, %v2675
    %v3519 = vpack.c.b16 %v2678, %v2677
    %v3520 = vpack.c.b16 %v2680, %v2679
    %v3521 = vpack.c.b16 %v2682, %v2681
    %v3522 = vpack.c.b16 %v2684, %v2683
    %v3523 = vpack.c.b16 %v2686, %v2685
    %v3524 = vpack.c.b16 %v2688, %v2687
    %v3525 = vpack.c.b16 %v2690, %v2689
    %v3526 = vpack.c.b16 %v2692, %v2691
    %v3527 = vpack.c.b16 %v2694, %v2693
    %v3528 = vpack.c.b16 %v2696, %v2695
    %v3529 = vpack.c.b16 %v2698, %v2697
    %v3530 = vpack.c.b16 %v2700, %v2699
    %v3531 = vpack.c.b16 %v2702, %v2701
    %v3532 = vpack.c.b16 %v2704, %v2703
    %v3533 = vpack.c.b16 %v2706, %v2705
    %v3534 = vpack.c.b16 %v2708, %v2707
    %v3535 = vpack.c.b16 %v2710, %v2709
    %v3536 = vpack.c.b16 %v2712, %v2711
    %v3537 = vpack.c.b16 %v2714, %v2713
    %v3538 = vpack.c.b16 %v2716, %v2715
    %v3539 = vpack.c.b16 %v2718, %v2717
    %v3540 = vpack.c.b16 %v2720, %v2719
    %v3541 = vpack.c.b16 %v2722, %v2721
    %v3542 = vpack.c.b16 %v2724, %v2723
    %v3543 = vpack.c.b16 %v2726, %v2725
    %v3544 = vpack.c.b16 %v2728, %v2727
    %v3545 = vpack.c.b16 %v2730, %v2729
    %v3546 = vpack.c.b16 %v2732, %v2731
    %v3547 = vpack.c.b16 %v2734, %v2733
    %v3548 = vpack.c.b16 %v2736, %v2735
    %v3549 = vpack.c.b16 %v2738, %v2737
    %v3550 = vpack.c.b16 %v2740, %v2739
    %v3551 = vpack.c.b16 %v2742, %v2741
    %v3552 = vpack.c.b16 %v2744, %v2743
    %v3553 = vpack.c.b16 %v2746, %v2745
    %v3554 = vpack.c.b16 %v2748, %v2747
    %v3555 = vpack.c.b16 %v2750, %v2749
    %v3556 = vpack.c.b16 %v2752, %v2751
    %v3557 = vpack.c.b16 %v2754, %v2753
    %v3558 = vpack.c.b16 %v2756, %v2755
    %v3559 = vpack.c.b16 %v2758, %v2757
    %v3560 = vpack.c.b16 %v2760, %v2759
    %v3561 = vpack.c.b16 %v2762, %v2761
    %v3562 = vpack.c.b16 %v2764, %v2763
    %v3563 = vpack.c.b16 %v2766, %v2765
    %v3564 = vpack.c.b16 %v2768, %v2767
    %v3565 = vpack.c.b16 %v2770, %v2769
    %v3566 = vpack.c.b16 %v2772, %v2771
    %v3567 = vpack.c.b16 %v2774, %v2773
    %v3568 = vpack.c.b16 %v2776, %v2775
    %v3569 = vpack.c.b16 %v2778, %v2777
    %v3570 = vpack.c.b16 %v2780, %v2779
    %v3571 = vpack.c.b16 %v2782, %v2781
    %v3572 = vpack.c.b16 %v2784, %v2783
    %v3573 = vpack.c.b16 %v2786, %v2785
    %v3574 = vpack.c.b16 %v2788, %v2787
    %v3575 = vpack.c.b16 %v2790, %v2789
    %v3576 = vpack.c.b16 %v2792, %v2791
    %v3577 = vpack.c.b16 %v2794, %v2793
    %v3578 = vpack.c.b16 %v2796, %v2795
    %v3579 = vpack.c.b16 %v2798, %v2797
    %v3580 = vpack.c.b16 %v2800, %v2799
    %v3581 = vpack.c.b16 %v2802, %v2801
    %v3582 = vpack.c.b16 %v2804, %v2803
    %v3583 = vpack.c.b16 %v2806, %v2805
    %v3584 = vpack.c.b16 %v2808, %v2807
    %v3585 = vpack.c.b16 %v2810, %v2809
    %v3586 = vpack.c.b16 %v2812, %v2811
    %v3587 = vpack.c.b16 %v2814, %v2813
    %v3588 = vpack.c.b16 %v2816, %v2815
    %v3589 = vpack.c.b16 %v2818, %v2817
    %v3590 = vpack.c.b16 %v2820, %v2819
    %v3591 = vpack.c.b16 %v2822, %v2821
    %v3592 = vpack.c.b16 %v2824, %v2823
    %v3593 = vpack.c.b16 %v2826, %v2825
    %v3594 = vpack.c.b16 %v2828, %v2827
    %v3595 = vpack.c.b16 %v2830, %v2829
    %v3596 = vpack.c.b16 %v2832, %v2831
    %v3597 = vpack.c.b16 %v2834, %v2833
    %v3598 = vpack.c.b16 %v2836, %v2835
    %v3599 = vpack.c.b16 %v2838, %v2837
    %v3600 = vpack.c.b16 %v2840, %v2839
    %v3601 = vpack.c.b16 %v2842, %v2841
    %v3602 = vpack.c.b16 %v2844, %v2843
    %v3603 = vpack.c.b16 %v2846, %v2845
    %v3604 = vpack.c.b16 %v2848, %v2847
    %v3605 = vpack.c.b16 %v2850, %v2849
    %v3606 = vpack.c.b16 %v2852, %v2851
    %v3607 = vpack.c.b16 %v2854, %v2853
    %v3608 = vpack.c.b16 %v2856, %v2855
    %v3609 = vpack.c.b16 %v2858, %v2857
    %v3610 = vpack.c.b16 %v2860, %v2859
    %v3611 = vpack.c.b16 %v2862, %v2861
    %v3612 = vpack.c.b16 %v2864, %v2863
    %v3613 = vpack.c.b16 %v2866, %v2865
    %v3614 = vpack.c.b16 %v2868, %v2867
    %v3615 = vpack.c.b16 %v2870, %v2869
    %v3616 = vpack.c.b16 %v2872, %v2871
    %v3617 = vpack.c.b16 %v2874, %v2873
    %v3618 = vpack.c.b16 %v2876, %v2875
    %v3619 = vpack.c.b16 %v2878, %v2877
    %v3620 = vpack.c.b16 %v2880, %v2879
    %v3621 = vpack.c.b16 %v2882, %v2881
    %v3622 = vpack.c.b16 %v2884, %v2883
    %v3623 = vpack.c.b16 %v2886, %v2885
    %v3624 = vpack.c.b16 %v2888, %v2887
    %v3625 = vpack.c.b16 %v2890, %v2889
    %v3626 = vpack.c.b16 %v2892, %v2891
    %v3627 = vpack.c.b16 %v2894, %v2893
    %v3628 = vpack.c.b16 %v2896, %v2895
    %v3629 = vpack.c.b16 %v2898, %v2897
    %v3630 = vpack.c.b16 %v2900, %v2899
    %v3631 = vpack.c.b16 %v2902, %v2901
    %v3632 = vpack.c.b16 %v2904, %v2903
    %v3633 = vpack.c.b16 %v2906, %v2905
    %v3634 = vpack.c.b16 %v2908, %v2907
    %v3635 = vpack.c.b16 %v2910, %v2909
    %v3636 = vpack.c.b16 %v2912, %v2911
    %v3637 = vpack.c.b16 %v2914, %v2913
    %v3638 = vpack.c.b16 %v2916, %v2915
    %v3639 = vpack.c.b16 %v2918, %v2917
    %v3640 = vpack.c.b16 %v2920, %v2919
    %v3641 = vpack.c.b16 %v2922, %v2921
    %v3642 = vpack.c.b16 %v2924, %v2923
    %v3643 = vpack.c.b16 %v2926, %v2925
    %v3644 = vpack.c.b16 %v2928, %v2927
    %v3645 = vpack.c.b16 %v2930, %v2929
    %v3646 = vpack.c.b16 %v2932, %v2931
    %v3647 = vpack.c.b16 %v2934, %v2933
    %v3648 = vpack.c.b16 %v2936, %v2935
    %v3649 = vpack.c.b16 %v2938, %v2937
    %v3650 = vpack.c.b16 %v2940, %v2939
    %v3651 = vpack.c.b16 %v2942, %v2941
    %v3652 = vpack.c.b16 %v2944, %v2943
    %v3653 = vpack.c.b16 %v2946, %v2945
    %v3654 = vpack.c.b16 %v2948, %v2947
    %v3655 = vpack.c.b16 %v2950, %v2949
    %v3656 = vpack.c.b16 %v2952, %v2951
    %v3657 = vpack.c.b16 %v2954, %v2953
    %v3658 = vpack.c.b16 %v2956, %v2955
    %v3659 = vpack.c.b16 %v2958, %v2957
    %v3660 = vpack.c.b16 %v2960, %v2959
    %v3661 = vpack.c.b16 %v2962, %v2961
    %v3662 = vpack.c.b16 %v2964, %v2963
    %v3663 = vpack.c.b16 %v2966, %v2965
    %v3664 = vpack.c.b16 %v2968, %v2967
    %v3665 = vpack.c.b16 %v2970, %v2969
    %v3666 = vpack.c.b16 %v2972, %v2971
    %v3667 = vpack.c.b16 %v2974, %v2973
    %v3668 = vpack.c.b16 %v2976, %v2975
    %v3669 = vpack.c.b16 %v2978, %v2977
    %v3670 = vpack.c.b16 %v2980, %v2979
    %v3671 = vpack.c.b16 %v2982, %v2981
    %v3672 = vpack.c.b16 %v2984, %v2983
    %v3673 = vpack.c.b16 %v2986, %v2985
    %v3674 = vpack.c.b16 %v2988, %v2987
    %v3675 = vpack.c.b16 %v2990, %v2989
    %v3676 = vpack.c.b16 %v2992, %v2991
    %v3677 = vpack.c.b16 %v2994, %v2993
    %v3678 = vpack.c.b16 %v2996, %v2995
    %v3679 = vpack.c.b16 %v2998, %v2997
    %v3680 = vpack.c.b16 %v3000, %v2999
    %v3681 = vpack.c.b16 %v3002, %v3001
    %v3682 = vpack.c.b16 %v3004, %v3003
    %v3683 = vpack.c.b16 %v3006, %v3005
    %v3684 = vpack.c.b16 %v3008, %v3007
    %v3685 = vpack.c.b16 %v3010, %v3009
    %v3686 = vpack.c.b16 %v3012, %v3011
    %v3687 = vpack.c.b16 %v3014, %v3013
    %v3688 = vpack.c.b16 %v3016, %v3015
    %v3689 = vpack.c.b16 %v3018, %v3017
    %v3690 = vpack.c.b16 %v3020, %v3019
    %v3691 = vpack.c.b16 %v3022, %v3021
    %v3692 = vpack.c.b16 %v3024, %v3023
    %v3693 = vpack.c.b16 %v3026, %v3025
    %v3694 = vpack.c.b16 %v3028, %v3027
    %v3695 = vpack.c.b16 %v3030, %v3029
    %v3696 = vpack.c.b16 %v3032, %v3031
    %v3697 = vpack.c.b16 %v3034, %v3033
    %v3698 = vpack.c.b16 %v3036, %v3035
    %v3699 = vpack.c.b16 %v3038, %v3037
    %v3700 = vpack.c.b16 %v3040, %v3039
    %v3701 = vpack.c.b16 %v3042, %v3041
    %v3702 = vpack.c.b16 %v3044, %v3043
    %v3703 = vpack.c.b16 %v3046, %v3045
    %v3704 = vpack.c.b16 %v3048, %v3047
    %v3705 = vpack.c.b16 %v3050, %v3049
    %v3706 = vpack.c.b16 %v3052, %v3051
    %v3707 = vpack.c.b16 %v3054, %v3053
    %v3708 = vpack.c.b16 %v3056, %v3055
    %v3709 = vpack.c.b16 %v3058, %v3057
    %v3710 = vpack.c.b16 %v3060, %v3059
    %v3711 = vpack.c.b16 %v3062, %v3061
    %v3712 = vpack.c.b16 %v3064, %v3063
    %v3713 = vpack.c.b16 %v3066, %v3065
    %v3714 = vpack.c.b16 %v3068, %v3067
    %v3715 = vpack.c.b16 %v3070, %v3069
    %v3716 = vpack.c.b16 %v3072, %v3071
    %v3717 = vpack.c.b16 %v3074, %v3073
    %v3718 = vpack.c.b16 %v3076, %v3075
    %v3719 = vpack.c.b16 %v3078, %v3077
    %v3720 = vpack.c.b16 %v3080, %v3079
    %v3721 = vpack.c.b16 %v3082, %v3081
    %v3722 = vpack.c.b16 %v3084, %v3083
    %v3723 = vpack.c.b16 %v3086, %v3085
    %v3724 = vpack.c.b16 %v3088, %v3087
    %v3725 = vpack.c.b16 %v3090, %v3089
    %v3726 = vpack.c.b16 %v3092, %v3091
    %v3727 = vpack.c.b16 %v3094, %v3093
    %v3728 = vpack.c.b16 %v3096, %v3095
    %v3729 = vpack.c.b16 %v3098, %v3097
    %v3730 = vpack.c.b16 %v3100, %v3099
    %v3731 = vpack.c.b16 %v3102, %v3101
    %v3732 = vpack.c.b16 %v3104, %v3103
    %v3733 = vpack.c.b16 %v3106, %v3105
    %v3734 = vpack.c.b16 %v3108, %v3107
    %v3735 = vpack.c.b16 %v3110, %v3109
    %v3736 = vpack.c.b16 %v3112, %v3111
    %v3737 = vpack.c.b16 %v3114, %v3113
    %v3738 = vpack.c.b16 %v3116, %v3115
    %v3739 = vpack.c.b16 %v3118, %v3117
    %v3740 = vpack.c.b16 %v3120, %v3119
    %v3741 = vpack.c.b16 %v3122, %v3121
    %v3742 = vpack.c.b16 %v3124, %v3123
    %v3743 = vpack.c.b16 %v3126, %v3125
    %v3744 = vpack.c.b16 %v3128, %v3127
    %v3745 = vpack.c.b16 %v3130, %v3129
    %v3746 = vpack.c.b16 %v3132, %v3131
    %v3747 = vpack.c.b16 %v3134, %v3133
    %v3748 = vpack.c.b16 %v3136, %v3135
    %v3749 = vpack.c.b16 %v3138, %v3137
    %v3750 = vpack.c.b16 %v3140, %v3139
    %v3751 = vpack.c.b16 %v3142, %v3141
    %v3752 = vpack.c.b16 %v3144, %v3143
    %v3753 = vpack.c.b16 %v3146, %v3145
    %v3754 = vpack.c.b16 %v3148, %v3147
    %v3755 = vpack.c.b16 %v3150, %v3149
    %v3756 = vpack.c.b16 %v3152, %v3151
    %v3757 = vpack.c.b16 %v3154, %v3153
    %v3758 = vpack.c.b16 %v3156, %v3155
    %v3759 = vpack.c.b16 %v3158, %v3157
    %v3760 = vpack.c.b16 %v3160, %v3159
    %v3761 = vpack.c.b16 %v3162, %v3161
    %v3762 = vpack.c.b16 %v3164, %v3163
    %v3763 = vpack.c.b16 %v3166, %v3165
    %v3764 = vpack.c.b16 %v3168, %v3167
    %v3765 = vpack.c.b16 %v3170, %v3169
    %v3766 = vpack.c.b16 %v3172, %v3171
    %v3767 = vpack.c.b16 %v3174, %v3173
    %v3768 = vpack.c.b16 %v3176, %v3175
    %v3769 = vpack.c.b16 %v3178, %v3177
    %v3770 = vpack.c.b16 %v3180, %v3179
    %v3771 = vpack.c.b16 %v3182, %v3181
    %v3772 = vpack.c.b16 %v3184, %v3183
    %v3773 = vpack.c.b16 %v3186, %v3185
    %v3774 = vpack.c.b16 %v3188, %v3187
    %v3775 = vpack.c.b16 %v3190, %v3189
    %v3776 = vpack.c.b16 %v3192, %v3191
    %v3777 = vpack.c.b16 %v3194, %v3193
    %v3778 = vpack.c.b16 %v3196, %v3195
    %v3779 = vpack.c.b16 %v3198, %v3197
    %v3780 = vpack.c.b16 %v3200, %v3199
    %v3781 = vpack.c.b16 %v3202, %v3201
    %v3782 = vpack.c.b16 %v3204, %v3203
    %v3783 = vpack.c.b16 %v3206, %v3205
    %v3784 = vpack.c.b16 %v3208, %v3207
    %v3785 = vpack.c.b16 %v3210, %v3209
    %v3786 = vpack.c.b16 %v3212, %v3211
    %v3787 = vpack.c.b16 %v3214, %v3213
    %v3788 = vpack.c.b16 %v3216, %v3215
    %v3789 = vpack.c.b16 %v3218, %v3217
    %v3790 = vpack.c.b16 %v3220, %v3219
    %v3791 = vpack.c.b16 %v3222, %v3221
    %v3792 = vpack.c.b16 %v3224, %v3223
    %v3793 = vpack.c.b16 %v3226, %v3225
    %v3794 = vpack.c.b16 %v3228, %v3227
    %v3795 = vpack.c.b16 %v3230, %v3229
    %v3796 = vpack.c.b16 %v3232, %v3231
    %v3797 = vpack.c.b16 %v3234, %v3233
    %v3798 = vpack.c.b16 %v3236, %v3235
    %v3799 = vpack.c.b16 %v3238, %v3237
    %v3800 = vpack.c.b16 %v3240, %v3239
    %v3801 = vpack.c.b16 %v3242, %v3241
    %v3802 = vpack.c.b16 %v3244, %v3243
    %v3803 = vpack.c.b16 %v3246, %v3245
    %v3804 = vpack.c.b16 %v3248, %v3247
    %v3805 = vpack.c.b16 %v3250, %v3249
    %v3806 = vpack.c.b16 %v3252, %v3251
    %v3807 = vpack.c.b16 %v3254, %v3253
    %v3808 = vpack.c.b16 %v3256, %v3255
    %v3809 = vpack.c.b16 %v3258, %v3257
    %v3810 = vpack.c.b16 %v3260, %v3259
    %v3811 = vpack.c.b16 %v3262, %v3261
    %v3812 = vpack.c.b16 %v3264, %v3263
    %v3813 = vpack.c.b16 %v3266, %v3265
    %v3814 = vpack.c.b16 %v3268, %v3267
    %v3815 = vpack.c.b16 %v3270, %v3269
    %v3816 = vpack.c.b16 %v3272, %v3271
    %v3817 = vpack.c.b16 %v3274, %v3273
    %v3818 = vpack.c.b16 %v3276, %v3275
    %v3819 = vpack.c.b16 %v3278, %v3277
    %v3820 = vpack.c.b16 %v3280, %v3279
    %v3821 = vpack.c.b16 %v3282, %v3281
    %v3822 = vpack.c.b16 %v3284, %v3283
    %v3823 = vpack.c.b16 %v3286, %v3285
    %v3824 = vpack.c.b16 %v3288, %v3287
    %v3825 = vpack.c.b16 %v3290, %v3289
    %v3826 = vpack.c.b16 %v3292, %v3291
    %v3827 = vpack.c.b16 %v3294, %v3293
    %v3828 = vpack.c.b16 %v3296, %v3295
    %v3829 = vpack.c.b16 %v3298, %v3297
    %v3830 = vpack.c.b16 %v3300, %v3299
    %v3831 = vpack.c.b16 %v3302, %v3301
    %v3832 = vpack.c.b16 %v3304, %v3303
    %v3833 = vpack.c.b16 %v3306, %v3305
    %v3834 = vpack.c.b16 %v3308, %v3307
    %v3835 = vpack.c.b16 %v3310, %v3309
    %vm4361 = vcmask 654336
    %v4363 = vsel %vm4361, %v153, 0
    %4365 = vmatprep.subr.bf16.mxu0 0
    %4366 = vmatpush1.bf16.msra.mxu0 %v3318
    %4367 = vmatprep.subr.bf16.mxu0 0
    %4368 = vmatpush1.bf16.msra.mxu0 %v3317
    %4369 = vmatprep.subr.bf16.mxu0 0
    %4370 = vmatpush1.bf16.msra.mxu0 %v3316
    %4371 = vmatprep.subr.bf16.mxu0 0
    %4372 = vmatpush1.bf16.msra.mxu0 %v3315
    %4373 = vmatprep.subr.bf16.mxu0 0
    %4374 = vmatpush1.bf16.msra.mxu0 %v3314
    %4375 = vmatprep.subr.bf16.mxu0 0
    %4376 = vmatpush1.bf16.msra.mxu0 %v3313
    %4377 = vmatprep.subr.bf16.mxu0 0
    %4378 = vmatpush1.bf16.msra.mxu0 %v3312
    %4379 = vmatprep.subr.bf16.mxu0 0
    %4380 = vmatpush1.bf16.msra.mxu0 %v3311
    %4381 = vmatprep.subr.bf16.mxu0 0
    %4382 = vmatpush2.bf16.msra.mxu0 %v3326
    %4383 = vmatprep.subr.bf16.mxu0 0
    %4384 = vmatpush2.bf16.msra.mxu0 %v3325
    %4385 = vmatprep.subr.bf16.mxu0 0
    %4386 = vmatpush2.bf16.msra.mxu0 %v3324
    %4387 = vmatprep.subr.bf16.mxu0 0
    %4388 = vmatpush2.bf16.msra.mxu0 %v3323
    %4389 = vmatprep.subr.bf16.mxu0 0
    %4390 = vmatpush2.bf16.msra.mxu0 %v3322
    %4391 = vmatprep.subr.bf16.mxu0 0
    %4392 = vmatpush2.bf16.msra.mxu0 %v3321
    %4393 = vmatprep.subr.bf16.mxu0 0
    %4394 = vmatpush2.bf16.msra.mxu0 %v3320
    %4395 = vmatprep.subr.bf16.mxu0 0
    %4396 = vmatpush2.bf16.msra.mxu0 %v3319
    %4397 = vmatprep.mubr.bf16.mxu0 %v89
    %4398 = vmatmul.mubr.bf16.gmra.mxu0 %v88
    %v4399 = vpop.f32.mrf.mxu0
    %v4400 = vadd.f32 %v1209, %v4399
    %v4401 = vpop.f32.mrf.mxu0
    %v4402 = vpop.f32.mrf.mxu0
    %v4403 = vpop.f32.mrf.mxu0
    %4404 = vdwg.mxu0
    %4405 = vmatprep.subr.bf16.mxu0 0
    %4406 = vmatpush1.bf16.msra.mxu0 %v3334
    %4407 = vmatprep.subr.bf16.mxu0 0
    %4408 = vmatpush1.bf16.msra.mxu0 %v3333
    %4409 = vmatprep.subr.bf16.mxu0 0
    %4410 = vmatpush1.bf16.msra.mxu0 %v3332
    %4411 = vmatprep.subr.bf16.mxu0 0
    %4412 = vmatpush1.bf16.msra.mxu0 %v3331
    %4413 = vmatprep.subr.bf16.mxu0 0
    %4414 = vmatpush1.bf16.msra.mxu0 %v3330
    %4415 = vmatprep.subr.bf16.mxu0 0
    %4416 = vmatpush1.bf16.msra.mxu0 %v3329
    %4417 = vmatprep.subr.bf16.mxu0 0
    %4418 = vmatpush1.bf16.msra.mxu0 %v3328
    %4419 = vmatprep.subr.bf16.mxu0 0
    %4420 = vmatpush1.bf16.msra.mxu0 %v3327
    %4421 = vmatprep.subr.bf16.mxu0 0
    %4422 = vmatpush2.bf16.msra.mxu0 %v3342
    %4423 = vmatprep.subr.bf16.mxu0 0
    %4424 = vmatpush2.bf16.msra.mxu0 %v3341
    %4425 = vmatprep.subr.bf16.mxu0 0
    %4426 = vmatpush2.bf16.msra.mxu0 %v3340
    %4427 = vmatprep.subr.bf16.mxu0 0
    %4428 = vmatpush2.bf16.msra.mxu0 %v3339
    %4429 = vmatprep.subr.bf16.mxu0 0
    %4430 = vmatpush2.bf16.msra.mxu0 %v3338
    %4431 = vmatprep.subr.bf16.mxu0 0
    %4432 = vmatpush2.bf16.msra.mxu0 %v3337
    %4433 = vmatprep.subr.bf16.mxu0 0
    %4434 = vmatpush2.bf16.msra.mxu0 %v3336
    %4435 = vmatprep.subr.bf16.mxu0 0
    %4436 = vmatpush2.bf16.msra.mxu0 %v3335
    %4437 = vmatprep.mubr.bf16.mxu0 %v91
    %4438 = vmatmul.mubr.bf16.gmra.mxu0 %v90
    %v4439 = vpop.f32.mrf.mxu0
    %v4440 = vadd.f32 %v4400, %v4439
    %v4441 = vpop.f32.mrf.mxu0
    %v4442 = vpop.f32.mrf.mxu0
    %v4443 = vpop.f32.mrf.mxu0
    %4444 = vdwg.mxu0
    %4445 = vmatprep.subr.bf16.mxu0 0
    %4446 = vmatpush1.bf16.msra.mxu0 %v3350
    %4447 = vmatprep.subr.bf16.mxu0 0
    %4448 = vmatpush1.bf16.msra.mxu0 %v3349
    %4449 = vmatprep.subr.bf16.mxu0 0
    %4450 = vmatpush1.bf16.msra.mxu0 %v3348
    %4451 = vmatprep.subr.bf16.mxu0 0
    %4452 = vmatpush1.bf16.msra.mxu0 %v3347
    %4453 = vmatprep.subr.bf16.mxu0 0
    %4454 = vmatpush1.bf16.msra.mxu0 %v3346
    %4455 = vmatprep.subr.bf16.mxu0 0
    %4456 = vmatpush1.bf16.msra.mxu0 %v3345
    %4457 = vmatprep.subr.bf16.mxu0 0
    %4458 = vmatpush1.bf16.msra.mxu0 %v3344
    %4459 = vmatprep.subr.bf16.mxu0 0
    %4460 = vmatpush1.bf16.msra.mxu0 %v3343
    %4461 = vmatprep.subr.bf16.mxu0 0
    %4462 = vmatpush2.bf16.msra.mxu0 %v3358
    %4463 = vmatprep.subr.bf16.mxu0 0
    %4464 = vmatpush2.bf16.msra.mxu0 %v3357
    %4465 = vmatprep.subr.bf16.mxu0 0
    %4466 = vmatpush2.bf16.msra.mxu0 %v3356
    %4467 = vmatprep.subr.bf16.mxu0 0
    %4468 = vmatpush2.bf16.msra.mxu0 %v3355
    %4469 = vmatprep.subr.bf16.mxu0 0
    %4470 = vmatpush2.bf16.msra.mxu0 %v3354
    %4471 = vmatprep.subr.bf16.mxu0 0
    %4472 = vmatpush2.bf16.msra.mxu0 %v3353
    %4473 = vmatprep.subr.bf16.mxu0 0
    %4474 = vmatpush2.bf16.msra.mxu0 %v3352
    %4475 = vmatprep.subr.bf16.mxu0 0
    %4476 = vmatpush2.bf16.msra.mxu0 %v3351
    %4477 = vmatprep.mubr.bf16.mxu0 %v93
    %4478 = vmatmul.mubr.bf16.gmra.mxu0 %v92
    %v4479 = vpop.f32.mrf.mxu0
    %v4480 = vadd.f32 %v4440, %v4479
    %v4481 = vpop.f32.mrf.mxu0
    %v4482 = vpop.f32.mrf.mxu0
    %v4483 = vpop.f32.mrf.mxu0
    %4484 = vdwg.mxu0
    %4485 = vmatprep.subr.bf16.mxu0 0
    %4486 = vmatpush1.bf16.msra.mxu0 %v3366
    %4487 = vmatprep.subr.bf16.mxu0 0
    %4488 = vmatpush1.bf16.msra.mxu0 %v3365
    %4489 = vmatprep.subr.bf16.mxu0 0
    %4490 = vmatpush1.bf16.msra.mxu0 %v3364
    %4491 = vmatprep.subr.bf16.mxu0 0
    %4492 = vmatpush1.bf16.msra.mxu0 %v3363
    %4493 = vmatprep.subr.bf16.mxu0 0
    %4494 = vmatpush1.bf16.msra.mxu0 %v3362
    %4495 = vmatprep.subr.bf16.mxu0 0
    %4496 = vmatpush1.bf16.msra.mxu0 %v3361
    %4497 = vmatprep.subr.bf16.mxu0 0
    %4498 = vmatpush1.bf16.msra.mxu0 %v3360
    %4499 = vmatprep.subr.bf16.mxu0 0
    %4500 = vmatpush1.bf16.msra.mxu0 %v3359
    %4501 = vmatprep.subr.bf16.mxu0 0
    %4502 = vmatpush2.bf16.msra.mxu0 %v3374
    %4503 = vmatprep.subr.bf16.mxu0 0
    %4504 = vmatpush2.bf16.msra.mxu0 %v3373
    %4505 = vmatprep.subr.bf16.mxu0 0
    %4506 = vmatpush2.bf16.msra.mxu0 %v3372
    %4507 = vmatprep.subr.bf16.mxu0 0
    %4508 = vmatpush2.bf16.msra.mxu0 %v3371
    %4509 = vmatprep.subr.bf16.mxu0 0
    %4510 = vmatpush2.bf16.msra.mxu0 %v3370
    %4511 = vmatprep.subr.bf16.mxu0 0
    %4512 = vmatpush2.bf16.msra.mxu0 %v3369
    %4513 = vmatprep.subr.bf16.mxu0 0
    %4514 = vmatpush2.bf16.msra.mxu0 %v3368
    %4515 = vmatprep.subr.bf16.mxu0 0
    %4516 = vmatpush2.bf16.msra.mxu0 %v3367
    %4517 = vmatprep.mubr.bf16.mxu0 %v95
    %4518 = vmatmul.mubr.bf16.gmra.mxu0 %v94
    %v4519 = vpop.f32.mrf.mxu0
    %v4520 = vadd.f32 %v4480, %v4519
    %v4521 = vpop.f32.mrf.mxu0
    %v4522 = vpop.f32.mrf.mxu0
    %v4523 = vpop.f32.mrf.mxu0
    %4524 = vdwg.mxu0
    %4525 = vmatprep.subr.bf16.mxu0 0
    %4526 = vmatpush1.bf16.msra.mxu0 %v3382
    %4527 = vmatprep.subr.bf16.mxu0 0
    %4528 = vmatpush1.bf16.msra.mxu0 %v3381
    %4529 = vmatprep.subr.bf16.mxu0 0
    %4530 = vmatpush1.bf16.msra.mxu0 %v3380
    %4531 = vmatprep.subr.bf16.mxu0 0
    %4532 = vmatpush1.bf16.msra.mxu0 %v3379
    %4533 = vmatprep.subr.bf16.mxu0 0
    %4534 = vmatpush1.bf16.msra.mxu0 %v3378
    %4535 = vmatprep.subr.bf16.mxu0 0
    %4536 = vmatpush1.bf16.msra.mxu0 %v3377
    %4537 = vmatprep.subr.bf16.mxu0 0
    %4538 = vmatpush1.bf16.msra.mxu0 %v3376
    %4539 = vmatprep.subr.bf16.mxu0 0
    %4540 = vmatpush1.bf16.msra.mxu0 %v3375
    %4541 = vmatprep.subr.bf16.mxu0 0
    %4542 = vmatpush2.bf16.msra.mxu0 %v3390
    %4543 = vmatprep.subr.bf16.mxu0 0
    %4544 = vmatpush2.bf16.msra.mxu0 %v3389
    %4545 = vmatprep.subr.bf16.mxu0 0
    %4546 = vmatpush2.bf16.msra.mxu0 %v3388
    %4547 = vmatprep.subr.bf16.mxu0 0
    %4548 = vmatpush2.bf16.msra.mxu0 %v3387
    %4549 = vmatprep.subr.bf16.mxu0 0
    %4550 = vmatpush2.bf16.msra.mxu0 %v3386
    %4551 = vmatprep.subr.bf16.mxu0 0
    %4552 = vmatpush2.bf16.msra.mxu0 %v3385
    %4553 = vmatprep.subr.bf16.mxu0 0
    %4554 = vmatpush2.bf16.msra.mxu0 %v3384
    %4555 = vmatprep.subr.bf16.mxu0 0
    %4556 = vmatpush2.bf16.msra.mxu0 %v3383
    %4557 = vmatprep.mubr.bf16.mxu0 %v97
    %4558 = vmatmul.mubr.bf16.gmra.mxu0 %v96
    %v4559 = vpop.f32.mrf.mxu0
    %v4560 = vadd.f32 %v4520, %v4559
    %v4561 = vpop.f32.mrf.mxu0
    %v4562 = vpop.f32.mrf.mxu0
    %v4563 = vpop.f32.mrf.mxu0
    %4564 = vdwg.mxu0
    %4565 = vmatprep.subr.bf16.mxu0 0
    %4566 = vmatpush1.bf16.msra.mxu0 %v3398
    %4567 = vmatprep.subr.bf16.mxu0 0
    %4568 = vmatpush1.bf16.msra.mxu0 %v3397
    %4569 = vmatprep.subr.bf16.mxu0 0
    %4570 = vmatpush1.bf16.msra.mxu0 %v3396
    %4571 = vmatprep.subr.bf16.mxu0 0
    %4572 = vmatpush1.bf16.msra.mxu0 %v3395
    %4573 = vmatprep.subr.bf16.mxu0 0
    %4574 = vmatpush1.bf16.msra.mxu0 %v3394
    %4575 = vmatprep.subr.bf16.mxu0 0
    %4576 = vmatpush1.bf16.msra.mxu0 %v3393
    %4577 = vmatprep.subr.bf16.mxu0 0
    %4578 = vmatpush1.bf16.msra.mxu0 %v3392
    %4579 = vmatprep.subr.bf16.mxu0 0
    %4580 = vmatpush1.bf16.msra.mxu0 %v3391
    %4581 = vmatprep.subr.bf16.mxu0 0
    %4582 = vmatpush2.bf16.msra.mxu0 %v3406
    %4583 = vmatprep.subr.bf16.mxu0 0
    %4584 = vmatpush2.bf16.msra.mxu0 %v3405
    %4585 = vmatprep.subr.bf16.mxu0 0
    %4586 = vmatpush2.bf16.msra.mxu0 %v3404
    %4587 = vmatprep.subr.bf16.mxu0 0
    %4588 = vmatpush2.bf16.msra.mxu0 %v3403
    %4589 = vmatprep.subr.bf16.mxu0 0
    %4590 = vmatpush2.bf16.msra.mxu0 %v3402
    %4591 = vmatprep.subr.bf16.mxu0 0
    %4592 = vmatpush2.bf16.msra.mxu0 %v3401
    %4593 = vmatprep.subr.bf16.mxu0 0
    %4594 = vmatpush2.bf16.msra.mxu0 %v3400
    %4595 = vmatprep.subr.bf16.mxu0 0
    %4596 = vmatpush2.bf16.msra.mxu0 %v3399
    %4597 = vmatprep.mubr.bf16.mxu0 %v99
    %4598 = vmatmul.mubr.bf16.gmra.mxu0 %v98
    %v4599 = vpop.f32.mrf.mxu0
    %v4600 = vadd.f32 %v4560, %v4599
    %v4601 = vpop.f32.mrf.mxu0
    %v4602 = vpop.f32.mrf.mxu0
    %v4603 = vpop.f32.mrf.mxu0
    %4604 = vdwg.mxu0
    %4605 = vmatprep.subr.bf16.mxu0 0
    %4606 = vmatpush1.bf16.msra.mxu0 %v3414
    %4607 = vmatprep.subr.bf16.mxu0 0
    %4608 = vmatpush1.bf16.msra.mxu0 %v3413
    %4609 = vmatprep.subr.bf16.mxu0 0
    %4610 = vmatpush1.bf16.msra.mxu0 %v3412
    %4611 = vmatprep.subr.bf16.mxu0 0
    %4612 = vmatpush1.bf16.msra.mxu0 %v3411
    %4613 = vmatprep.subr.bf16.mxu0 0
    %4614 = vmatpush1.bf16.msra.mxu0 %v3410
    %4615 = vmatprep.subr.bf16.mxu0 0
    %4616 = vmatpush1.bf16.msra.mxu0 %v3409
    %4617 = vmatprep.subr.bf16.mxu0 0
    %4618 = vmatpush1.bf16.msra.mxu0 %v3408
    %4619 = vmatprep.subr.bf16.mxu0 0
    %4620 = vmatpush1.bf16.msra.mxu0 %v3407
    %4621 = vmatprep.subr.bf16.mxu0 0
    %4622 = vmatpush2.bf16.msra.mxu0 %v3422
    %4623 = vmatprep.subr.bf16.mxu0 0
    %4624 = vmatpush2.bf16.msra.mxu0 %v3421
    %4625 = vmatprep.subr.bf16.mxu0 0
    %4626 = vmatpush2.bf16.msra.mxu0 %v3420
    %4627 = vmatprep.subr.bf16.mxu0 0
    %4628 = vmatpush2.bf16.msra.mxu0 %v3419
    %4629 = vmatprep.subr.bf16.mxu0 0
    %4630 = vmatpush2.bf16.msra.mxu0 %v3418
    %4631 = vmatprep.subr.bf16.mxu0 0
    %4632 = vmatpush2.bf16.msra.mxu0 %v3417
    %4633 = vmatprep.subr.bf16.mxu0 0
    %4634 = vmatpush2.bf16.msra.mxu0 %v3416
    %4635 = vmatprep.subr.bf16.mxu0 0
    %4636 = vmatpush2.bf16.msra.mxu0 %v3415
    %4637 = vmatprep.mubr.bf16.mxu0 %v101
    %4638 = vmatmul.mubr.bf16.gmra.mxu0 %v100
    %v4639 = vpop.f32.mrf.mxu0
    %v4640 = vadd.f32 %v4600, %v4639
    %v4641 = vpop.f32.mrf.mxu0
    %v4642 = vpop.f32.mrf.mxu0
    %v4643 = vpop.f32.mrf.mxu0
    %4644 = vdwg.mxu0
    %4645 = vmatprep.subr.bf16.mxu0 0
    %4646 = vmatpush1.bf16.msra.mxu0 %v3430
    %4647 = vmatprep.subr.bf16.mxu0 0
    %4648 = vmatpush1.bf16.msra.mxu0 %v3429
    %4649 = vmatprep.subr.bf16.mxu0 0
    %4650 = vmatpush1.bf16.msra.mxu0 %v3428
    %4651 = vmatprep.subr.bf16.mxu0 0
    %4652 = vmatpush1.bf16.msra.mxu0 %v3427
    %4653 = vmatprep.subr.bf16.mxu0 0
    %4654 = vmatpush1.bf16.msra.mxu0 %v3426
    %4655 = vmatprep.subr.bf16.mxu0 0
    %4656 = vmatpush1.bf16.msra.mxu0 %v3425
    %4657 = vmatprep.subr.bf16.mxu0 0
    %4658 = vmatpush1.bf16.msra.mxu0 %v3424
    %4659 = vmatprep.subr.bf16.mxu0 0
    %4660 = vmatpush1.bf16.msra.mxu0 %v3423
    %4661 = vmatprep.subr.bf16.mxu0 0
    %4662 = vmatpush2.bf16.msra.mxu0 %v3438
    %4663 = vmatprep.subr.bf16.mxu0 0
    %4664 = vmatpush2.bf16.msra.mxu0 %v3437
    %4665 = vmatprep.subr.bf16.mxu0 0
    %4666 = vmatpush2.bf16.msra.mxu0 %v3436
    %4667 = vmatprep.subr.bf16.mxu0 0
    %4668 = vmatpush2.bf16.msra.mxu0 %v3435
    %4669 = vmatprep.subr.bf16.mxu0 0
    %4670 = vmatpush2.bf16.msra.mxu0 %v3434
    %4671 = vmatprep.subr.bf16.mxu0 0
    %4672 = vmatpush2.bf16.msra.mxu0 %v3433
    %4673 = vmatprep.subr.bf16.mxu0 0
    %4674 = vmatpush2.bf16.msra.mxu0 %v3432
    %4675 = vmatprep.subr.bf16.mxu0 0
    %4676 = vmatpush2.bf16.msra.mxu0 %v3431
    %4677 = vmatprep.mubr.bf16.mxu0 %v103
    %4678 = vmatmul.mubr.bf16.gmra.mxu0 %v102
    %v4679 = vpop.f32.mrf.mxu0
    %v4680 = vadd.f32 %v4640, %v4679
    %v4681 = vpop.f32.mrf.mxu0
    %v4682 = vpop.f32.mrf.mxu0
    %v4683 = vpop.f32.mrf.mxu0
    %4684 = vdwg.mxu0
    %4685 = vmatprep.subr.bf16.mxu0 0
    %4686 = vmatpush1.bf16.msra.mxu0 %v3446
    %4687 = vmatprep.subr.bf16.mxu0 0
    %4688 = vmatpush1.bf16.msra.mxu0 %v3445
    %4689 = vmatprep.subr.bf16.mxu0 0
    %4690 = vmatpush1.bf16.msra.mxu0 %v3444
    %4691 = vmatprep.subr.bf16.mxu0 0
    %4692 = vmatpush1.bf16.msra.mxu0 %v3443
    %4693 = vmatprep.subr.bf16.mxu0 0
    %4694 = vmatpush1.bf16.msra.mxu0 %v3442
    %4695 = vmatprep.subr.bf16.mxu0 0
    %4696 = vmatpush1.bf16.msra.mxu0 %v3441
    %4697 = vmatprep.subr.bf16.mxu0 0
    %4698 = vmatpush1.bf16.msra.mxu0 %v3440
    %4699 = vmatprep.subr.bf16.mxu0 0
    %4700 = vmatpush1.bf16.msra.mxu0 %v3439
    %4701 = vmatprep.subr.bf16.mxu0 0
    %4702 = vmatpush2.bf16.msra.mxu0 %v3454
    %4703 = vmatprep.subr.bf16.mxu0 0
    %4704 = vmatpush2.bf16.msra.mxu0 %v3453
    %4705 = vmatprep.subr.bf16.mxu0 0
    %4706 = vmatpush2.bf16.msra.mxu0 %v3452
    %4707 = vmatprep.subr.bf16.mxu0 0
    %4708 = vmatpush2.bf16.msra.mxu0 %v3451
    %4709 = vmatprep.subr.bf16.mxu0 0
    %4710 = vmatpush2.bf16.msra.mxu0 %v3450
    %4711 = vmatprep.subr.bf16.mxu0 0
    %4712 = vmatpush2.bf16.msra.mxu0 %v3449
    %4713 = vmatprep.subr.bf16.mxu0 0
    %4714 = vmatpush2.bf16.msra.mxu0 %v3448
    %4715 = vmatprep.subr.bf16.mxu0 0
    %4716 = vmatpush2.bf16.msra.mxu0 %v3447
    %4717 = vmatprep.mubr.bf16.mxu0 %v105
    %4718 = vmatmul.mubr.bf16.gmra.mxu0 %v104
    %v4719 = vpop.f32.mrf.mxu0
    %v4720 = vadd.f32 %v4680, %v4719
    %v4721 = vpop.f32.mrf.mxu0
    %v4722 = vpop.f32.mrf.mxu0
    %v4723 = vpop.f32.mrf.mxu0
    %4724 = vdwg.mxu0
    %4725 = vmatprep.subr.bf16.mxu0 0
    %4726 = vmatpush1.bf16.msra.mxu0 %v3462
    %4727 = vmatprep.subr.bf16.mxu0 0
    %4728 = vmatpush1.bf16.msra.mxu0 %v3461
    %4729 = vmatprep.subr.bf16.mxu0 0
    %4730 = vmatpush1.bf16.msra.mxu0 %v3460
    %4731 = vmatprep.subr.bf16.mxu0 0
    %4732 = vmatpush1.bf16.msra.mxu0 %v3459
    %4733 = vmatprep.subr.bf16.mxu0 0
    %4734 = vmatpush1.bf16.msra.mxu0 %v3458
    %4735 = vmatprep.subr.bf16.mxu0 0
    %4736 = vmatpush1.bf16.msra.mxu0 %v3457
    %4737 = vmatprep.subr.bf16.mxu0 0
    %4738 = vmatpush1.bf16.msra.mxu0 %v3456
    %4739 = vmatprep.subr.bf16.mxu0 0
    %4740 = vmatpush1.bf16.msra.mxu0 %v3455
    %4741 = vmatprep.subr.bf16.mxu0 0
    %4742 = vmatpush2.bf16.msra.mxu0 %v3470
    %4743 = vmatprep.subr.bf16.mxu0 0
    %4744 = vmatpush2.bf16.msra.mxu0 %v3469
    %4745 = vmatprep.subr.bf16.mxu0 0
    %4746 = vmatpush2.bf16.msra.mxu0 %v3468
    %4747 = vmatprep.subr.bf16.mxu0 0
    %4748 = vmatpush2.bf16.msra.mxu0 %v3467
    %4749 = vmatprep.subr.bf16.mxu0 0
    %4750 = vmatpush2.bf16.msra.mxu0 %v3466
    %4751 = vmatprep.subr.bf16.mxu0 0
    %4752 = vmatpush2.bf16.msra.mxu0 %v3465
    %4753 = vmatprep.subr.bf16.mxu0 0
    %4754 = vmatpush2.bf16.msra.mxu0 %v3464
    %4755 = vmatprep.subr.bf16.mxu0 0
    %4756 = vmatpush2.bf16.msra.mxu0 %v3463
    %4757 = vmatprep.mubr.bf16.mxu0 %v107
    %4758 = vmatmul.mubr.bf16.gmra.mxu0 %v106
    %v4759 = vpop.f32.mrf.mxu0
    %v4760 = vadd.f32 %v4720, %v4759
    %v4761 = vpop.f32.mrf.mxu0
    %v4762 = vpop.f32.mrf.mxu0
    %v4763 = vpop.f32.mrf.mxu0
    %4764 = vdwg.mxu0
    %4765 = vmatprep.subr.bf16.mxu0 0
    %4766 = vmatpush1.bf16.msra.mxu0 %v3478
    %4767 = vmatprep.subr.bf16.mxu0 0
    %4768 = vmatpush1.bf16.msra.mxu0 %v3477
    %4769 = vmatprep.subr.bf16.mxu0 0
    %4770 = vmatpush1.bf16.msra.mxu0 %v3476
    %4771 = vmatprep.subr.bf16.mxu0 0
    %4772 = vmatpush1.bf16.msra.mxu0 %v3475
    %4773 = vmatprep.subr.bf16.mxu0 0
    %4774 = vmatpush1.bf16.msra.mxu0 %v3474
    %4775 = vmatprep.subr.bf16.mxu0 0
    %4776 = vmatpush1.bf16.msra.mxu0 %v3473
    %4777 = vmatprep.subr.bf16.mxu0 0
    %4778 = vmatpush1.bf16.msra.mxu0 %v3472
    %4779 = vmatprep.subr.bf16.mxu0 0
    %4780 = vmatpush1.bf16.msra.mxu0 %v3471
    %4781 = vmatprep.subr.bf16.mxu0 0
    %4782 = vmatpush2.bf16.msra.mxu0 %v3486
    %4783 = vmatprep.subr.bf16.mxu0 0
    %4784 = vmatpush2.bf16.msra.mxu0 %v3485
    %4785 = vmatprep.subr.bf16.mxu0 0
    %4786 = vmatpush2.bf16.msra.mxu0 %v3484
    %4787 = vmatprep.subr.bf16.mxu0 0
    %4788 = vmatpush2.bf16.msra.mxu0 %v3483
    %4789 = vmatprep.subr.bf16.mxu0 0
    %4790 = vmatpush2.bf16.msra.mxu0 %v3482
    %4791 = vmatprep.subr.bf16.mxu0 0
    %4792 = vmatpush2.bf16.msra.mxu0 %v3481
    %4793 = vmatprep.subr.bf16.mxu0 0
    %4794 = vmatpush2.bf16.msra.mxu0 %v3480
    %4795 = vmatprep.subr.bf16.mxu0 0
    %4796 = vmatpush2.bf16.msra.mxu0 %v3479
    %4797 = vmatprep.mubr.bf16.mxu0 %v109
    %4798 = vmatmul.mubr.bf16.gmra.mxu0 %v108
    %v4799 = vpop.f32.mrf.mxu0
    %v4800 = vadd.f32 %v4760, %v4799
    %v4801 = vpop.f32.mrf.mxu0
    %v4802 = vpop.f32.mrf.mxu0
    %v4803 = vpop.f32.mrf.mxu0
    %4804 = vdwg.mxu0
    %4805 = vmatprep.subr.bf16.mxu0 0
    %4806 = vmatpush1.bf16.msra.mxu0 %v3494
    %4807 = vmatprep.subr.bf16.mxu0 0
    %4808 = vmatpush1.bf16.msra.mxu0 %v3493
    %4809 = vmatprep.subr.bf16.mxu0 0
    %4810 = vmatpush1.bf16.msra.mxu0 %v3492
    %4811 = vmatprep.subr.bf16.mxu0 0
    %4812 = vmatpush1.bf16.msra.mxu0 %v3491
    %4813 = vmatprep.subr.bf16.mxu0 0
    %4814 = vmatpush1.bf16.msra.mxu0 %v3490
    %4815 = vmatprep.subr.bf16.mxu0 0
    %4816 = vmatpush1.bf16.msra.mxu0 %v3489
    %4817 = vmatprep.subr.bf16.mxu0 0
    %4818 = vmatpush1.bf16.msra.mxu0 %v3488
    %4819 = vmatprep.subr.bf16.mxu0 0
    %4820 = vmatpush1.bf16.msra.mxu0 %v3487
    %4821 = vmatprep.subr.bf16.mxu0 0
    %4822 = vmatpush2.bf16.msra.mxu0 %v3502
    %4823 = vmatprep.subr.bf16.mxu0 0
    %4824 = vmatpush2.bf16.msra.mxu0 %v3501
    %4825 = vmatprep.subr.bf16.mxu0 0
    %4826 = vmatpush2.bf16.msra.mxu0 %v3500
    %4827 = vmatprep.subr.bf16.mxu0 0
    %4828 = vmatpush2.bf16.msra.mxu0 %v3499
    %4829 = vmatprep.subr.bf16.mxu0 0
    %4830 = vmatpush2.bf16.msra.mxu0 %v3498
    %4831 = vmatprep.subr.bf16.mxu0 0
    %4832 = vmatpush2.bf16.msra.mxu0 %v3497
    %4833 = vmatprep.subr.bf16.mxu0 0
    %4834 = vmatpush2.bf16.msra.mxu0 %v3496
    %4835 = vmatprep.subr.bf16.mxu0 0
    %4836 = vmatpush2.bf16.msra.mxu0 %v3495
    %4837 = vmatprep.mubr.bf16.mxu0 %v111
    %4838 = vmatmul.mubr.bf16.gmra.mxu0 %v110
    %v4839 = vpop.f32.mrf.mxu0
    %v4840 = vadd.f32 %v4800, %v4839
    %v4841 = vpop.f32.mrf.mxu0
    %v4842 = vpop.f32.mrf.mxu0
    %v4843 = vpop.f32.mrf.mxu0
    %4844 = vdwg.mxu0
    %4845 = vmatprep.subr.bf16.mxu0 0
    %4846 = vmatpush1.bf16.msra.mxu0 %v3510
    %4847 = vmatprep.subr.bf16.mxu0 0
    %4848 = vmatpush1.bf16.msra.mxu0 %v3509
    %4849 = vmatprep.subr.bf16.mxu0 0
    %4850 = vmatpush1.bf16.msra.mxu0 %v3508
    %4851 = vmatprep.subr.bf16.mxu0 0
    %4852 = vmatpush1.bf16.msra.mxu0 %v3507
    %4853 = vmatprep.subr.bf16.mxu0 0
    %4854 = vmatpush1.bf16.msra.mxu0 %v3506
    %4855 = vmatprep.subr.bf16.mxu0 0
    %4856 = vmatpush1.bf16.msra.mxu0 %v3505
    %4857 = vmatprep.subr.bf16.mxu0 0
    %4858 = vmatpush1.bf16.msra.mxu0 %v3504
    %4859 = vmatprep.subr.bf16.mxu0 0
    %4860 = vmatpush1.bf16.msra.mxu0 %v3503
    %4861 = vmatprep.subr.bf16.mxu0 0
    %4862 = vmatpush2.bf16.msra.mxu0 %v3518
    %4863 = vmatprep.subr.bf16.mxu0 0
    %4864 = vmatpush2.bf16.msra.mxu0 %v3517
    %4865 = vmatprep.subr.bf16.mxu0 0
    %4866 = vmatpush2.bf16.msra.mxu0 %v3516
    %4867 = vmatprep.subr.bf16.mxu0 0
    %4868 = vmatpush2.bf16.msra.mxu0 %v3515
    %4869 = vmatprep.subr.bf16.mxu0 0
    %4870 = vmatpush2.bf16.msra.mxu0 %v3514
    %4871 = vmatprep.subr.bf16.mxu0 0
    %4872 = vmatpush2.bf16.msra.mxu0 %v3513
    %4873 = vmatprep.subr.bf16.mxu0 0
    %4874 = vmatpush2.bf16.msra.mxu0 %v3512
    %4875 = vmatprep.subr.bf16.mxu0 0
    %4876 = vmatpush2.bf16.msra.mxu0 %v3511
    %4877 = vmatprep.mubr.bf16.mxu0 %v113
    %4878 = vmatmul.mubr.bf16.gmra.mxu0 %v112
    %v4879 = vpop.f32.mrf.mxu0
    %v4880 = vadd.f32 %v4840, %v4879
    %v4881 = vpop.f32.mrf.mxu0
    %v4882 = vpop.f32.mrf.mxu0
    %v4883 = vpop.f32.mrf.mxu0
    %4884 = vdwg.mxu0
    %4885 = vmatprep.subr.bf16.mxu0 0
    %4886 = vmatpush1.bf16.msra.mxu0 %v3526
    %4887 = vmatprep.subr.bf16.mxu0 0
    %4888 = vmatpush1.bf16.msra.mxu0 %v3525
    %4889 = vmatprep.subr.bf16.mxu0 0
    %4890 = vmatpush1.bf16.msra.mxu0 %v3524
    %4891 = vmatprep.subr.bf16.mxu0 0
    %4892 = vmatpush1.bf16.msra.mxu0 %v3523
    %4893 = vmatprep.subr.bf16.mxu0 0
    %4894 = vmatpush1.bf16.msra.mxu0 %v3522
    %4895 = vmatprep.subr.bf16.mxu0 0
    %4896 = vmatpush1.bf16.msra.mxu0 %v3521
    %4897 = vmatprep.subr.bf16.mxu0 0
    %4898 = vmatpush1.bf16.msra.mxu0 %v3520
    %4899 = vmatprep.subr.bf16.mxu0 0
    %4900 = vmatpush1.bf16.msra.mxu0 %v3519
    %4901 = vmatprep.subr.bf16.mxu0 0
    %4902 = vmatpush2.bf16.msra.mxu0 %v3534
    %4903 = vmatprep.subr.bf16.mxu0 0
    %4904 = vmatpush2.bf16.msra.mxu0 %v3533
    %4905 = vmatprep.subr.bf16.mxu0 0
    %4906 = vmatpush2.bf16.msra.mxu0 %v3532
    %4907 = vmatprep.subr.bf16.mxu0 0
    %4908 = vmatpush2.bf16.msra.mxu0 %v3531
    %4909 = vmatprep.subr.bf16.mxu0 0
    %4910 = vmatpush2.bf16.msra.mxu0 %v3530
    %4911 = vmatprep.subr.bf16.mxu0 0
    %4912 = vmatpush2.bf16.msra.mxu0 %v3529
    %4913 = vmatprep.subr.bf16.mxu0 0
    %4914 = vmatpush2.bf16.msra.mxu0 %v3528
    %4915 = vmatprep.subr.bf16.mxu0 0
    %4916 = vmatpush2.bf16.msra.mxu0 %v3527
    %4917 = vmatprep.mubr.bf16.mxu0 %v115
    %4918 = vmatmul.mubr.bf16.gmra.mxu0 %v114
    %v4919 = vpop.f32.mrf.mxu0
    %v4920 = vadd.f32 %v4880, %v4919
    %v4921 = vpop.f32.mrf.mxu0
    %v4922 = vpop.f32.mrf.mxu0
    %v4923 = vpop.f32.mrf.mxu0
    %4924 = vdwg.mxu0
    %4925 = vmatprep.subr.bf16.mxu0 0
    %4926 = vmatpush1.bf16.msra.mxu0 %v3542
    %4927 = vmatprep.subr.bf16.mxu0 0
    %4928 = vmatpush1.bf16.msra.mxu0 %v3541
    %4929 = vmatprep.subr.bf16.mxu0 0
    %4930 = vmatpush1.bf16.msra.mxu0 %v3540
    %4931 = vmatprep.subr.bf16.mxu0 0
    %4932 = vmatpush1.bf16.msra.mxu0 %v3539
    %4933 = vmatprep.subr.bf16.mxu0 0
    %4934 = vmatpush1.bf16.msra.mxu0 %v3538
    %4935 = vmatprep.subr.bf16.mxu0 0
    %4936 = vmatpush1.bf16.msra.mxu0 %v3537
    %4937 = vmatprep.subr.bf16.mxu0 0
    %4938 = vmatpush1.bf16.msra.mxu0 %v3536
    %4939 = vmatprep.subr.bf16.mxu0 0
    %4940 = vmatpush1.bf16.msra.mxu0 %v3535
    %4941 = vmatprep.subr.bf16.mxu0 0
    %4942 = vmatpush2.bf16.msra.mxu0 %v3550
    %4943 = vmatprep.subr.bf16.mxu0 0
    %4944 = vmatpush2.bf16.msra.mxu0 %v3549
    %4945 = vmatprep.subr.bf16.mxu0 0
    %4946 = vmatpush2.bf16.msra.mxu0 %v3548
    %4947 = vmatprep.subr.bf16.mxu0 0
    %4948 = vmatpush2.bf16.msra.mxu0 %v3547
    %4949 = vmatprep.subr.bf16.mxu0 0
    %4950 = vmatpush2.bf16.msra.mxu0 %v3546
    %4951 = vmatprep.subr.bf16.mxu0 0
    %4952 = vmatpush2.bf16.msra.mxu0 %v3545
    %4953 = vmatprep.subr.bf16.mxu0 0
    %4954 = vmatpush2.bf16.msra.mxu0 %v3544
    %4955 = vmatprep.subr.bf16.mxu0 0
    %4956 = vmatpush2.bf16.msra.mxu0 %v3543
    %4957 = vmatprep.mubr.bf16.mxu0 %v117
    %4958 = vmatmul.mubr.bf16.gmra.mxu0 %v116
    %v4959 = vpop.f32.mrf.mxu0
    %v4960 = vadd.f32 %v4920, %v4959
    %v4961 = vpop.f32.mrf.mxu0
    %v4962 = vpop.f32.mrf.mxu0
    %v4963 = vpop.f32.mrf.mxu0
    %4964 = vdwg.mxu0
    %4965 = vmatprep.subr.bf16.mxu0 0
    %4966 = vmatpush1.bf16.msra.mxu0 %v3558
    %4967 = vmatprep.subr.bf16.mxu0 0
    %4968 = vmatpush1.bf16.msra.mxu0 %v3557
    %4969 = vmatprep.subr.bf16.mxu0 0
    %4970 = vmatpush1.bf16.msra.mxu0 %v3556
    %4971 = vmatprep.subr.bf16.mxu0 0
    %4972 = vmatpush1.bf16.msra.mxu0 %v3555
    %4973 = vmatprep.subr.bf16.mxu0 0
    %4974 = vmatpush1.bf16.msra.mxu0 %v3554
    %4975 = vmatprep.subr.bf16.mxu0 0
    %4976 = vmatpush1.bf16.msra.mxu0 %v3553
    %4977 = vmatprep.subr.bf16.mxu0 0
    %4978 = vmatpush1.bf16.msra.mxu0 %v3552
    %4979 = vmatprep.subr.bf16.mxu0 0
    %4980 = vmatpush1.bf16.msra.mxu0 %v3551
    %4981 = vmatprep.subr.bf16.mxu0 0
    %4982 = vmatpush2.bf16.msra.mxu0 %v3566
    %4983 = vmatprep.subr.bf16.mxu0 0
    %4984 = vmatpush2.bf16.msra.mxu0 %v3565
    %4985 = vmatprep.subr.bf16.mxu0 0
    %4986 = vmatpush2.bf16.msra.mxu0 %v3564
    %4987 = vmatprep.subr.bf16.mxu0 0
    %4988 = vmatpush2.bf16.msra.mxu0 %v3563
    %4989 = vmatprep.subr.bf16.mxu0 0
    %4990 = vmatpush2.bf16.msra.mxu0 %v3562
    %4991 = vmatprep.subr.bf16.mxu0 0
    %4992 = vmatpush2.bf16.msra.mxu0 %v3561
    %4993 = vmatprep.subr.bf16.mxu0 0
    %4994 = vmatpush2.bf16.msra.mxu0 %v3560
    %4995 = vmatprep.subr.bf16.mxu0 0
    %4996 = vmatpush2.bf16.msra.mxu0 %v3559
    %4997 = vmatprep.mubr.bf16.mxu0 %v119
    %4998 = vmatmul.mubr.bf16.gmra.mxu0 %v118
    %v4999 = vpop.f32.mrf.mxu0
    %v5000 = vadd.f32 %v4960, %v4999
    %v5001 = vpop.f32.mrf.mxu0
    %v5002 = vpop.f32.mrf.mxu0
    %v5003 = vpop.f32.mrf.mxu0
    %5004 = vdwg.mxu0
    %5005 = vmatprep.subr.bf16.mxu0 0
    %5006 = vmatpush1.bf16.msra.mxu0 %v3574
    %5007 = vmatprep.subr.bf16.mxu0 0
    %5008 = vmatpush1.bf16.msra.mxu0 %v3573
    %5009 = vmatprep.subr.bf16.mxu0 0
    %5010 = vmatpush1.bf16.msra.mxu0 %v3572
    %5011 = vmatprep.subr.bf16.mxu0 0
    %5012 = vmatpush1.bf16.msra.mxu0 %v3571
    %5013 = vmatprep.subr.bf16.mxu0 0
    %5014 = vmatpush1.bf16.msra.mxu0 %v3570
    %5015 = vmatprep.subr.bf16.mxu0 0
    %5016 = vmatpush1.bf16.msra.mxu0 %v3569
    %5017 = vmatprep.subr.bf16.mxu0 0
    %5018 = vmatpush1.bf16.msra.mxu0 %v3568
    %5019 = vmatprep.subr.bf16.mxu0 0
    %5020 = vmatpush1.bf16.msra.mxu0 %v3567
    %5021 = vmatprep.subr.bf16.mxu0 0
    %5022 = vmatpush2.bf16.msra.mxu0 %v3582
    %5023 = vmatprep.subr.bf16.mxu0 0
    %5024 = vmatpush2.bf16.msra.mxu0 %v3581
    %5025 = vmatprep.subr.bf16.mxu0 0
    %5026 = vmatpush2.bf16.msra.mxu0 %v3580
    %5027 = vmatprep.subr.bf16.mxu0 0
    %5028 = vmatpush2.bf16.msra.mxu0 %v3579
    %5029 = vmatprep.subr.bf16.mxu0 0
    %5030 = vmatpush2.bf16.msra.mxu0 %v3578
    %5031 = vmatprep.subr.bf16.mxu0 0
    %5032 = vmatpush2.bf16.msra.mxu0 %v3577
    %5033 = vmatprep.subr.bf16.mxu0 0
    %5034 = vmatpush2.bf16.msra.mxu0 %v3576
    %5035 = vmatprep.subr.bf16.mxu0 0
    %5036 = vmatpush2.bf16.msra.mxu0 %v3575
    %5037 = vmatprep.mubr.bf16.mxu0 %v121
    %5038 = vmatmul.mubr.bf16.gmra.mxu0 %v120
    %v5039 = vpop.f32.mrf.mxu0
    %v5040 = vadd.f32 %v5000, %v5039
    %v5041 = vpop.f32.mrf.mxu0
    %v5042 = vpop.f32.mrf.mxu0
    %v5043 = vpop.f32.mrf.mxu0
    %5044 = vdwg.mxu0
    %5045 = vmatprep.subr.bf16.mxu0 0
    %5046 = vmatpush1.bf16.msra.mxu0 %v3590
    %5047 = vmatprep.subr.bf16.mxu0 0
    %5048 = vmatpush1.bf16.msra.mxu0 %v3589
    %5049 = vmatprep.subr.bf16.mxu0 0
    %5050 = vmatpush1.bf16.msra.mxu0 %v3588
    %5051 = vmatprep.subr.bf16.mxu0 0
    %5052 = vmatpush1.bf16.msra.mxu0 %v3587
    %5053 = vmatprep.subr.bf16.mxu0 0
    %5054 = vmatpush1.bf16.msra.mxu0 %v3586
    %5055 = vmatprep.subr.bf16.mxu0 0
    %5056 = vmatpush1.bf16.msra.mxu0 %v3585
    %5057 = vmatprep.subr.bf16.mxu0 0
    %5058 = vmatpush1.bf16.msra.mxu0 %v3584
    %5059 = vmatprep.subr.bf16.mxu0 0
    %5060 = vmatpush1.bf16.msra.mxu0 %v3583
    %5061 = vmatprep.subr.bf16.mxu0 0
    %5062 = vmatpush2.bf16.msra.mxu0 %v3598
    %5063 = vmatprep.subr.bf16.mxu0 0
    %5064 = vmatpush2.bf16.msra.mxu0 %v3597
    %5065 = vmatprep.subr.bf16.mxu0 0
    %5066 = vmatpush2.bf16.msra.mxu0 %v3596
    %5067 = vmatprep.subr.bf16.mxu0 0
    %5068 = vmatpush2.bf16.msra.mxu0 %v3595
    %5069 = vmatprep.subr.bf16.mxu0 0
    %5070 = vmatpush2.bf16.msra.mxu0 %v3594
    %5071 = vmatprep.subr.bf16.mxu0 0
    %5072 = vmatpush2.bf16.msra.mxu0 %v3593
    %5073 = vmatprep.subr.bf16.mxu0 0
    %5074 = vmatpush2.bf16.msra.mxu0 %v3592
    %5075 = vmatprep.subr.bf16.mxu0 0
    %5076 = vmatpush2.bf16.msra.mxu0 %v3591
    %5077 = vmatprep.mubr.bf16.mxu0 %v123
    %5078 = vmatmul.mubr.bf16.gmra.mxu0 %v122
    %v5079 = vpop.f32.mrf.mxu0
    %v5080 = vadd.f32 %v5040, %v5079
    %v5081 = vpop.f32.mrf.mxu0
    %v5082 = vpop.f32.mrf.mxu0
    %v5083 = vpop.f32.mrf.mxu0
    %5084 = vdwg.mxu0
    %5085 = vmatprep.subr.bf16.mxu0 0
    %5086 = vmatpush1.bf16.msra.mxu0 %v3606
    %5087 = vmatprep.subr.bf16.mxu0 0
    %5088 = vmatpush1.bf16.msra.mxu0 %v3605
    %5089 = vmatprep.subr.bf16.mxu0 0
    %5090 = vmatpush1.bf16.msra.mxu0 %v3604
    %5091 = vmatprep.subr.bf16.mxu0 0
    %5092 = vmatpush1.bf16.msra.mxu0 %v3603
    %5093 = vmatprep.subr.bf16.mxu0 0
    %5094 = vmatpush1.bf16.msra.mxu0 %v3602
    %5095 = vmatprep.subr.bf16.mxu0 0
    %5096 = vmatpush1.bf16.msra.mxu0 %v3601
    %5097 = vmatprep.subr.bf16.mxu0 0
    %5098 = vmatpush1.bf16.msra.mxu0 %v3600
    %5099 = vmatprep.subr.bf16.mxu0 0
    %5100 = vmatpush1.bf16.msra.mxu0 %v3599
    %5101 = vmatprep.subr.bf16.mxu0 0
    %5102 = vmatpush2.bf16.msra.mxu0 %v3614
    %5103 = vmatprep.subr.bf16.mxu0 0
    %5104 = vmatpush2.bf16.msra.mxu0 %v3613
    %5105 = vmatprep.subr.bf16.mxu0 0
    %5106 = vmatpush2.bf16.msra.mxu0 %v3612
    %5107 = vmatprep.subr.bf16.mxu0 0
    %5108 = vmatpush2.bf16.msra.mxu0 %v3611
    %5109 = vmatprep.subr.bf16.mxu0 0
    %5110 = vmatpush2.bf16.msra.mxu0 %v3610
    %5111 = vmatprep.subr.bf16.mxu0 0
    %5112 = vmatpush2.bf16.msra.mxu0 %v3609
    %5113 = vmatprep.subr.bf16.mxu0 0
    %5114 = vmatpush2.bf16.msra.mxu0 %v3608
    %5115 = vmatprep.subr.bf16.mxu0 0
    %5116 = vmatpush2.bf16.msra.mxu0 %v3607
    %5117 = vmatprep.mubr.bf16.mxu0 %v125
    %5118 = vmatmul.mubr.bf16.gmra.mxu0 %v124
    %v5119 = vpop.f32.mrf.mxu0
    %v5120 = vadd.f32 %v5080, %v5119
    %v5121 = vpop.f32.mrf.mxu0
    %v5122 = vpop.f32.mrf.mxu0
    %v5123 = vpop.f32.mrf.mxu0
    %5124 = vdwg.mxu0
    %5125 = vmatprep.subr.bf16.mxu0 0
    %5126 = vmatpush1.bf16.msra.mxu0 %v3622
    %5127 = vmatprep.subr.bf16.mxu0 0
    %5128 = vmatpush1.bf16.msra.mxu0 %v3621
    %5129 = vmatprep.subr.bf16.mxu0 0
    %5130 = vmatpush1.bf16.msra.mxu0 %v3620
    %5131 = vmatprep.subr.bf16.mxu0 0
    %5132 = vmatpush1.bf16.msra.mxu0 %v3619
    %5133 = vmatprep.subr.bf16.mxu0 0
    %5134 = vmatpush1.bf16.msra.mxu0 %v3618
    %5135 = vmatprep.subr.bf16.mxu0 0
    %5136 = vmatpush1.bf16.msra.mxu0 %v3617
    %5137 = vmatprep.subr.bf16.mxu0 0
    %5138 = vmatpush1.bf16.msra.mxu0 %v3616
    %5139 = vmatprep.subr.bf16.mxu0 0
    %5140 = vmatpush1.bf16.msra.mxu0 %v3615
    %5141 = vmatprep.subr.bf16.mxu0 0
    %5142 = vmatpush2.bf16.msra.mxu0 %v3630
    %5143 = vmatprep.subr.bf16.mxu0 0
    %5144 = vmatpush2.bf16.msra.mxu0 %v3629
    %5145 = vmatprep.subr.bf16.mxu0 0
    %5146 = vmatpush2.bf16.msra.mxu0 %v3628
    %5147 = vmatprep.subr.bf16.mxu0 0
    %5148 = vmatpush2.bf16.msra.mxu0 %v3627
    %5149 = vmatprep.subr.bf16.mxu0 0
    %5150 = vmatpush2.bf16.msra.mxu0 %v3626
    %5151 = vmatprep.subr.bf16.mxu0 0
    %5152 = vmatpush2.bf16.msra.mxu0 %v3625
    %5153 = vmatprep.subr.bf16.mxu0 0
    %5154 = vmatpush2.bf16.msra.mxu0 %v3624
    %5155 = vmatprep.subr.bf16.mxu0 0
    %5156 = vmatpush2.bf16.msra.mxu0 %v3623
    %5157 = vmatprep.mubr.bf16.mxu0 %v127
    %5158 = vmatmul.mubr.bf16.gmra.mxu0 %v126
    %v5159 = vpop.f32.mrf.mxu0
    %v5160 = vadd.f32 %v5120, %v5159
    %v5161 = vpop.f32.mrf.mxu0
    %v5162 = vpop.f32.mrf.mxu0
    %v5163 = vpop.f32.mrf.mxu0
    %5164 = vdwg.mxu0
    %5165 = vmatprep.subr.bf16.mxu0 0
    %5166 = vmatpush1.bf16.msra.mxu0 %v3638
    %5167 = vmatprep.subr.bf16.mxu0 0
    %5168 = vmatpush1.bf16.msra.mxu0 %v3637
    %5169 = vmatprep.subr.bf16.mxu0 0
    %5170 = vmatpush1.bf16.msra.mxu0 %v3636
    %5171 = vmatprep.subr.bf16.mxu0 0
    %5172 = vmatpush1.bf16.msra.mxu0 %v3635
    %5173 = vmatprep.subr.bf16.mxu0 0
    %5174 = vmatpush1.bf16.msra.mxu0 %v3634
    %5175 = vmatprep.subr.bf16.mxu0 0
    %5176 = vmatpush1.bf16.msra.mxu0 %v3633
    %5177 = vmatprep.subr.bf16.mxu0 0
    %5178 = vmatpush1.bf16.msra.mxu0 %v3632
    %5179 = vmatprep.subr.bf16.mxu0 0
    %5180 = vmatpush1.bf16.msra.mxu0 %v3631
    %5181 = vmatprep.subr.bf16.mxu0 0
    %5182 = vmatpush2.bf16.msra.mxu0 %v3646
    %5183 = vmatprep.subr.bf16.mxu0 0
    %5184 = vmatpush2.bf16.msra.mxu0 %v3645
    %5185 = vmatprep.subr.bf16.mxu0 0
    %5186 = vmatpush2.bf16.msra.mxu0 %v3644
    %5187 = vmatprep.subr.bf16.mxu0 0
    %5188 = vmatpush2.bf16.msra.mxu0 %v3643
    %5189 = vmatprep.subr.bf16.mxu0 0
    %5190 = vmatpush2.bf16.msra.mxu0 %v3642
    %5191 = vmatprep.subr.bf16.mxu0 0
    %5192 = vmatpush2.bf16.msra.mxu0 %v3641
    %5193 = vmatprep.subr.bf16.mxu0 0
    %5194 = vmatpush2.bf16.msra.mxu0 %v3640
    %5195 = vmatprep.subr.bf16.mxu0 0
    %5196 = vmatpush2.bf16.msra.mxu0 %v3639
    %5197 = vmatprep.mubr.bf16.mxu0 %v129
    %5198 = vmatmul.mubr.bf16.gmra.mxu0 %v128
    %v5199 = vpop.f32.mrf.mxu0
    %v5200 = vadd.f32 %v5160, %v5199
    %v5201 = vpop.f32.mrf.mxu0
    %v5202 = vpop.f32.mrf.mxu0
    %v5203 = vpop.f32.mrf.mxu0
    %5204 = vdwg.mxu0
    %5205 = vmatprep.subr.bf16.mxu0 0
    %5206 = vmatpush1.bf16.msra.mxu0 %v3654
    %5207 = vmatprep.subr.bf16.mxu0 0
    %5208 = vmatpush1.bf16.msra.mxu0 %v3653
    %5209 = vmatprep.subr.bf16.mxu0 0
    %5210 = vmatpush1.bf16.msra.mxu0 %v3652
    %5211 = vmatprep.subr.bf16.mxu0 0
    %5212 = vmatpush1.bf16.msra.mxu0 %v3651
    %5213 = vmatprep.subr.bf16.mxu0 0
    %5214 = vmatpush1.bf16.msra.mxu0 %v3650
    %5215 = vmatprep.subr.bf16.mxu0 0
    %5216 = vmatpush1.bf16.msra.mxu0 %v3649
    %5217 = vmatprep.subr.bf16.mxu0 0
    %5218 = vmatpush1.bf16.msra.mxu0 %v3648
    %5219 = vmatprep.subr.bf16.mxu0 0
    %5220 = vmatpush1.bf16.msra.mxu0 %v3647
    %5221 = vmatprep.subr.bf16.mxu0 0
    %5222 = vmatpush2.bf16.msra.mxu0 %v3662
    %5223 = vmatprep.subr.bf16.mxu0 0
    %5224 = vmatpush2.bf16.msra.mxu0 %v3661
    %5225 = vmatprep.subr.bf16.mxu0 0
    %5226 = vmatpush2.bf16.msra.mxu0 %v3660
    %5227 = vmatprep.subr.bf16.mxu0 0
    %5228 = vmatpush2.bf16.msra.mxu0 %v3659
    %5229 = vmatprep.subr.bf16.mxu0 0
    %5230 = vmatpush2.bf16.msra.mxu0 %v3658
    %5231 = vmatprep.subr.bf16.mxu0 0
    %5232 = vmatpush2.bf16.msra.mxu0 %v3657
    %5233 = vmatprep.subr.bf16.mxu0 0
    %5234 = vmatpush2.bf16.msra.mxu0 %v3656
    %5235 = vmatprep.subr.bf16.mxu0 0
    %5236 = vmatpush2.bf16.msra.mxu0 %v3655
    %5237 = vmatprep.mubr.bf16.mxu0 %v131
    %5238 = vmatmul.mubr.bf16.gmra.mxu0 %v130
    %v5239 = vpop.f32.mrf.mxu0
    %v5240 = vadd.f32 %v5200, %v5239
    %v5241 = vpop.f32.mrf.mxu0
    %v5242 = vpop.f32.mrf.mxu0
    %v5243 = vpop.f32.mrf.mxu0
    %5244 = vdwg.mxu0
    %5245 = vmatprep.subr.bf16.mxu0 0
    %5246 = vmatpush1.bf16.msra.mxu0 %v3670
    %5247 = vmatprep.subr.bf16.mxu0 0
    %5248 = vmatpush1.bf16.msra.mxu0 %v3669
    %5249 = vmatprep.subr.bf16.mxu0 0
    %5250 = vmatpush1.bf16.msra.mxu0 %v3668
    %5251 = vmatprep.subr.bf16.mxu0 0
    %5252 = vmatpush1.bf16.msra.mxu0 %v3667
    %5253 = vmatprep.subr.bf16.mxu0 0
    %5254 = vmatpush1.bf16.msra.mxu0 %v3666
    %5255 = vmatprep.subr.bf16.mxu0 0
    %5256 = vmatpush1.bf16.msra.mxu0 %v3665
    %5257 = vmatprep.subr.bf16.mxu0 0
    %5258 = vmatpush1.bf16.msra.mxu0 %v3664
    %5259 = vmatprep.subr.bf16.mxu0 0
    %5260 = vmatpush1.bf16.msra.mxu0 %v3663
    %5261 = vmatprep.subr.bf16.mxu0 0
    %5262 = vmatpush2.bf16.msra.mxu0 %v3678
    %5263 = vmatprep.subr.bf16.mxu0 0
    %5264 = vmatpush2.bf16.msra.mxu0 %v3677
    %5265 = vmatprep.subr.bf16.mxu0 0
    %5266 = vmatpush2.bf16.msra.mxu0 %v3676
    %5267 = vmatprep.subr.bf16.mxu0 0
    %5268 = vmatpush2.bf16.msra.mxu0 %v3675
    %5269 = vmatprep.subr.bf16.mxu0 0
    %5270 = vmatpush2.bf16.msra.mxu0 %v3674
    %5271 = vmatprep.subr.bf16.mxu0 0
    %5272 = vmatpush2.bf16.msra.mxu0 %v3673
    %5273 = vmatprep.subr.bf16.mxu0 0
    %5274 = vmatpush2.bf16.msra.mxu0 %v3672
    %5275 = vmatprep.subr.bf16.mxu0 0
    %5276 = vmatpush2.bf16.msra.mxu0 %v3671
    %5277 = vmatprep.mubr.bf16.mxu0 %v133
    %5278 = vmatmul.mubr.bf16.gmra.mxu0 %v132
    %v5279 = vpop.f32.mrf.mxu0
    %v5280 = vadd.f32 %v5240, %v5279
    %v5281 = vpop.f32.mrf.mxu0
    %v5282 = vpop.f32.mrf.mxu0
    %v5283 = vpop.f32.mrf.mxu0
    %5284 = vdwg.mxu0
    %5285 = vmatprep.subr.bf16.mxu0 0
    %5286 = vmatpush1.bf16.msra.mxu0 %v3686
    %5287 = vmatprep.subr.bf16.mxu0 0
    %5288 = vmatpush1.bf16.msra.mxu0 %v3685
    %5289 = vmatprep.subr.bf16.mxu0 0
    %5290 = vmatpush1.bf16.msra.mxu0 %v3684
    %5291 = vmatprep.subr.bf16.mxu0 0
    %5292 = vmatpush1.bf16.msra.mxu0 %v3683
    %5293 = vmatprep.subr.bf16.mxu0 0
    %5294 = vmatpush1.bf16.msra.mxu0 %v3682
    %5295 = vmatprep.subr.bf16.mxu0 0
    %5296 = vmatpush1.bf16.msra.mxu0 %v3681
    %5297 = vmatprep.subr.bf16.mxu0 0
    %5298 = vmatpush1.bf16.msra.mxu0 %v3680
    %5299 = vmatprep.subr.bf16.mxu0 0
    %5300 = vmatpush1.bf16.msra.mxu0 %v3679
    %5301 = vmatprep.subr.bf16.mxu0 0
    %5302 = vmatpush2.bf16.msra.mxu0 %v3694
    %5303 = vmatprep.subr.bf16.mxu0 0
    %5304 = vmatpush2.bf16.msra.mxu0 %v3693
    %5305 = vmatprep.subr.bf16.mxu0 0
    %5306 = vmatpush2.bf16.msra.mxu0 %v3692
    %5307 = vmatprep.subr.bf16.mxu0 0
    %5308 = vmatpush2.bf16.msra.mxu0 %v3691
    %5309 = vmatprep.subr.bf16.mxu0 0
    %5310 = vmatpush2.bf16.msra.mxu0 %v3690
    %5311 = vmatprep.subr.bf16.mxu0 0
    %5312 = vmatpush2.bf16.msra.mxu0 %v3689
    %5313 = vmatprep.subr.bf16.mxu0 0
    %5314 = vmatpush2.bf16.msra.mxu0 %v3688
    %5315 = vmatprep.subr.bf16.mxu0 0
    %5316 = vmatpush2.bf16.msra.mxu0 %v3687
    %5317 = vmatprep.mubr.bf16.mxu0 %v135
    %5318 = vmatmul.mubr.bf16.gmra.mxu0 %v134
    %v5319 = vpop.f32.mrf.mxu0
    %v5320 = vadd.f32 %v5280, %v5319
    %v5321 = vpop.f32.mrf.mxu0
    %v5322 = vpop.f32.mrf.mxu0
    %v5323 = vpop.f32.mrf.mxu0
    %5324 = vdwg.mxu0
    %5325 = vmatprep.subr.bf16.mxu0 0
    %5326 = vmatpush1.bf16.msra.mxu0 %v3702
    %5327 = vmatprep.subr.bf16.mxu0 0
    %5328 = vmatpush1.bf16.msra.mxu0 %v3701
    %5329 = vmatprep.subr.bf16.mxu0 0
    %5330 = vmatpush1.bf16.msra.mxu0 %v3700
    %5331 = vmatprep.subr.bf16.mxu0 0
    %5332 = vmatpush1.bf16.msra.mxu0 %v3699
    %5333 = vmatprep.subr.bf16.mxu0 0
    %5334 = vmatpush1.bf16.msra.mxu0 %v3698
    %5335 = vmatprep.subr.bf16.mxu0 0
    %5336 = vmatpush1.bf16.msra.mxu0 %v3697
    %5337 = vmatprep.subr.bf16.mxu0 0
    %5338 = vmatpush1.bf16.msra.mxu0 %v3696
    %5339 = vmatprep.subr.bf16.mxu0 0
    %5340 = vmatpush1.bf16.msra.mxu0 %v3695
    %5341 = vmatprep.subr.bf16.mxu0 0
    %5342 = vmatpush2.bf16.msra.mxu0 %v3710
    %5343 = vmatprep.subr.bf16.mxu0 0
    %5344 = vmatpush2.bf16.msra.mxu0 %v3709
    %5345 = vmatprep.subr.bf16.mxu0 0
    %5346 = vmatpush2.bf16.msra.mxu0 %v3708
    %5347 = vmatprep.subr.bf16.mxu0 0
    %5348 = vmatpush2.bf16.msra.mxu0 %v3707
    %5349 = vmatprep.subr.bf16.mxu0 0
    %5350 = vmatpush2.bf16.msra.mxu0 %v3706
    %5351 = vmatprep.subr.bf16.mxu0 0
    %5352 = vmatpush2.bf16.msra.mxu0 %v3705
    %5353 = vmatprep.subr.bf16.mxu0 0
    %5354 = vmatpush2.bf16.msra.mxu0 %v3704
    %5355 = vmatprep.subr.bf16.mxu0 0
    %5356 = vmatpush2.bf16.msra.mxu0 %v3703
    %5357 = vmatprep.mubr.bf16.mxu0 %v137
    %5358 = vmatmul.mubr.bf16.gmra.mxu0 %v136
    %v5359 = vpop.f32.mrf.mxu0
    %v5360 = vadd.f32 %v5320, %v5359
    %v5361 = vpop.f32.mrf.mxu0
    %v5362 = vpop.f32.mrf.mxu0
    %v5363 = vpop.f32.mrf.mxu0
    %5364 = vdwg.mxu0
    %5365 = vmatprep.subr.bf16.mxu0 0
    %5366 = vmatpush1.bf16.msra.mxu0 %v3718
    %5367 = vmatprep.subr.bf16.mxu0 0
    %5368 = vmatpush1.bf16.msra.mxu0 %v3717
    %5369 = vmatprep.subr.bf16.mxu0 0
    %5370 = vmatpush1.bf16.msra.mxu0 %v3716
    %5371 = vmatprep.subr.bf16.mxu0 0
    %5372 = vmatpush1.bf16.msra.mxu0 %v3715
    %5373 = vmatprep.subr.bf16.mxu0 0
    %5374 = vmatpush1.bf16.msra.mxu0 %v3714
    %5375 = vmatprep.subr.bf16.mxu0 0
    %5376 = vmatpush1.bf16.msra.mxu0 %v3713
    %5377 = vmatprep.subr.bf16.mxu0 0
    %5378 = vmatpush1.bf16.msra.mxu0 %v3712
    %5379 = vmatprep.subr.bf16.mxu0 0
    %5380 = vmatpush1.bf16.msra.mxu0 %v3711
    %5381 = vmatprep.subr.bf16.mxu0 0
    %5382 = vmatpush2.bf16.msra.mxu0 %v3726
    %5383 = vmatprep.subr.bf16.mxu0 0
    %5384 = vmatpush2.bf16.msra.mxu0 %v3725
    %5385 = vmatprep.subr.bf16.mxu0 0
    %5386 = vmatpush2.bf16.msra.mxu0 %v3724
    %5387 = vmatprep.subr.bf16.mxu0 0
    %5388 = vmatpush2.bf16.msra.mxu0 %v3723
    %5389 = vmatprep.subr.bf16.mxu0 0
    %5390 = vmatpush2.bf16.msra.mxu0 %v3722
    %5391 = vmatprep.subr.bf16.mxu0 0
    %5392 = vmatpush2.bf16.msra.mxu0 %v3721
    %5393 = vmatprep.subr.bf16.mxu0 0
    %5394 = vmatpush2.bf16.msra.mxu0 %v3720
    %5395 = vmatprep.subr.bf16.mxu0 0
    %5396 = vmatpush2.bf16.msra.mxu0 %v3719
    %5397 = vmatprep.mubr.bf16.mxu0 %v139
    %5398 = vmatmul.mubr.bf16.gmra.mxu0 %v138
    %v5399 = vpop.f32.mrf.mxu0
    %v5400 = vadd.f32 %v5360, %v5399
    %v5401 = vpop.f32.mrf.mxu0
    %v5402 = vpop.f32.mrf.mxu0
    %v5403 = vpop.f32.mrf.mxu0
    %5404 = vdwg.mxu0
    %5405 = vmatprep.subr.bf16.mxu0 0
    %5406 = vmatpush1.bf16.msra.mxu0 %v3734
    %5407 = vmatprep.subr.bf16.mxu0 0
    %5408 = vmatpush1.bf16.msra.mxu0 %v3733
    %5409 = vmatprep.subr.bf16.mxu0 0
    %5410 = vmatpush1.bf16.msra.mxu0 %v3732
    %5411 = vmatprep.subr.bf16.mxu0 0
    %5412 = vmatpush1.bf16.msra.mxu0 %v3731
    %5413 = vmatprep.subr.bf16.mxu0 0
    %5414 = vmatpush1.bf16.msra.mxu0 %v3730
    %5415 = vmatprep.subr.bf16.mxu0 0
    %5416 = vmatpush1.bf16.msra.mxu0 %v3729
    %5417 = vmatprep.subr.bf16.mxu0 0
    %5418 = vmatpush1.bf16.msra.mxu0 %v3728
    %5419 = vmatprep.subr.bf16.mxu0 0
    %5420 = vmatpush1.bf16.msra.mxu0 %v3727
    %5421 = vmatprep.subr.bf16.mxu0 0
    %5422 = vmatpush2.bf16.msra.mxu0 %v3742
    %5423 = vmatprep.subr.bf16.mxu0 0
    %5424 = vmatpush2.bf16.msra.mxu0 %v3741
    %5425 = vmatprep.subr.bf16.mxu0 0
    %5426 = vmatpush2.bf16.msra.mxu0 %v3740
    %5427 = vmatprep.subr.bf16.mxu0 0
    %5428 = vmatpush2.bf16.msra.mxu0 %v3739
    %5429 = vmatprep.subr.bf16.mxu0 0
    %5430 = vmatpush2.bf16.msra.mxu0 %v3738
    %5431 = vmatprep.subr.bf16.mxu0 0
    %5432 = vmatpush2.bf16.msra.mxu0 %v3737
    %5433 = vmatprep.subr.bf16.mxu0 0
    %5434 = vmatpush2.bf16.msra.mxu0 %v3736
    %5435 = vmatprep.subr.bf16.mxu0 0
    %5436 = vmatpush2.bf16.msra.mxu0 %v3735
    %5437 = vmatprep.mubr.bf16.mxu0 %v141
    %5438 = vmatmul.mubr.bf16.gmra.mxu0 %v140
    %v5439 = vpop.f32.mrf.mxu0
    %v5440 = vadd.f32 %v5400, %v5439
    %v5441 = vpop.f32.mrf.mxu0
    %v5442 = vpop.f32.mrf.mxu0
    %v5443 = vpop.f32.mrf.mxu0
    %5444 = vdwg.mxu0
    %5445 = vmatprep.subr.bf16.mxu0 0
    %5446 = vmatpush1.bf16.msra.mxu0 %v3750
    %5447 = vmatprep.subr.bf16.mxu0 0
    %5448 = vmatpush1.bf16.msra.mxu0 %v3749
    %5449 = vmatprep.subr.bf16.mxu0 0
    %5450 = vmatpush1.bf16.msra.mxu0 %v3748
    %5451 = vmatprep.subr.bf16.mxu0 0
    %5452 = vmatpush1.bf16.msra.mxu0 %v3747
    %5453 = vmatprep.subr.bf16.mxu0 0
    %5454 = vmatpush1.bf16.msra.mxu0 %v3746
    %5455 = vmatprep.subr.bf16.mxu0 0
    %5456 = vmatpush1.bf16.msra.mxu0 %v3745
    %5457 = vmatprep.subr.bf16.mxu0 0
    %5458 = vmatpush1.bf16.msra.mxu0 %v3744
    %5459 = vmatprep.subr.bf16.mxu0 0
    %5460 = vmatpush1.bf16.msra.mxu0 %v3743
    %5461 = vmatprep.subr.bf16.mxu0 0
    %5462 = vmatpush2.bf16.msra.mxu0 %v3758
    %5463 = vmatprep.subr.bf16.mxu0 0
    %5464 = vmatpush2.bf16.msra.mxu0 %v3757
    %5465 = vmatprep.subr.bf16.mxu0 0
    %5466 = vmatpush2.bf16.msra.mxu0 %v3756
    %5467 = vmatprep.subr.bf16.mxu0 0
    %5468 = vmatpush2.bf16.msra.mxu0 %v3755
    %5469 = vmatprep.subr.bf16.mxu0 0
    %5470 = vmatpush2.bf16.msra.mxu0 %v3754
    %5471 = vmatprep.subr.bf16.mxu0 0
    %5472 = vmatpush2.bf16.msra.mxu0 %v3753
    %5473 = vmatprep.subr.bf16.mxu0 0
    %5474 = vmatpush2.bf16.msra.mxu0 %v3752
    %5475 = vmatprep.subr.bf16.mxu0 0
    %5476 = vmatpush2.bf16.msra.mxu0 %v3751
    %5477 = vmatprep.mubr.bf16.mxu0 %v143
    %5478 = vmatmul.mubr.bf16.gmra.mxu0 %v142
    %v5479 = vpop.f32.mrf.mxu0
    %v5480 = vadd.f32 %v5440, %v5479
    %v5481 = vpop.f32.mrf.mxu0
    %v5482 = vpop.f32.mrf.mxu0
    %v5483 = vpop.f32.mrf.mxu0
    %5484 = vdwg.mxu0
    %5485 = vmatprep.subr.bf16.mxu0 0
    %5486 = vmatpush1.bf16.msra.mxu0 %v3766
    %5487 = vmatprep.subr.bf16.mxu0 0
    %5488 = vmatpush1.bf16.msra.mxu0 %v3765
    %5489 = vmatprep.subr.bf16.mxu0 0
    %5490 = vmatpush1.bf16.msra.mxu0 %v3764
    %5491 = vmatprep.subr.bf16.mxu0 0
    %5492 = vmatpush1.bf16.msra.mxu0 %v3763
    %5493 = vmatprep.subr.bf16.mxu0 0
    %5494 = vmatpush1.bf16.msra.mxu0 %v3762
    %5495 = vmatprep.subr.bf16.mxu0 0
    %5496 = vmatpush1.bf16.msra.mxu0 %v3761
    %5497 = vmatprep.subr.bf16.mxu0 0
    %5498 = vmatpush1.bf16.msra.mxu0 %v3760
    %5499 = vmatprep.subr.bf16.mxu0 0
    %5500 = vmatpush1.bf16.msra.mxu0 %v3759
    %5501 = vmatprep.subr.bf16.mxu0 0
    %5502 = vmatpush2.bf16.msra.mxu0 %v3774
    %5503 = vmatprep.subr.bf16.mxu0 0
    %5504 = vmatpush2.bf16.msra.mxu0 %v3773
    %5505 = vmatprep.subr.bf16.mxu0 0
    %5506 = vmatpush2.bf16.msra.mxu0 %v3772
    %5507 = vmatprep.subr.bf16.mxu0 0
    %5508 = vmatpush2.bf16.msra.mxu0 %v3771
    %5509 = vmatprep.subr.bf16.mxu0 0
    %5510 = vmatpush2.bf16.msra.mxu0 %v3770
    %5511 = vmatprep.subr.bf16.mxu0 0
    %5512 = vmatpush2.bf16.msra.mxu0 %v3769
    %5513 = vmatprep.subr.bf16.mxu0 0
    %5514 = vmatpush2.bf16.msra.mxu0 %v3768
    %5515 = vmatprep.subr.bf16.mxu0 0
    %5516 = vmatpush2.bf16.msra.mxu0 %v3767
    %5517 = vmatprep.mubr.bf16.mxu0 %v145
    %5518 = vmatmul.mubr.bf16.gmra.mxu0 %v144
    %v5519 = vpop.f32.mrf.mxu0
    %v5520 = vadd.f32 %v5480, %v5519
    %v5521 = vpop.f32.mrf.mxu0
    %v5522 = vpop.f32.mrf.mxu0
    %v5523 = vpop.f32.mrf.mxu0
    %5524 = vdwg.mxu0
    %5525 = vmatprep.subr.bf16.mxu0 0
    %5526 = vmatpush1.bf16.msra.mxu0 %v3782
    %5527 = vmatprep.subr.bf16.mxu0 0
    %5528 = vmatpush1.bf16.msra.mxu0 %v3781
    %5529 = vmatprep.subr.bf16.mxu0 0
    %5530 = vmatpush1.bf16.msra.mxu0 %v3780
    %5531 = vmatprep.subr.bf16.mxu0 0
    %5532 = vmatpush1.bf16.msra.mxu0 %v3779
    %5533 = vmatprep.subr.bf16.mxu0 0
    %5534 = vmatpush1.bf16.msra.mxu0 %v3778
    %5535 = vmatprep.subr.bf16.mxu0 0
    %5536 = vmatpush1.bf16.msra.mxu0 %v3777
    %5537 = vmatprep.subr.bf16.mxu0 0
    %5538 = vmatpush1.bf16.msra.mxu0 %v3776
    %5539 = vmatprep.subr.bf16.mxu0 0
    %5540 = vmatpush1.bf16.msra.mxu0 %v3775
    %5541 = vmatprep.subr.bf16.mxu0 0
    %5542 = vmatpush2.bf16.msra.mxu0 %v3790
    %5543 = vmatprep.subr.bf16.mxu0 0
    %5544 = vmatpush2.bf16.msra.mxu0 %v3789
    %5545 = vmatprep.subr.bf16.mxu0 0
    %5546 = vmatpush2.bf16.msra.mxu0 %v3788
    %5547 = vmatprep.subr.bf16.mxu0 0
    %5548 = vmatpush2.bf16.msra.mxu0 %v3787
    %5549 = vmatprep.subr.bf16.mxu0 0
    %5550 = vmatpush2.bf16.msra.mxu0 %v3786
    %5551 = vmatprep.subr.bf16.mxu0 0
    %5552 = vmatpush2.bf16.msra.mxu0 %v3785
    %5553 = vmatprep.subr.bf16.mxu0 0
    %5554 = vmatpush2.bf16.msra.mxu0 %v3784
    %5555 = vmatprep.subr.bf16.mxu0 0
    %5556 = vmatpush2.bf16.msra.mxu0 %v3783
    %5557 = vmatprep.mubr.bf16.mxu0 %v147
    %5558 = vmatmul.mubr.bf16.gmra.mxu0 %v146
    %v5559 = vpop.f32.mrf.mxu0
    %v5560 = vadd.f32 %v5520, %v5559
    %v5561 = vpop.f32.mrf.mxu0
    %v5562 = vpop.f32.mrf.mxu0
    %v5563 = vpop.f32.mrf.mxu0
    %5564 = vdwg.mxu0
    %5565 = vmatprep.subr.bf16.mxu0 0
    %5566 = vmatpush1.bf16.msra.mxu0 %v3798
    %5567 = vmatprep.subr.bf16.mxu0 0
    %5568 = vmatpush1.bf16.msra.mxu0 %v3797
    %5569 = vmatprep.subr.bf16.mxu0 0
    %5570 = vmatpush1.bf16.msra.mxu0 %v3796
    %5571 = vmatprep.subr.bf16.mxu0 0
    %5572 = vmatpush1.bf16.msra.mxu0 %v3795
    %5573 = vmatprep.subr.bf16.mxu0 0
    %5574 = vmatpush1.bf16.msra.mxu0 %v3794
    %5575 = vmatprep.subr.bf16.mxu0 0
    %5576 = vmatpush1.bf16.msra.mxu0 %v3793
    %5577 = vmatprep.subr.bf16.mxu0 0
    %5578 = vmatpush1.bf16.msra.mxu0 %v3792
    %5579 = vmatprep.subr.bf16.mxu0 0
    %5580 = vmatpush1.bf16.msra.mxu0 %v3791
    %5581 = vmatprep.subr.bf16.mxu0 0
    %5582 = vmatpush2.bf16.msra.mxu0 %v3806
    %5583 = vmatprep.subr.bf16.mxu0 0
    %5584 = vmatpush2.bf16.msra.mxu0 %v3805
    %5585 = vmatprep.subr.bf16.mxu0 0
    %5586 = vmatpush2.bf16.msra.mxu0 %v3804
    %5587 = vmatprep.subr.bf16.mxu0 0
    %5588 = vmatpush2.bf16.msra.mxu0 %v3803
    %5589 = vmatprep.subr.bf16.mxu0 0
    %5590 = vmatpush2.bf16.msra.mxu0 %v3802
    %5591 = vmatprep.subr.bf16.mxu0 0
    %5592 = vmatpush2.bf16.msra.mxu0 %v3801
    %5593 = vmatprep.subr.bf16.mxu0 0
    %5594 = vmatpush2.bf16.msra.mxu0 %v3800
    %5595 = vmatprep.subr.bf16.mxu0 0
    %5596 = vmatpush2.bf16.msra.mxu0 %v3799
    %5597 = vmatprep.mubr.bf16.mxu0 %v149
    %5598 = vmatmul.mubr.bf16.gmra.mxu0 %v148
    %v5599 = vpop.f32.mrf.mxu0
    %v5600 = vadd.f32 %v5560, %v5599
    %v5601 = vpop.f32.mrf.mxu0
    %v5602 = vpop.f32.mrf.mxu0
    %v5603 = vpop.f32.mrf.mxu0
    %5604 = vdwg.mxu0
    %5605 = vmatprep.subr.bf16.mxu0 0
    %5606 = vmatpush1.bf16.msra.mxu0 %v3814
    %5607 = vmatprep.subr.bf16.mxu0 0
    %5608 = vmatpush1.bf16.msra.mxu0 %v3813
    %5609 = vmatprep.subr.bf16.mxu0 0
    %5610 = vmatpush1.bf16.msra.mxu0 %v3812
    %5611 = vmatprep.subr.bf16.mxu0 0
    %5612 = vmatpush1.bf16.msra.mxu0 %v3811
    %5613 = vmatprep.subr.bf16.mxu0 0
    %5614 = vmatpush1.bf16.msra.mxu0 %v3810
    %5615 = vmatprep.subr.bf16.mxu0 0
    %5616 = vmatpush1.bf16.msra.mxu0 %v3809
    %5617 = vmatprep.subr.bf16.mxu0 0
    %5618 = vmatpush1.bf16.msra.mxu0 %v3808
    %5619 = vmatprep.subr.bf16.mxu0 0
    %5620 = vmatpush1.bf16.msra.mxu0 %v3807
    %5621 = vmatprep.subr.bf16.mxu0 0
    %5622 = vmatpush2.bf16.msra.mxu0 %v3822
    %5623 = vmatprep.subr.bf16.mxu0 0
    %5624 = vmatpush2.bf16.msra.mxu0 %v3821
    %5625 = vmatprep.subr.bf16.mxu0 0
    %5626 = vmatpush2.bf16.msra.mxu0 %v3820
    %5627 = vmatprep.subr.bf16.mxu0 0
    %5628 = vmatpush2.bf16.msra.mxu0 %v3819
    %5629 = vmatprep.subr.bf16.mxu0 0
    %5630 = vmatpush2.bf16.msra.mxu0 %v3818
    %5631 = vmatprep.subr.bf16.mxu0 0
    %5632 = vmatpush2.bf16.msra.mxu0 %v3817
    %5633 = vmatprep.subr.bf16.mxu0 0
    %5634 = vmatpush2.bf16.msra.mxu0 %v3816
    %5635 = vmatprep.subr.bf16.mxu0 0
    %5636 = vmatpush2.bf16.msra.mxu0 %v3815
    %5637 = vmatprep.mubr.bf16.mxu0 %v151
    %5638 = vmatmul.mubr.bf16.gmra.mxu0 %v150
    %v5639 = vpop.f32.mrf.mxu0
    %v5640 = vadd.f32 %v5600, %v5639
    %v5641 = vpop.f32.mrf.mxu0
    %v5642 = vpop.f32.mrf.mxu0
    %v5643 = vpop.f32.mrf.mxu0
    %5644 = vdwg.mxu0
    %5645 = vmatprep.subr.bf16.mxu0 0
    %5646 = vmatpush1.bf16.msra.mxu0 %v3830
    %5647 = vmatprep.subr.bf16.mxu0 0
    %5648 = vmatpush1.bf16.msra.mxu0 %v3829
    %5649 = vmatprep.subr.bf16.mxu0 0
    %5650 = vmatpush1.bf16.msra.mxu0 %v3828
    %5651 = vmatprep.subr.bf16.mxu0 0
    %5652 = vmatpush1.bf16.msra.mxu0 %v3827
    %5653 = vmatprep.subr.bf16.mxu0 0
    %5654 = vmatpush1.bf16.msra.mxu0 %v3826
    %5655 = vmatprep.subr.bf16.mxu0 0
    %5656 = vmatpush1.bf16.msra.mxu0 %v3825
    %5657 = vmatprep.subr.bf16.mxu0 0
    %5658 = vmatpush1.bf16.msra.mxu0 %v3824
    %5659 = vmatprep.subr.bf16.mxu0 0
    %5660 = vmatpush1.bf16.msra.mxu0 %v3823
    %5661 = vmatprep.subr.bf16.mxu0 0
    %5662 = vmatpush2.bf16.msra.mxu0 0
    %5663 = vmatprep.subr.bf16.mxu0 0
    %5664 = vmatpush2.bf16.msra.mxu0 0
    %5665 = vmatprep.subr.bf16.mxu0 0
    %5666 = vmatpush2.bf16.msra.mxu0 0
    %5667 = vmatprep.subr.bf16.mxu0 0
    %5668 = vmatpush2.bf16.msra.mxu0 %v3835
    %5669 = vmatprep.subr.bf16.mxu0 0
    %5670 = vmatpush2.bf16.msra.mxu0 %v3834
    %5671 = vmatprep.subr.bf16.mxu0 0
    %5672 = vmatpush2.bf16.msra.mxu0 %v3833
    %5673 = vmatprep.subr.bf16.mxu0 0
    %5674 = vmatpush2.bf16.msra.mxu0 %v3832
    %5675 = vmatprep.subr.bf16.mxu0 0
    %5676 = vmatpush2.bf16.msra.mxu0 %v3831
    %5677 = vmatprep.mubr.bf16.mxu0 %v4363
    %5678 = vmatmul.mubr.bf16.gmra.mxu0 %v152
    %v5679 = vpop.f32.mrf.mxu0
    %v5680 = vadd.f32 %v5640, %v5679
    %v5681 = vpop.f32.mrf.mxu0
    %v5682 = vpop.f32.mrf.mxu0
    %v5683 = vpop.f32.mrf.mxu0
    %5684 = vdwg.mxu0
    %v5685 = vmax.f32 %v5680, 0.0
    %v5686 = vld [vmem:[%s3] sm:$0xff]
    %v5687 = vld [vmem:[%s3 + $0x8] sm:$0xff]
    %v5688 = vld [vmem:[%s3 + $0x10] sm:$0xff]
    %v5689 = vld [vmem:[%s3 + $0x18] sm:$0xff]
    %v5690 = vld [vmem:[%s3 + $0x20] sm:$0xff]
    %v5691 = vld [vmem:[%s3 + $0x28] sm:$0xff]
    %v5692 = vld [vmem:[%s3 + $0x30] sm:$0x3]
    %v5693 = vld [vmem:[%s4] sm:$0x1]
    %v5695 = vlaneseq
    %v5696 = vshrl.u32 %v5695, 7
    %v5697 = vsub.s32 0, %v5696
    %v5698 = vrot.slane %v5693, %v5697
    %vm5700 = vcmask 408576
    %v5702 = vsel %vm5700, %v5685, 0
    %vm5704 = vcmask 1041408
    %v5706 = vsel %vm5704, %v5692, 0
    %5708 = vmatprep.subr.mxu0 0.0
    %5709 = vmatpush1.msra.mxu0 0.0
    %5710 = vmatprep.subr.mxu0 0.0
    %5711 = vmatpush1.msra.mxu0 0.0
    %5712 = vmatprep.subr.mxu0 0.0
    %5713 = vmatpush1.msra.mxu0 0.0
    %5714 = vmatprep.subr.mxu0 0.0
    %5715 = vmatpush1.msra.mxu0 0.0
    %5716 = vmatprep.subr.mxu0 0.0
    %5717 = vmatpush1.msra.mxu0 0.0
    %5718 = vmatprep.subr.mxu0 0.0
    %5719 = vmatpush1.msra.mxu0 0.0
    %5720 = vmatprep.subr.mxu0 0.0
    %5721 = vmatpush1.msra.mxu0 0.0
    %5722 = vmatprep.subr.mxu0 0.0
    %5723 = vmatpush1.msra.mxu0 0.0
    %5724 = vmatprep.subr.mxu0 0.0
    %5725 = vmatpush1.msra.mxu0 0.0
    %5726 = vmatprep.subr.mxu0 0.0
    %5727 = vmatpush1.msra.mxu0 %v5706
    %5728 = vmatprep.subr.mxu0 0.0
    %5729 = vmatpush1.msra.mxu0 %v5691
    %5730 = vmatprep.subr.mxu0 0.0
    %5731 = vmatpush1.msra.mxu0 %v5690
    %5732 = vmatprep.subr.mxu0 0.0
    %5733 = vmatpush1.msra.mxu0 %v5689
    %5734 = vmatprep.subr.mxu0 0.0
    %5735 = vmatpush1.msra.mxu0 %v5688
    %5736 = vmatprep.subr.mxu0 0.0
    %5737 = vmatpush1.msra.mxu0 %v5687
    %5738 = vmatprep.subr.mxu0 0.0
    %5739 = vmatpush1.msra.mxu0 %v5686
    %5740 = vmatprep.subr.mxu0 0.0
    %5741 = vmatpush2.msra.mxu0 0.0
    %5742 = vmatprep.subr.mxu0 0.0
    %5743 = vmatpush2.msra.mxu0 0.0
    %5744 = vmatprep.subr.mxu0 0.0
    %5745 = vmatpush2.msra.mxu0 0.0
    %5746 = vmatprep.subr.mxu0 0.0
    %5747 = vmatpush2.msra.mxu0 0.0
    %5748 = vmatprep.subr.mxu0 0.0
    %5749 = vmatpush2.msra.mxu0 0.0
    %5750 = vmatprep.subr.mxu0 0.0
    %5751 = vmatpush2.msra.mxu0 0.0
    %5752 = vmatprep.subr.mxu0 0.0
    %5753 = vmatpush2.msra.mxu0 0.0
    %5754 = vmatprep.subr.mxu0 0.0
    %5755 = vmatpush2.msra.mxu0 0.0
    %5756 = vmatprep.subr.mxu0 0.0
    %5757 = vmatpush2.msra.mxu0 0.0
    %5758 = vmatprep.subr.mxu0 0.0
    %5759 = vmatpush2.msra.mxu0 0.0
    %5760 = vmatprep.subr.mxu0 0.0
    %5761 = vmatpush2.msra.mxu0 0.0
    %5762 = vmatprep.subr.mxu0 0.0
    %5763 = vmatpush2.msra.mxu0 0.0
    %5764 = vmatprep.subr.mxu0 0.0
    %5765 = vmatpush2.msra.mxu0 0.0
    %5766 = vmatprep.subr.mxu0 0.0
    %5767 = vmatpush2.msra.mxu0 0.0
    %5768 = vmatprep.subr.mxu0 0.0
    %5769 = vmatpush2.msra.mxu0 0.0
    %5770 = vmatprep.subr.mxu0 0.0
    %5771 = vmatpush2.msra.mxu0 0.0
    %5772 = vmatprep.mubr.f32.mxu0 0.0
    %5773 = vmatmul.mubr.f32.gmra.mxu0 %v5702
    %v5774 = vpop.f32.mrf.mxu0
    %v5775 = vadd.f32 %v5698, %v5774
    %v5776 = vpop.f32.mrf.mxu0
    %5777 = vdwg.mxu0
    %5778 = vmax.xlane.f32.xlu0 %v5775
    %v5779 = vpop.xlane.xlu0 %5778
    %v5780 = vsub.f32 %v5775, %v5779
    %v5781 = vmul.f32 %v5780, 1.442695
    %v5782 = vpow.pop %v5781
    %5783 = vadd.xlane.f32.xlu0 %v5782
    %v5784 = vpop.xlane.xlu0 %5783
    %v5785 = vrcp.pop %v5784
    %v5786 = vmul.f32 %v5782, %v5785
    %5787 = vst [vmem:[#allocation2] sm:$0xff] %v5786
    // Predicated region
    $region22: #{tpu_custom_call.1} parent=1 // pred_check
      _
    $region23: #{tpu_custom_call.1} parent=1 // pred_check_branch
      %5789 = sbr.rel (0) target = $region25
    $region24: #{tpu_custom_call.1} parent=1 // pred_region
      %s5791 = ssub.s32 128, 128
      %5792 = vsyncadd [#allocation3], %s5791
      %s5794 = sshll.u32 [#allocation2], 4
      %s5795 = int_to_ptr.vmem [resolvable:$true] %s5794
      %5797 = dma.vmem_to_hbm [thread:$0]  %s5795, 128, %s5, [#allocation3]
    $region25: #{tpu_custom_call.1} parent=1 // pred_fallthru
      _
    // Predicated region
    $region26: #{tpu_custom_call.1} parent=1 // pred_check
      _
    $region27: #{tpu_custom_call.1} parent=1 // pred_check_branch
      %5799 = sbr.rel (0) target = $region29
    $region28: #{tpu_custom_call.1} parent=1 // pred_region
      %5800 = dma.done [#allocation3], 128
    $region29: #{tpu_custom_call.1} parent=1 // pred_fallthru
      _
    %5801 = vsyncpa [#allocation3], 1

</llo_original>
